<compile_context>
chip_gen: v7x
topology: tpu7x:2x2x1
jax: 0.10.0
libtpu: 0.0.40
codegen_flags: <defaults>
</compile_context>

<pallas_src>
import jax
import jax.numpy as jnp
from jax.experimental import pallas as pl
from jax.experimental.pallas import tpu as pltpu


def _round_up(x, m):
    return (x + m - 1) // m * m


def textrnn_kernel(xe_ref,          # (S, Bt, Hp)   time-major embedded tokens, zero-padded
                   wih0_ref,        # (Hp, 4Hp)     layer-0 input weights (pre-transposed)
                   whh0_ref,        # (Hp, 4Hp)     layer-0 recurrent weights
                   b0_ref,          # (1, 4Hp)      b_ih0 + b_hh0, per-gate padded
                   w1_ref,          # (2Hp, 4Hp)    layer-1 [w_ih1 ; w_hh1] stacked
                   b1_ref,          # (1, 4Hp)      b_ih1 + b_hh1, per-gate padded
                   wproj_ref,       # (Hp, Tp)      final linear (pre-transposed, padded)
                   bproj_ref,       # (1, Tp)
                   out_ref,         # (Bt, Tp)
                   xproj_ref):      # VMEM scratch (S, Bt, 4Hp)
    S, Bt, Hp = xe_ref.shape
    G = 4 * Hp

    # ReLU on the embedded sequence; nn.Dropout(0.2) is identity in eval mode.
    # TODO(synk): training-mode dropout (stateful PRNG mask) intentionally omitted.
    xe = jnp.maximum(xe_ref[...], 0.0)                            # (S, Bt, Hp)

    # Hoisted layer-0 input projection: one big MXU matmul, off the serial chain.
    xproj_ref[...] = (
        jnp.dot(xe.reshape(S * Bt, Hp), wih0_ref[...],
                preferred_element_type=jnp.float32)
        + b0_ref[...]
    ).reshape(S, Bt, G)

    whh0 = whh0_ref[...]
    w1 = w1_ref[...]
    b1 = b1_ref[...]

    def gates_to_hc(gates, c):
        # Hp is a multiple of 128, so every gate slice is a full-lane vreg block.
        # PyTorch gate order: [i | f | g | o].
        i = jax.nn.sigmoid(gates[:, 0 * Hp:1 * Hp])
        f = jax.nn.sigmoid(gates[:, 1 * Hp:2 * Hp])
        g = jnp.tanh(gates[:, 2 * Hp:3 * Hp])
        o = jax.nn.sigmoid(gates[:, 3 * Hp:4 * Hp])
        c_new = f * c + i * g
        h_new = o * jnp.tanh(c_new)
        return h_new, c_new

    def body(t, carry):
        h0, c0, h1, c1 = carry
        # Layer 0: input projection is precomputed; only the recurrent matmul remains.
        gates0 = xproj_ref[t] + jnp.dot(h0, whh0,
                                        preferred_element_type=jnp.float32)
        h0, c0 = gates_to_hc(gates0, c0)
        # Layer 1: single fused matmul covering both input and recurrent projections.
        gates1 = jnp.dot(jnp.concatenate([h0, h1], axis=1), w1,
                         preferred_element_type=jnp.float32) + b1
        h1, c1 = gates_to_hc(gates1, c1)
        return h0, c0, h1, c1

    zeros = jnp.zeros((Bt, Hp), jnp.float32)
    _, _, h1_last, _ = jax.lax.fori_loop(
        0, S, body, (zeros, zeros, zeros, zeros), unroll=True)

    # Lane-dense (Bt, Tp) final projection; real (B, tasks) is sliced in the wrapper.
    out_ref[...] = (jnp.dot(h1_last, wproj_ref[...],
                            preferred_element_type=jnp.float32)
                    + bproj_ref[...])


def _pad_gate_weight(w, H, Hp):
    """(4H, H) PyTorch-layout weight -> (Hp, 4Hp): transposed, per-gate zero-padded."""
    wT = w.T                                     # (H, 4H)
    out = jnp.zeros((Hp, 4 * Hp), jnp.float32)
    for g in range(4):
        out = out.at[:H, g * Hp:g * Hp + H].set(wT[:, g * H:(g + 1) * H])
    return out


def _pad_gate_bias(b, H, Hp):
    out = jnp.zeros((4 * Hp,), jnp.float32)
    for g in range(4):
        out = out.at[g * Hp:g * Hp + H].set(b[g * H:(g + 1) * H])
    return out.reshape(1, 4 * Hp)


def textrnn_forward(x_tokens, params, tasks):
    B, S = x_tokens.shape
    H = params["embedding"].shape[1]

    Hp = _round_up(H, 128)                 # lane-aligned hidden size
    Tp = _round_up(tasks, 128)             # lane-dense output width
    Bt = min(128, _round_up(B, 8))         # sublane-aligned batch tile
    Bp = _round_up(B, Bt)

    # Embedding gather stays in plain JAX (tiny, data-dependent).
    xe = params["embedding"][x_tokens].astype(jnp.float32)        # (B, S, H)
    # Time-major + zero-pad batch/hidden so every step is a full (sublane, lane) tile.
    xe = jnp.transpose(xe, (1, 0, 2))                             # (S, B, H)
    xe = jnp.pad(xe, ((0, 0), (0, Bp - B), (0, Hp - H)))          # (S, Bp, Hp)

    # Pre-transposed, per-gate zero-padded weights (gate order [i|f|g|o]).
    # TODO(synk): on v6e/v7x, casting matmul operands to bf16 (f32 accum) would
    #             roughly halve MXU latency; kept f32 here to match the f32 reference.
    wih0 = _pad_gate_weight(params["w_ih0"], H, Hp)               # (Hp, 4Hp)
    whh0 = _pad_gate_weight(params["w_hh0"], H, Hp)               # (Hp, 4Hp)
    b0 = _pad_gate_bias(params["b_ih0"] + params["b_hh0"], H, Hp)
    w1 = jnp.concatenate([_pad_gate_weight(params["w_ih1"], H, Hp),
                          _pad_gate_weight(params["w_hh1"], H, Hp)],
                         axis=0)                                  # (2Hp, 4Hp)
    b1 = _pad_gate_bias(params["b_ih1"] + params["b_hh1"], H, Hp)
    wproj = jnp.zeros((Hp, Tp), jnp.float32).at[:H, :tasks].set(params["w_proj"].T)
    bproj = jnp.zeros((1, Tp), jnp.float32).at[0, :tasks].set(params["b_proj"])

    grid = (Bp // Bt,)

    def weight_spec(shape):
        return pl.BlockSpec(shape, lambda b: (0,) * len(shape))   # VMEM-resident

    out_padded = pl.pallas_call(
        textrnn_kernel,
        out_shape=jax.ShapeDtypeStruct((Bp, Tp), jnp.float32),
        grid=grid,
        in_specs=[
            pl.BlockSpec((S, Bt, Hp), lambda b: (0, b, 0)),       # batch-tiled sequence
            weight_spec((Hp, 4 * Hp)),
            weight_spec((Hp, 4 * Hp)),
            weight_spec((1, 4 * Hp)),
            weight_spec((2 * Hp, 4 * Hp)),
            weight_spec((1, 4 * Hp)),
            weight_spec((Hp, Tp)),
            weight_spec((1, Tp)),
        ],
        out_specs=pl.BlockSpec((Bt, Tp), lambda b: (b, 0)),
        scratch_shapes=[pltpu.VMEM((S, Bt, 4 * Hp), jnp.float32)],
        compiler_params=pltpu.CompilerParams(
            dimension_semantics=("parallel",)),
    )(xe, wih0, whh0, b0, w1, b1, wproj, bproj)

    return out_padded[:B, :tasks]


def init_params(key, vocab_size, feature_size, tasks):
    H = feature_size
    keys = jax.random.split(key, 12)
    bound = 1.0 / jnp.sqrt(jnp.float32(H))

    def u(k, shape):
        return jax.random.uniform(k, shape, jnp.float32, -bound, bound)

    emb = jax.random.normal(keys[0], (vocab_size, H), jnp.float32)
    emb = emb.at[0].set(0.0)  # padding_idx=0

    return {
        "embedding": emb,
        # layer 0
        "w_ih0": u(keys[1], (4 * H, H)),
        "w_hh0": u(keys[2], (4 * H, H)),
        "b_ih0": u(keys[3], (4 * H,)),
        "b_hh0": u(keys[4], (4 * H,)),
        # layer 1
        "w_ih1": u(keys[5], (4 * H, H)),
        "w_hh1": u(keys[6], (4 * H, H)),
        "b_ih1": u(keys[7], (4 * H,)),
        "b_hh1": u(keys[8], (4 * H,)),
        # final linear
        "w_proj": u(keys[9], (tasks, H)),
        "b_proj": u(keys[10], (tasks,)),
    }


def reference_forward(x_tokens, params, tasks):
    """Pure-JAX reference mirroring the PyTorch forward (eval mode)."""
    H = params["embedding"].shape[1]
    xe = jnp.maximum(params["embedding"][x_tokens], 0.0)
    B, S, _ = xe.shape

    def cell(x_t, h, c, wih, whh, b_ih, b_hh):
        g = x_t @ wih.T + b_ih + h @ whh.T + b_hh
        i = jax.nn.sigmoid(g[:, :H])
        f = jax.nn.sigmoid(g[:, H:2 * H])
        gg = jnp.tanh(g[:, 2 * H:3 * H])
        o = jax.nn.sigmoid(g[:, 3 * H:])
        c = f * c + i * gg
        h = o * jnp.tanh(c)
        return h, c

    h0 = c0 = h1 = c1 = jnp.zeros((B, H), jnp.float32)
    for t in range(S):
        x_t = xe[:, t, :]
        h0, c0 = cell(x_t, h0, c0, params["w_ih0"], params["w_hh0"],
                      params["b_ih0"], params["b_hh0"])
        h1, c1 = cell(h0, h1, c1, params["w_ih1"], params["w_hh1"],
                      params["b_ih1"], params["b_hh1"])
    return h1 @ params["w_proj"].T + params["b_proj"]


if __name__ == "__main__":
    VOCAB, H, TASKS = 50, 32, 4
    B, S = 2, 8

    key = jax.random.PRNGKey(0)
    pkey, xkey = jax.random.split(key)
    params = init_params(pkey, VOCAB, H, TASKS)
    x_tokens = jax.random.randint(xkey, (B, S), 0, VOCAB, dtype=jnp.int32)

    out = textrnn_forward(x_tokens, params, TASKS)
    out = jax.block_until_ready(out)

    ref = reference_forward(x_tokens, params, TASKS)
    assert out.shape == (B, TASKS)
    assert jnp.allclose(out, ref, atol=1e-4, rtol=1e-4), (out, ref)

    print("KERNEL_OK")
</pallas_src>

<mosaic_0001>
module attributes {stable_mosaic.version = 11 : i64} {
  func.func @textrnn_kernel(%arg0: i32, %arg1: memref<8x8x128xf32, #tpu.memory_space<vmem>>, %arg2: memref<128x512xf32, #tpu.memory_space<vmem>>, %arg3: memref<128x512xf32, #tpu.memory_space<vmem>>, %arg4: memref<1x512xf32, #tpu.memory_space<vmem>>, %arg5: memref<256x512xf32, #tpu.memory_space<vmem>>, %arg6: memref<1x512xf32, #tpu.memory_space<vmem>>, %arg7: memref<128x128xf32, #tpu.memory_space<vmem>>, %arg8: memref<1x128xf32, #tpu.memory_space<vmem>>, %arg9: memref<8x128xf32, #tpu.memory_space<vmem>>, %arg10: memref<8x8x512xf32, #tpu.memory_space<vmem>>) attributes {dimension_semantics = [#tpu.dimension_semantics<parallel>], iteration_bounds = array<i64: 1>, scalar_prefetch = 0 : i64, scratch_operands = 1 : i64, tpu.core_type = #tpu.core_type<tc>, window_params = [{transform_indices = @transform_0, window_bounds = array<i64: 8, 8, 128>}, {pipeline_mode = #tpu.pipeline_mode<synchronous>, transform_indices = @transform_1, window_bounds = array<i64: 128, 512>}, {pipeline_mode = #tpu.pipeline_mode<synchronous>, transform_indices = @transform_2, window_bounds = array<i64: 128, 512>}, {pipeline_mode = #tpu.pipeline_mode<synchronous>, transform_indices = @transform_3, window_bounds = array<i64: 1, 512>}, {pipeline_mode = #tpu.pipeline_mode<synchronous>, transform_indices = @transform_4, window_bounds = array<i64: 256, 512>}, {pipeline_mode = #tpu.pipeline_mode<synchronous>, transform_indices = @transform_5, window_bounds = array<i64: 1, 512>}, {pipeline_mode = #tpu.pipeline_mode<synchronous>, transform_indices = @transform_6, window_bounds = array<i64: 128, 128>}, {pipeline_mode = #tpu.pipeline_mode<synchronous>, transform_indices = @transform_7, window_bounds = array<i64: 1, 128>}, {transform_indices = @transform_8, window_bounds = array<i64: 8, 128>}]} {
    %c0 = arith.constant 0 : index
    %c0_0 = arith.constant 0 : index
    %c0_1 = arith.constant 0 : index
    %0 = vector.load %arg1[%c0, %c0_0, %c0_1] : memref<8x8x128xf32, #tpu.memory_space<vmem>>, vector<8x8x128xf32>
    %cst = arith.constant 0.000000e+00 : f32
    %1 = vector.broadcast %cst : f32 to vector<8x8x128xf32>
    %2 = arith.maximumf %0, %1 : vector<8x8x128xf32>
    %3 = vector.shape_cast %2 : vector<8x8x128xf32> to vector<64x128xf32>
    %c0_2 = arith.constant 0 : index
    %c0_3 = arith.constant 0 : index
    %4 = vector.load %arg2[%c0_2, %c0_3] : memref<128x512xf32, #tpu.memory_space<vmem>>, vector<128x512xf32>
    %cst_4 = arith.constant dense<0.000000e+00> : vector<64x512xf32>
    %5 = tpu.matmul %3, %4, %cst_4 {dimension_numbers = #tpu.dot_dimension_numbers<[1], [0], [0], [1], [0, 0, 1, 1], [], []>} : vector<64x128xf32>, vector<128x512xf32>, vector<64x512xf32> -> vector<64x512xf32>
    %c0_5 = arith.constant 0 : index
    %c0_6 = arith.constant 0 : index
    %6 = vector.load %arg4[%c0_5, %c0_6] : memref<1x512xf32, #tpu.memory_space<vmem>>, vector<1x512xf32>
    %7 = vector.broadcast %6 : vector<1x512xf32> to vector<64x512xf32>
    %8 = arith.addf %5, %7 : vector<64x512xf32>
    %9 = vector.shape_cast %8 : vector<64x512xf32> to vector<8x8x512xf32>
    %c0_7 = arith.constant 0 : index
    %c0_8 = arith.constant 0 : index
    %c0_9 = arith.constant 0 : index
    %10 = vector.load %arg10[%c0_7, %c0_8, %c0_9] : memref<8x8x512xf32, #tpu.memory_space<vmem>>, vector<8x8x512xf32>
    tpu.vector_store %arg10[%c0_7, %c0_8, %c0_9], %9 {strides = array<i32>} : memref<8x8x512xf32, #tpu.memory_space<vmem>>, vector<8x8x512xf32>,
    %c0_10 = arith.constant 0 : index
    %c0_11 = arith.constant 0 : index
    %11 = vector.load %arg3[%c0_10, %c0_11] : memref<128x512xf32, #tpu.memory_space<vmem>>, vector<128x512xf32>
    %c0_12 = arith.constant 0 : index
    %c0_13 = arith.constant 0 : index
    %12 = vector.load %arg5[%c0_12, %c0_13] : memref<256x512xf32, #tpu.memory_space<vmem>>, vector<256x512xf32>
    %c0_14 = arith.constant 0 : index
    %c0_15 = arith.constant 0 : index
    %13 = vector.load %arg6[%c0_14, %c0_15] : memref<1x512xf32, #tpu.memory_space<vmem>>, vector<1x512xf32>
    %cst_16 = arith.constant 0.000000e+00 : f32
    %14 = vector.broadcast %cst_16 : f32 to vector<8x128xf32>
    %c0_i32 = arith.constant 0 : i32
    %15 = arith.index_cast %c0_i32 : i32 to index
    %c0_17 = arith.constant 0 : index
    %c0_18 = arith.constant 0 : index
    %16 = vector.load %arg10[%15, %c0_17, %c0_18] : memref<8x8x512xf32, #tpu.memory_space<vmem>>, vector<1x8x512xf32>
    %17 = vector.shape_cast %16 : vector<1x8x512xf32> to vector<8x512xf32>
    %cst_19 = arith.constant dense<0.000000e+00> : vector<8x512xf32>
    %18 = tpu.matmul %14, %11, %cst_19 {dimension_numbers = #tpu.dot_dimension_numbers<[1], [0], [0], [1], [0, 0, 1, 1], [], []>} : vector<8x128xf32>, vector<128x512xf32>, vector<8x512xf32> -> vector<8x512xf32>
    %19 = arith.addf %17, %18 : vector<8x512xf32>
    %20 = vector.extract_strided_slice %19 {offsets = [0, 0], sizes = [8, 128], strides = [1, 1]} : vector<8x512xf32> to vector<8x128xf32>
    %21 = arith.negf %20 : vector<8x128xf32>
    %22 = math.exp %21 : vector<8x128xf32>
    %cst_20 = arith.constant 1.000000e+00 : f32
    %23 = vector.broadcast %cst_20 : f32 to vector<8x128xf32>
    %24 = arith.addf %23, %22 : vector<8x128xf32>
    %25 = arith.divf %23, %24 : vector<8x128xf32>
    %26 = vector.extract_strided_slice %19 {offsets = [0, 128], sizes = [8, 128], strides = [1, 1]} : vector<8x512xf32> to vector<8x128xf32>
    %27 = arith.negf %26 : vector<8x128xf32>
    %28 = math.exp %27 : vector<8x128xf32>
    %cst_21 = arith.constant 1.000000e+00 : f32
    %29 = vector.broadcast %cst_21 : f32 to vector<8x128xf32>
    %30 = arith.addf %29, %28 : vector<8x128xf32>
    %31 = arith.divf %29, %30 : vector<8x128xf32>
    %32 = vector.extract_strided_slice %19 {offsets = [0, 256], sizes = [8, 128], strides = [1, 1]} : vector<8x512xf32> to vector<8x128xf32>
    %33 = math.tanh %32 : vector<8x128xf32>
    %34 = vector.extract_strided_slice %19 {offsets = [0, 384], sizes = [8, 128], strides = [1, 1]} : vector<8x512xf32> to vector<8x128xf32>
    %35 = arith.negf %34 : vector<8x128xf32>
    %36 = math.exp %35 : vector<8x128xf32>
    %cst_22 = arith.constant 1.000000e+00 : f32
    %37 = vector.broadcast %cst_22 : f32 to vector<8x128xf32>
    %38 = arith.addf %37, %36 : vector<8x128xf32>
    %39 = arith.divf %37, %38 : vector<8x128xf32>
    %40 = arith.mulf %31, %14 : vector<8x128xf32>
    %41 = arith.mulf %25, %33 : vector<8x128xf32>
    %42 = arith.addf %40, %41 : vector<8x128xf32>
    %43 = math.tanh %42 : vector<8x128xf32>
    %44 = arith.mulf %39, %43 : vector<8x128xf32>
    %45 = tpu.concatenate %44, %14 in 1 : vector<8x128xf32>, vector<8x128xf32> -> vector<8x256xf32>
    %cst_23 = arith.constant dense<0.000000e+00> : vector<8x512xf32>
    %46 = tpu.matmul %45, %12, %cst_23 {dimension_numbers = #tpu.dot_dimension_numbers<[1], [0], [0], [1], [0, 0, 1, 1], [], []>} : vector<8x256xf32>, vector<256x512xf32>, vector<8x512xf32> -> vector<8x512xf32>
    %47 = vector.broadcast %13 : vector<1x512xf32> to vector<8x512xf32>
    %48 = arith.addf %46, %47 : vector<8x512xf32>
    %49 = vector.extract_strided_slice %48 {offsets = [0, 0], sizes = [8, 128], strides = [1, 1]} : vector<8x512xf32> to vector<8x128xf32>
    %50 = arith.negf %49 : vector<8x128xf32>
    %51 = math.exp %50 : vector<8x128xf32>
    %cst_24 = arith.constant 1.000000e+00 : f32
    %52 = vector.broadcast %cst_24 : f32 to vector<8x128xf32>
    %53 = arith.addf %52, %51 : vector<8x128xf32>
    %54 = arith.divf %52, %53 : vector<8x128xf32>
    %55 = vector.extract_strided_slice %48 {offsets = [0, 128], sizes = [8, 128], strides = [1, 1]} : vector<8x512xf32> to vector<8x128xf32>
    %56 = arith.negf %55 : vector<8x128xf32>
    %57 = math.exp %56 : vector<8x128xf32>
    %cst_25 = arith.constant 1.000000e+00 : f32
    %58 = vector.broadcast %cst_25 : f32 to vector<8x128xf32>
    %59 = arith.addf %58, %57 : vector<8x128xf32>
    %60 = arith.divf %58, %59 : vector<8x128xf32>
    %61 = vector.extract_strided_slice %48 {offsets = [0, 256], sizes = [8, 128], strides = [1, 1]} : vector<8x512xf32> to vector<8x128xf32>
    %62 = math.tanh %61 : vector<8x128xf32>
    %63 = vector.extract_strided_slice %48 {offsets = [0, 384], sizes = [8, 128], strides = [1, 1]} : vector<8x512xf32> to vector<8x128xf32>
    %64 = arith.negf %63 : vector<8x128xf32>
    %65 = math.exp %64 : vector<8x128xf32>
    %cst_26 = arith.constant 1.000000e+00 : f32
    %66 = vector.broadcast %cst_26 : f32 to vector<8x128xf32>
    %67 = arith.addf %66, %65 : vector<8x128xf32>
    %68 = arith.divf %66, %67 : vector<8x128xf32>
    %69 = arith.mulf %60, %14 : vector<8x128xf32>
    %70 = arith.mulf %54, %62 : vector<8x128xf32>
    %71 = arith.addf %69, %70 : vector<8x128xf32>
    %72 = math.tanh %71 : vector<8x128xf32>
    %73 = arith.mulf %68, %72 : vector<8x128xf32>
    %c1_i32 = arith.constant 1 : i32
    %74 = arith.index_cast %c1_i32 : i32 to index
    %c0_27 = arith.constant 0 : index
    %c0_28 = arith.constant 0 : index
    %75 = vector.load %arg10[%74, %c0_27, %c0_28] : memref<8x8x512xf32, #tpu.memory_space<vmem>>, vector<1x8x512xf32>
    %76 = vector.shape_cast %75 : vector<1x8x512xf32> to vector<8x512xf32>
    %cst_29 = arith.constant dense<0.000000e+00> : vector<8x512xf32>
    %77 = tpu.matmul %44, %11, %cst_29 {dimension_numbers = #tpu.dot_dimension_numbers<[1], [0], [0], [1], [0, 0, 1, 1], [], []>} : vector<8x128xf32>, vector<128x512xf32>, vector<8x512xf32> -> vector<8x512xf32>
    %78 = arith.addf %76, %77 : vector<8x512xf32>
    %79 = vector.extract_strided_slice %78 {offsets = [0, 0], sizes = [8, 128], strides = [1, 1]} : vector<8x512xf32> to vector<8x128xf32>
    %80 = arith.negf %79 : vector<8x128xf32>
    %81 = math.exp %80 : vector<8x128xf32>
    %cst_30 = arith.constant 1.000000e+00 : f32
    %82 = vector.broadcast %cst_30 : f32 to vector<8x128xf32>
    %83 = arith.addf %82, %81 : vector<8x128xf32>
    %84 = arith.divf %82, %83 : vector<8x128xf32>
    %85 = vector.extract_strided_slice %78 {offsets = [0, 128], sizes = [8, 128], strides = [1, 1]} : vector<8x512xf32> to vector<8x128xf32>
    %86 = arith.negf %85 : vector<8x128xf32>
    %87 = math.exp %86 : vector<8x128xf32>
    %cst_31 = arith.constant 1.000000e+00 : f32
    %88 = vector.broadcast %cst_31 : f32 to vector<8x128xf32>
    %89 = arith.addf %88, %87 : vector<8x128xf32>
    %90 = arith.divf %88, %89 : vector<8x128xf32>
    %91 = vector.extract_strided_slice %78 {offsets = [0, 256], sizes = [8, 128], strides = [1, 1]} : vector<8x512xf32> to vector<8x128xf32>
    %92 = math.tanh %91 : vector<8x128xf32>
    %93 = vector.extract_strided_slice %78 {offsets = [0, 384], sizes = [8, 128], strides = [1, 1]} : vector<8x512xf32> to vector<8x128xf32>
    %94 = arith.negf %93 : vector<8x128xf32>
    %95 = math.exp %94 : vector<8x128xf32>
    %cst_32 = arith.constant 1.000000e+00 : f32
    %96 = vector.broadcast %cst_32 : f32 to vector<8x128xf32>
    %97 = arith.addf %96, %95 : vector<8x128xf32>
    %98 = arith.divf %96, %97 : vector<8x128xf32>
    %99 = arith.mulf %90, %42 : vector<8x128xf32>
    %100 = arith.mulf %84, %92 : vector<8x128xf32>
    %101 = arith.addf %99, %100 : vector<8x128xf32>
    %102 = math.tanh %101 : vector<8x128xf32>
    %103 = arith.mulf %98, %102 : vector<8x128xf32>
    %104 = tpu.concatenate %103, %73 in 1 : vector<8x128xf32>, vector<8x128xf32> -> vector<8x256xf32>
    %cst_33 = arith.constant dense<0.000000e+00> : vector<8x512xf32>
    %105 = tpu.matmul %104, %12, %cst_33 {dimension_numbers = #tpu.dot_dimension_numbers<[1], [0], [0], [1], [0, 0, 1, 1], [], []>} : vector<8x256xf32>, vector<256x512xf32>, vector<8x512xf32> -> vector<8x512xf32>
    %106 = vector.broadcast %13 : vector<1x512xf32> to vector<8x512xf32>
    %107 = arith.addf %105, %106 : vector<8x512xf32>
    %108 = vector.extract_strided_slice %107 {offsets = [0, 0], sizes = [8, 128], strides = [1, 1]} : vector<8x512xf32> to vector<8x128xf32>
    %109 = arith.negf %108 : vector<8x128xf32>
    %110 = math.exp %109 : vector<8x128xf32>
    %cst_34 = arith.constant 1.000000e+00 : f32
    %111 = vector.broadcast %cst_34 : f32 to vector<8x128xf32>
    %112 = arith.addf %111, %110 : vector<8x128xf32>
    %113 = arith.divf %111, %112 : vector<8x128xf32>
    %114 = vector.extract_strided_slice %107 {offsets = [0, 128], sizes = [8, 128], strides = [1, 1]} : vector<8x512xf32> to vector<8x128xf32>
    %115 = arith.negf %114 : vector<8x128xf32>
    %116 = math.exp %115 : vector<8x128xf32>
    %cst_35 = arith.constant 1.000000e+00 : f32
    %117 = vector.broadcast %cst_35 : f32 to vector<8x128xf32>
    %118 = arith.addf %117, %116 : vector<8x128xf32>
    %119 = arith.divf %117, %118 : vector<8x128xf32>
    %120 = vector.extract_strided_slice %107 {offsets = [0, 256], sizes = [8, 128], strides = [1, 1]} : vector<8x512xf32> to vector<8x128xf32>
    %121 = math.tanh %120 : vector<8x128xf32>
    %122 = vector.extract_strided_slice %107 {offsets = [0, 384], sizes = [8, 128], strides = [1, 1]} : vector<8x512xf32> to vector<8x128xf32>
    %123 = arith.negf %122 : vector<8x128xf32>
    %124 = math.exp %123 : vector<8x128xf32>
    %cst_36 = arith.constant 1.000000e+00 : f32
    %125 = vector.broadcast %cst_36 : f32 to vector<8x128xf32>
    %126 = arith.addf %125, %124 : vector<8x128xf32>
    %127 = arith.divf %125, %126 : vector<8x128xf32>
    %128 = arith.mulf %119, %71 : vector<8x128xf32>
    %129 = arith.mulf %113, %121 : vector<8x128xf32>
    %130 = arith.addf %128, %129 : vector<8x128xf32>
    %131 = math.tanh %130 : vector<8x128xf32>
    %132 = arith.mulf %127, %131 : vector<8x128xf32>
    %c2_i32 = arith.constant 2 : i32
    %133 = arith.index_cast %c2_i32 : i32 to index
    %c0_37 = arith.constant 0 : index
    %c0_38 = arith.constant 0 : index
    %134 = vector.load %arg10[%133, %c0_37, %c0_38] : memref<8x8x512xf32, #tpu.memory_space<vmem>>, vector<1x8x512xf32>
    %135 = vector.shape_cast %134 : vector<1x8x512xf32> to vector<8x512xf32>
    %cst_39 = arith.constant dense<0.000000e+00> : vector<8x512xf32>
    %136 = tpu.matmul %103, %11, %cst_39 {dimension_numbers = #tpu.dot_dimension_numbers<[1], [0], [0], [1], [0, 0, 1, 1], [], []>} : vector<8x128xf32>, vector<128x512xf32>, vector<8x512xf32> -> vector<8x512xf32>
    %137 = arith.addf %135, %136 : vector<8x512xf32>
    %138 = vector.extract_strided_slice %137 {offsets = [0, 0], sizes = [8, 128], strides = [1, 1]} : vector<8x512xf32> to vector<8x128xf32>
    %139 = arith.negf %138 : vector<8x128xf32>
    %140 = math.exp %139 : vector<8x128xf32>
    %cst_40 = arith.constant 1.000000e+00 : f32
    %141 = vector.broadcast %cst_40 : f32 to vector<8x128xf32>
    %142 = arith.addf %141, %140 : vector<8x128xf32>
    %143 = arith.divf %141, %142 : vector<8x128xf32>
    %144 = vector.extract_strided_slice %137 {offsets = [0, 128], sizes = [8, 128], strides = [1, 1]} : vector<8x512xf32> to vector<8x128xf32>
    %145 = arith.negf %144 : vector<8x128xf32>
    %146 = math.exp %145 : vector<8x128xf32>
    %cst_41 = arith.constant 1.000000e+00 : f32
    %147 = vector.broadcast %cst_41 : f32 to vector<8x128xf32>
    %148 = arith.addf %147, %146 : vector<8x128xf32>
    %149 = arith.divf %147, %148 : vector<8x128xf32>
    %150 = vector.extract_strided_slice %137 {offsets = [0, 256], sizes = [8, 128], strides = [1, 1]} : vector<8x512xf32> to vector<8x128xf32>
    %151 = math.tanh %150 : vector<8x128xf32>
    %152 = vector.extract_strided_slice %137 {offsets = [0, 384], sizes = [8, 128], strides = [1, 1]} : vector<8x512xf32> to vector<8x128xf32>
    %153 = arith.negf %152 : vector<8x128xf32>
    %154 = math.exp %153 : vector<8x128xf32>
    %cst_42 = arith.constant 1.000000e+00 : f32
    %155 = vector.broadcast %cst_42 : f32 to vector<8x128xf32>
    %156 = arith.addf %155, %154 : vector<8x128xf32>
    %157 = arith.divf %155, %156 : vector<8x128xf32>
    %158 = arith.mulf %149, %101 : vector<8x128xf32>
    %159 = arith.mulf %143, %151 : vector<8x128xf32>
    %160 = arith.addf %158, %159 : vector<8x128xf32>
    %161 = math.tanh %160 : vector<8x128xf32>
    %162 = arith.mulf %157, %161 : vector<8x128xf32>
    %163 = tpu.concatenate %162, %132 in 1 : vector<8x128xf32>, vector<8x128xf32> -> vector<8x256xf32>
    %cst_43 = arith.constant dense<0.000000e+00> : vector<8x512xf32>
    %164 = tpu.matmul %163, %12, %cst_43 {dimension_numbers = #tpu.dot_dimension_numbers<[1], [0], [0], [1], [0, 0, 1, 1], [], []>} : vector<8x256xf32>, vector<256x512xf32>, vector<8x512xf32> -> vector<8x512xf32>
    %165 = vector.broadcast %13 : vector<1x512xf32> to vector<8x512xf32>
    %166 = arith.addf %164, %165 : vector<8x512xf32>
    %167 = vector.extract_strided_slice %166 {offsets = [0, 0], sizes = [8, 128], strides = [1, 1]} : vector<8x512xf32> to vector<8x128xf32>
    %168 = arith.negf %167 : vector<8x128xf32>
    %169 = math.exp %168 : vector<8x128xf32>
    %cst_44 = arith.constant 1.000000e+00 : f32
    %170 = vector.broadcast %cst_44 : f32 to vector<8x128xf32>
    %171 = arith.addf %170, %169 : vector<8x128xf32>
    %172 = arith.divf %170, %171 : vector<8x128xf32>
    %173 = vector.extract_strided_slice %166 {offsets = [0, 128], sizes = [8, 128], strides = [1, 1]} : vector<8x512xf32> to vector<8x128xf32>
    %174 = arith.negf %173 : vector<8x128xf32>
    %175 = math.exp %174 : vector<8x128xf32>
    %cst_45 = arith.constant 1.000000e+00 : f32
    %176 = vector.broadcast %cst_45 : f32 to vector<8x128xf32>
    %177 = arith.addf %176, %175 : vector<8x128xf32>
    %178 = arith.divf %176, %177 : vector<8x128xf32>
    %179 = vector.extract_strided_slice %166 {offsets = [0, 256], sizes = [8, 128], strides = [1, 1]} : vector<8x512xf32> to vector<8x128xf32>
    %180 = math.tanh %179 : vector<8x128xf32>
    %181 = vector.extract_strided_slice %166 {offsets = [0, 384], sizes = [8, 128], strides = [1, 1]} : vector<8x512xf32> to vector<8x128xf32>
    %182 = arith.negf %181 : vector<8x128xf32>
    %183 = math.exp %182 : vector<8x128xf32>
    %cst_46 = arith.constant 1.000000e+00 : f32
    %184 = vector.broadcast %cst_46 : f32 to vector<8x128xf32>
    %185 = arith.addf %184, %183 : vector<8x128xf32>
    %186 = arith.divf %184, %185 : vector<8x128xf32>
    %187 = arith.mulf %178, %130 : vector<8x128xf32>
    %188 = arith.mulf %172, %180 : vector<8x128xf32>
    %189 = arith.addf %187, %188 : vector<8x128xf32>
    %190 = math.tanh %189 : vector<8x128xf32>
    %191 = arith.mulf %186, %190 : vector<8x128xf32>
    %c3_i32 = arith.constant 3 : i32
    %192 = arith.index_cast %c3_i32 : i32 to index
    %c0_47 = arith.constant 0 : index
    %c0_48 = arith.constant 0 : index
    %193 = vector.load %arg10[%192, %c0_47, %c0_48] : memref<8x8x512xf32, #tpu.memory_space<vmem>>, vector<1x8x512xf32>
    %194 = vector.shape_cast %193 : vector<1x8x512xf32> to vector<8x512xf32>
    %cst_49 = arith.constant dense<0.000000e+00> : vector<8x512xf32>
    %195 = tpu.matmul %162, %11, %cst_49 {dimension_numbers = #tpu.dot_dimension_numbers<[1], [0], [0], [1], [0, 0, 1, 1], [], []>} : vector<8x128xf32>, vector<128x512xf32>, vector<8x512xf32> -> vector<8x512xf32>
    %196 = arith.addf %194, %195 : vector<8x512xf32>
    %197 = vector.extract_strided_slice %196 {offsets = [0, 0], sizes = [8, 128], strides = [1, 1]} : vector<8x512xf32> to vector<8x128xf32>
    %198 = arith.negf %197 : vector<8x128xf32>
    %199 = math.exp %198 : vector<8x128xf32>
    %cst_50 = arith.constant 1.000000e+00 : f32
    %200 = vector.broadcast %cst_50 : f32 to vector<8x128xf32>
    %201 = arith.addf %200, %199 : vector<8x128xf32>
    %202 = arith.divf %200, %201 : vector<8x128xf32>
    %203 = vector.extract_strided_slice %196 {offsets = [0, 128], sizes = [8, 128], strides = [1, 1]} : vector<8x512xf32> to vector<8x128xf32>
    %204 = arith.negf %203 : vector<8x128xf32>
    %205 = math.exp %204 : vector<8x128xf32>
    %cst_51 = arith.constant 1.000000e+00 : f32
    %206 = vector.broadcast %cst_51 : f32 to vector<8x128xf32>
    %207 = arith.addf %206, %205 : vector<8x128xf32>
    %208 = arith.divf %206, %207 : vector<8x128xf32>
    %209 = vector.extract_strided_slice %196 {offsets = [0, 256], sizes = [8, 128], strides = [1, 1]} : vector<8x512xf32> to vector<8x128xf32>
    %210 = math.tanh %209 : vector<8x128xf32>
    %211 = vector.extract_strided_slice %196 {offsets = [0, 384], sizes = [8, 128], strides = [1, 1]} : vector<8x512xf32> to vector<8x128xf32>
    %212 = arith.negf %211 : vector<8x128xf32>
    %213 = math.exp %212 : vector<8x128xf32>
    %cst_52 = arith.constant 1.000000e+00 : f32
    %214 = vector.broadcast %cst_52 : f32 to vector<8x128xf32>
    %215 = arith.addf %214, %213 : vector<8x128xf32>
    %216 = arith.divf %214, %215 : vector<8x128xf32>
    %217 = arith.mulf %208, %160 : vector<8x128xf32>
    %218 = arith.mulf %202, %210 : vector<8x128xf32>
    %219 = arith.addf %217, %218 : vector<8x128xf32>
    %220 = math.tanh %219 : vector<8x128xf32>
    %221 = arith.mulf %216, %220 : vector<8x128xf32>
    %222 = tpu.concatenate %221, %191 in 1 : vector<8x128xf32>, vector<8x128xf32> -> vector<8x256xf32>
    %cst_53 = arith.constant dense<0.000000e+00> : vector<8x512xf32>
    %223 = tpu.matmul %222, %12, %cst_53 {dimension_numbers = #tpu.dot_dimension_numbers<[1], [0], [0], [1], [0, 0, 1, 1], [], []>} : vector<8x256xf32>, vector<256x512xf32>, vector<8x512xf32> -> vector<8x512xf32>
    %224 = vector.broadcast %13 : vector<1x512xf32> to vector<8x512xf32>
    %225 = arith.addf %223, %224 : vector<8x512xf32>
    %226 = vector.extract_strided_slice %225 {offsets = [0, 0], sizes = [8, 128], strides = [1, 1]} : vector<8x512xf32> to vector<8x128xf32>
    %227 = arith.negf %226 : vector<8x128xf32>
    %228 = math.exp %227 : vector<8x128xf32>
    %cst_54 = arith.constant 1.000000e+00 : f32
    %229 = vector.broadcast %cst_54 : f32 to vector<8x128xf32>
    %230 = arith.addf %229, %228 : vector<8x128xf32>
    %231 = arith.divf %229, %230 : vector<8x128xf32>
    %232 = vector.extract_strided_slice %225 {offsets = [0, 128], sizes = [8, 128], strides = [1, 1]} : vector<8x512xf32> to vector<8x128xf32>
    %233 = arith.negf %232 : vector<8x128xf32>
    %234 = math.exp %233 : vector<8x128xf32>
    %cst_55 = arith.constant 1.000000e+00 : f32
    %235 = vector.broadcast %cst_55 : f32 to vector<8x128xf32>
    %236 = arith.addf %235, %234 : vector<8x128xf32>
    %237 = arith.divf %235, %236 : vector<8x128xf32>
    %238 = vector.extract_strided_slice %225 {offsets = [0, 256], sizes = [8, 128], strides = [1, 1]} : vector<8x512xf32> to vector<8x128xf32>
    %239 = math.tanh %238 : vector<8x128xf32>
    %240 = vector.extract_strided_slice %225 {offsets = [0, 384], sizes = [8, 128], strides = [1, 1]} : vector<8x512xf32> to vector<8x128xf32>
    %241 = arith.negf %240 : vector<8x128xf32>
    %242 = math.exp %241 : vector<8x128xf32>
    %cst_56 = arith.constant 1.000000e+00 : f32
    %243 = vector.broadcast %cst_56 : f32 to vector<8x128xf32>
    %244 = arith.addf %243, %242 : vector<8x128xf32>
    %245 = arith.divf %243, %244 : vector<8x128xf32>
    %246 = arith.mulf %237, %189 : vector<8x128xf32>
    %247 = arith.mulf %231, %239 : vector<8x128xf32>
    %248 = arith.addf %246, %247 : vector<8x128xf32>
    %249 = math.tanh %248 : vector<8x128xf32>
    %250 = arith.mulf %245, %249 : vector<8x128xf32>
    %c4_i32 = arith.constant 4 : i32
    %251 = arith.index_cast %c4_i32 : i32 to index
    %c0_57 = arith.constant 0 : index
    %c0_58 = arith.constant 0 : index
    %252 = vector.load %arg10[%251, %c0_57, %c0_58] : memref<8x8x512xf32, #tpu.memory_space<vmem>>, vector<1x8x512xf32>
    %253 = vector.shape_cast %252 : vector<1x8x512xf32> to vector<8x512xf32>
    %cst_59 = arith.constant dense<0.000000e+00> : vector<8x512xf32>
    %254 = tpu.matmul %221, %11, %cst_59 {dimension_numbers = #tpu.dot_dimension_numbers<[1], [0], [0], [1], [0, 0, 1, 1], [], []>} : vector<8x128xf32>, vector<128x512xf32>, vector<8x512xf32> -> vector<8x512xf32>
    %255 = arith.addf %253, %254 : vector<8x512xf32>
    %256 = vector.extract_strided_slice %255 {offsets = [0, 0], sizes = [8, 128], strides = [1, 1]} : vector<8x512xf32> to vector<8x128xf32>
    %257 = arith.negf %256 : vector<8x128xf32>
    %258 = math.exp %257 : vector<8x128xf32>
    %cst_60 = arith.constant 1.000000e+00 : f32
    %259 = vector.broadcast %cst_60 : f32 to vector<8x128xf32>
    %260 = arith.addf %259, %258 : vector<8x128xf32>
    %261 = arith.divf %259, %260 : vector<8x128xf32>
    %262 = vector.extract_strided_slice %255 {offsets = [0, 128], sizes = [8, 128], strides = [1, 1]} : vector<8x512xf32> to vector<8x128xf32>
    %263 = arith.negf %262 : vector<8x128xf32>
    %264 = math.exp %263 : vector<8x128xf32>
    %cst_61 = arith.constant 1.000000e+00 : f32
    %265 = vector.broadcast %cst_61 : f32 to vector<8x128xf32>
    %266 = arith.addf %265, %264 : vector<8x128xf32>
    %267 = arith.divf %265, %266 : vector<8x128xf32>
    %268 = vector.extract_strided_slice %255 {offsets = [0, 256], sizes = [8, 128], strides = [1, 1]} : vector<8x512xf32> to vector<8x128xf32>
    %269 = math.tanh %268 : vector<8x128xf32>
    %270 = vector.extract_strided_slice %255 {offsets = [0, 384], sizes = [8, 128], strides = [1, 1]} : vector<8x512xf32> to vector<8x128xf32>
    %271 = arith.negf %270 : vector<8x128xf32>
    %272 = math.exp %271 : vector<8x128xf32>
    %cst_62 = arith.constant 1.000000e+00 : f32
    %273 = vector.broadcast %cst_62 : f32 to vector<8x128xf32>
    %274 = arith.addf %273, %272 : vector<8x128xf32>
    %275 = arith.divf %273, %274 : vector<8x128xf32>
    %276 = arith.mulf %267, %219 : vector<8x128xf32>
    %277 = arith.mulf %261, %269 : vector<8x128xf32>
    %278 = arith.addf %276, %277 : vector<8x128xf32>
    %279 = math.tanh %278 : vector<8x128xf32>
    %280 = arith.mulf %275, %279 : vector<8x128xf32>
    %281 = tpu.concatenate %280, %250 in 1 : vector<8x128xf32>, vector<8x128xf32> -> vector<8x256xf32>
    %cst_63 = arith.constant dense<0.000000e+00> : vector<8x512xf32>
    %282 = tpu.matmul %281, %12, %cst_63 {dimension_numbers = #tpu.dot_dimension_numbers<[1], [0], [0], [1], [0, 0, 1, 1], [], []>} : vector<8x256xf32>, vector<256x512xf32>, vector<8x512xf32> -> vector<8x512xf32>
    %283 = vector.broadcast %13 : vector<1x512xf32> to vector<8x512xf32>
    %284 = arith.addf %282, %283 : vector<8x512xf32>
    %285 = vector.extract_strided_slice %284 {offsets = [0, 0], sizes = [8, 128], strides = [1, 1]} : vector<8x512xf32> to vector<8x128xf32>
    %286 = arith.negf %285 : vector<8x128xf32>
    %287 = math.exp %286 : vector<8x128xf32>
    %cst_64 = arith.constant 1.000000e+00 : f32
    %288 = vector.broadcast %cst_64 : f32 to vector<8x128xf32>
    %289 = arith.addf %288, %287 : vector<8x128xf32>
    %290 = arith.divf %288, %289 : vector<8x128xf32>
    %291 = vector.extract_strided_slice %284 {offsets = [0, 128], sizes = [8, 128], strides = [1, 1]} : vector<8x512xf32> to vector<8x128xf32>
    %292 = arith.negf %291 : vector<8x128xf32>
    %293 = math.exp %292 : vector<8x128xf32>
    %cst_65 = arith.constant 1.000000e+00 : f32
    %294 = vector.broadcast %cst_65 : f32 to vector<8x128xf32>
    %295 = arith.addf %294, %293 : vector<8x128xf32>
    %296 = arith.divf %294, %295 : vector<8x128xf32>
    %297 = vector.extract_strided_slice %284 {offsets = [0, 256], sizes = [8, 128], strides = [1, 1]} : vector<8x512xf32> to vector<8x128xf32>
    %298 = math.tanh %297 : vector<8x128xf32>
    %299 = vector.extract_strided_slice %284 {offsets = [0, 384], sizes = [8, 128], strides = [1, 1]} : vector<8x512xf32> to vector<8x128xf32>
    %300 = arith.negf %299 : vector<8x128xf32>
    %301 = math.exp %300 : vector<8x128xf32>
    %cst_66 = arith.constant 1.000000e+00 : f32
    %302 = vector.broadcast %cst_66 : f32 to vector<8x128xf32>
    %303 = arith.addf %302, %301 : vector<8x128xf32>
    %304 = arith.divf %302, %303 : vector<8x128xf32>
    %305 = arith.mulf %296, %248 : vector<8x128xf32>
    %306 = arith.mulf %290, %298 : vector<8x128xf32>
    %307 = arith.addf %305, %306 : vector<8x128xf32>
    %308 = math.tanh %307 : vector<8x128xf32>
    %309 = arith.mulf %304, %308 : vector<8x128xf32>
    %c5_i32 = arith.constant 5 : i32
    %310 = arith.index_cast %c5_i32 : i32 to index
    %c0_67 = arith.constant 0 : index
    %c0_68 = arith.constant 0 : index
    %311 = vector.load %arg10[%310, %c0_67, %c0_68] : memref<8x8x512xf32, #tpu.memory_space<vmem>>, vector<1x8x512xf32>
    %312 = vector.shape_cast %311 : vector<1x8x512xf32> to vector<8x512xf32>
    %cst_69 = arith.constant dense<0.000000e+00> : vector<8x512xf32>
    %313 = tpu.matmul %280, %11, %cst_69 {dimension_numbers = #tpu.dot_dimension_numbers<[1], [0], [0], [1], [0, 0, 1, 1], [], []>} : vector<8x128xf32>, vector<128x512xf32>, vector<8x512xf32> -> vector<8x512xf32>
    %314 = arith.addf %312, %313 : vector<8x512xf32>
    %315 = vector.extract_strided_slice %314 {offsets = [0, 0], sizes = [8, 128], strides = [1, 1]} : vector<8x512xf32> to vector<8x128xf32>
    %316 = arith.negf %315 : vector<8x128xf32>
    %317 = math.exp %316 : vector<8x128xf32>
    %cst_70 = arith.constant 1.000000e+00 : f32
    %318 = vector.broadcast %cst_70 : f32 to vector<8x128xf32>
    %319 = arith.addf %318, %317 : vector<8x128xf32>
    %320 = arith.divf %318, %319 : vector<8x128xf32>
    %321 = vector.extract_strided_slice %314 {offsets = [0, 128], sizes = [8, 128], strides = [1, 1]} : vector<8x512xf32> to vector<8x128xf32>
    %322 = arith.negf %321 : vector<8x128xf32>
    %323 = math.exp %322 : vector<8x128xf32>
    %cst_71 = arith.constant 1.000000e+00 : f32
    %324 = vector.broadcast %cst_71 : f32 to vector<8x128xf32>
    %325 = arith.addf %324, %323 : vector<8x128xf32>
    %326 = arith.divf %324, %325 : vector<8x128xf32>
    %327 = vector.extract_strided_slice %314 {offsets = [0, 256], sizes = [8, 128], strides = [1, 1]} : vector<8x512xf32> to vector<8x128xf32>
    %328 = math.tanh %327 : vector<8x128xf32>
    %329 = vector.extract_strided_slice %314 {offsets = [0, 384], sizes = [8, 128], strides = [1, 1]} : vector<8x512xf32> to vector<8x128xf32>
    %330 = arith.negf %329 : vector<8x128xf32>
    %331 = math.exp %330 : vector<8x128xf32>
    %cst_72 = arith.constant 1.000000e+00 : f32
    %332 = vector.broadcast %cst_72 : f32 to vector<8x128xf32>
    %333 = arith.addf %332, %331 : vector<8x128xf32>
    %334 = arith.divf %332, %333 : vector<8x128xf32>
    %335 = arith.mulf %326, %278 : vector<8x128xf32>
    %336 = arith.mulf %320, %328 : vector<8x128xf32>
    %337 = arith.addf %335, %336 : vector<8x128xf32>
    %338 = math.tanh %337 : vector<8x128xf32>
    %339 = arith.mulf %334, %338 : vector<8x128xf32>
    %340 = tpu.concatenate %339, %309 in 1 : vector<8x128xf32>, vector<8x128xf32> -> vector<8x256xf32>
    %cst_73 = arith.constant dense<0.000000e+00> : vector<8x512xf32>
    %341 = tpu.matmul %340, %12, %cst_73 {dimension_numbers = #tpu.dot_dimension_numbers<[1], [0], [0], [1], [0, 0, 1, 1], [], []>} : vector<8x256xf32>, vector<256x512xf32>, vector<8x512xf32> -> vector<8x512xf32>
    %342 = vector.broadcast %13 : vector<1x512xf32> to vector<8x512xf32>
    %343 = arith.addf %341, %342 : vector<8x512xf32>
    %344 = vector.extract_strided_slice %343 {offsets = [0, 0], sizes = [8, 128], strides = [1, 1]} : vector<8x512xf32> to vector<8x128xf32>
    %345 = arith.negf %344 : vector<8x128xf32>
    %346 = math.exp %345 : vector<8x128xf32>
    %cst_74 = arith.constant 1.000000e+00 : f32
    %347 = vector.broadcast %cst_74 : f32 to vector<8x128xf32>
    %348 = arith.addf %347, %346 : vector<8x128xf32>
    %349 = arith.divf %347, %348 : vector<8x128xf32>
    %350 = vector.extract_strided_slice %343 {offsets = [0, 128], sizes = [8, 128], strides = [1, 1]} : vector<8x512xf32> to vector<8x128xf32>
    %351 = arith.negf %350 : vector<8x128xf32>
    %352 = math.exp %351 : vector<8x128xf32>
    %cst_75 = arith.constant 1.000000e+00 : f32
    %353 = vector.broadcast %cst_75 : f32 to vector<8x128xf32>
    %354 = arith.addf %353, %352 : vector<8x128xf32>
    %355 = arith.divf %353, %354 : vector<8x128xf32>
    %356 = vector.extract_strided_slice %343 {offsets = [0, 256], sizes = [8, 128], strides = [1, 1]} : vector<8x512xf32> to vector<8x128xf32>
    %357 = math.tanh %356 : vector<8x128xf32>
    %358 = vector.extract_strided_slice %343 {offsets = [0, 384], sizes = [8, 128], strides = [1, 1]} : vector<8x512xf32> to vector<8x128xf32>
    %359 = arith.negf %358 : vector<8x128xf32>
    %360 = math.exp %359 : vector<8x128xf32>
    %cst_76 = arith.constant 1.000000e+00 : f32
    %361 = vector.broadcast %cst_76 : f32 to vector<8x128xf32>
    %362 = arith.addf %361, %360 : vector<8x128xf32>
    %363 = arith.divf %361, %362 : vector<8x128xf32>
    %364 = arith.mulf %355, %307 : vector<8x128xf32>
    %365 = arith.mulf %349, %357 : vector<8x128xf32>
    %366 = arith.addf %364, %365 : vector<8x128xf32>
    %367 = math.tanh %366 : vector<8x128xf32>
    %368 = arith.mulf %363, %367 : vector<8x128xf32>
    %c6_i32 = arith.constant 6 : i32
    %369 = arith.index_cast %c6_i32 : i32 to index
    %c0_77 = arith.constant 0 : index
    %c0_78 = arith.constant 0 : index
    %370 = vector.load %arg10[%369, %c0_77, %c0_78] : memref<8x8x512xf32, #tpu.memory_space<vmem>>, vector<1x8x512xf32>
    %371 = vector.shape_cast %370 : vector<1x8x512xf32> to vector<8x512xf32>
    %cst_79 = arith.constant dense<0.000000e+00> : vector<8x512xf32>
    %372 = tpu.matmul %339, %11, %cst_79 {dimension_numbers = #tpu.dot_dimension_numbers<[1], [0], [0], [1], [0, 0, 1, 1], [], []>} : vector<8x128xf32>, vector<128x512xf32>, vector<8x512xf32> -> vector<8x512xf32>
    %373 = arith.addf %371, %372 : vector<8x512xf32>
    %374 = vector.extract_strided_slice %373 {offsets = [0, 0], sizes = [8, 128], strides = [1, 1]} : vector<8x512xf32> to vector<8x128xf32>
    %375 = arith.negf %374 : vector<8x128xf32>
    %376 = math.exp %375 : vector<8x128xf32>
    %cst_80 = arith.constant 1.000000e+00 : f32
    %377 = vector.broadcast %cst_80 : f32 to vector<8x128xf32>
    %378 = arith.addf %377, %376 : vector<8x128xf32>
    %379 = arith.divf %377, %378 : vector<8x128xf32>
    %380 = vector.extract_strided_slice %373 {offsets = [0, 128], sizes = [8, 128], strides = [1, 1]} : vector<8x512xf32> to vector<8x128xf32>
    %381 = arith.negf %380 : vector<8x128xf32>
    %382 = math.exp %381 : vector<8x128xf32>
    %cst_81 = arith.constant 1.000000e+00 : f32
    %383 = vector.broadcast %cst_81 : f32 to vector<8x128xf32>
    %384 = arith.addf %383, %382 : vector<8x128xf32>
    %385 = arith.divf %383, %384 : vector<8x128xf32>
    %386 = vector.extract_strided_slice %373 {offsets = [0, 256], sizes = [8, 128], strides = [1, 1]} : vector<8x512xf32> to vector<8x128xf32>
    %387 = math.tanh %386 : vector<8x128xf32>
    %388 = vector.extract_strided_slice %373 {offsets = [0, 384], sizes = [8, 128], strides = [1, 1]} : vector<8x512xf32> to vector<8x128xf32>
    %389 = arith.negf %388 : vector<8x128xf32>
    %390 = math.exp %389 : vector<8x128xf32>
    %cst_82 = arith.constant 1.000000e+00 : f32
    %391 = vector.broadcast %cst_82 : f32 to vector<8x128xf32>
    %392 = arith.addf %391, %390 : vector<8x128xf32>
    %393 = arith.divf %391, %392 : vector<8x128xf32>
    %394 = arith.mulf %385, %337 : vector<8x128xf32>
    %395 = arith.mulf %379, %387 : vector<8x128xf32>
    %396 = arith.addf %394, %395 : vector<8x128xf32>
    %397 = math.tanh %396 : vector<8x128xf32>
    %398 = arith.mulf %393, %397 : vector<8x128xf32>
    %399 = tpu.concatenate %398, %368 in 1 : vector<8x128xf32>, vector<8x128xf32> -> vector<8x256xf32>
    %cst_83 = arith.constant dense<0.000000e+00> : vector<8x512xf32>
    %400 = tpu.matmul %399, %12, %cst_83 {dimension_numbers = #tpu.dot_dimension_numbers<[1], [0], [0], [1], [0, 0, 1, 1], [], []>} : vector<8x256xf32>, vector<256x512xf32>, vector<8x512xf32> -> vector<8x512xf32>
    %401 = vector.broadcast %13 : vector<1x512xf32> to vector<8x512xf32>
    %402 = arith.addf %400, %401 : vector<8x512xf32>
    %403 = vector.extract_strided_slice %402 {offsets = [0, 0], sizes = [8, 128], strides = [1, 1]} : vector<8x512xf32> to vector<8x128xf32>
    %404 = arith.negf %403 : vector<8x128xf32>
    %405 = math.exp %404 : vector<8x128xf32>
    %cst_84 = arith.constant 1.000000e+00 : f32
    %406 = vector.broadcast %cst_84 : f32 to vector<8x128xf32>
    %407 = arith.addf %406, %405 : vector<8x128xf32>
    %408 = arith.divf %406, %407 : vector<8x128xf32>
    %409 = vector.extract_strided_slice %402 {offsets = [0, 128], sizes = [8, 128], strides = [1, 1]} : vector<8x512xf32> to vector<8x128xf32>
    %410 = arith.negf %409 : vector<8x128xf32>
    %411 = math.exp %410 : vector<8x128xf32>
    %cst_85 = arith.constant 1.000000e+00 : f32
    %412 = vector.broadcast %cst_85 : f32 to vector<8x128xf32>
    %413 = arith.addf %412, %411 : vector<8x128xf32>
    %414 = arith.divf %412, %413 : vector<8x128xf32>
    %415 = vector.extract_strided_slice %402 {offsets = [0, 256], sizes = [8, 128], strides = [1, 1]} : vector<8x512xf32> to vector<8x128xf32>
    %416 = math.tanh %415 : vector<8x128xf32>
    %417 = vector.extract_strided_slice %402 {offsets = [0, 384], sizes = [8, 128], strides = [1, 1]} : vector<8x512xf32> to vector<8x128xf32>
    %418 = arith.negf %417 : vector<8x128xf32>
    %419 = math.exp %418 : vector<8x128xf32>
    %cst_86 = arith.constant 1.000000e+00 : f32
    %420 = vector.broadcast %cst_86 : f32 to vector<8x128xf32>
    %421 = arith.addf %420, %419 : vector<8x128xf32>
    %422 = arith.divf %420, %421 : vector<8x128xf32>
    %423 = arith.mulf %414, %366 : vector<8x128xf32>
    %424 = arith.mulf %408, %416 : vector<8x128xf32>
    %425 = arith.addf %423, %424 : vector<8x128xf32>
    %426 = math.tanh %425 : vector<8x128xf32>
    %427 = arith.mulf %422, %426 : vector<8x128xf32>
    %c7_i32 = arith.constant 7 : i32
    %428 = arith.index_cast %c7_i32 : i32 to index
    %c0_87 = arith.constant 0 : index
    %c0_88 = arith.constant 0 : index
    %429 = vector.load %arg10[%428, %c0_87, %c0_88] : memref<8x8x512xf32, #tpu.memory_space<vmem>>, vector<1x8x512xf32>
    %430 = vector.shape_cast %429 : vector<1x8x512xf32> to vector<8x512xf32>
    %cst_89 = arith.constant dense<0.000000e+00> : vector<8x512xf32>
    %431 = tpu.matmul %398, %11, %cst_89 {dimension_numbers = #tpu.dot_dimension_numbers<[1], [0], [0], [1], [0, 0, 1, 1], [], []>} : vector<8x128xf32>, vector<128x512xf32>, vector<8x512xf32> -> vector<8x512xf32>
    %432 = arith.addf %430, %431 : vector<8x512xf32>
    %433 = vector.extract_strided_slice %432 {offsets = [0, 0], sizes = [8, 128], strides = [1, 1]} : vector<8x512xf32> to vector<8x128xf32>
    %434 = arith.negf %433 : vector<8x128xf32>
    %435 = math.exp %434 : vector<8x128xf32>
    %cst_90 = arith.constant 1.000000e+00 : f32
    %436 = vector.broadcast %cst_90 : f32 to vector<8x128xf32>
    %437 = arith.addf %436, %435 : vector<8x128xf32>
    %438 = arith.divf %436, %437 : vector<8x128xf32>
    %439 = vector.extract_strided_slice %432 {offsets = [0, 128], sizes = [8, 128], strides = [1, 1]} : vector<8x512xf32> to vector<8x128xf32>
    %440 = arith.negf %439 : vector<8x128xf32>
    %441 = math.exp %440 : vector<8x128xf32>
    %cst_91 = arith.constant 1.000000e+00 : f32
    %442 = vector.broadcast %cst_91 : f32 to vector<8x128xf32>
    %443 = arith.addf %442, %441 : vector<8x128xf32>
    %444 = arith.divf %442, %443 : vector<8x128xf32>
    %445 = vector.extract_strided_slice %432 {offsets = [0, 256], sizes = [8, 128], strides = [1, 1]} : vector<8x512xf32> to vector<8x128xf32>
    %446 = math.tanh %445 : vector<8x128xf32>
    %447 = vector.extract_strided_slice %432 {offsets = [0, 384], sizes = [8, 128], strides = [1, 1]} : vector<8x512xf32> to vector<8x128xf32>
    %448 = arith.negf %447 : vector<8x128xf32>
    %449 = math.exp %448 : vector<8x128xf32>
    %cst_92 = arith.constant 1.000000e+00 : f32
    %450 = vector.broadcast %cst_92 : f32 to vector<8x128xf32>
    %451 = arith.addf %450, %449 : vector<8x128xf32>
    %452 = arith.divf %450, %451 : vector<8x128xf32>
    %453 = arith.mulf %444, %396 : vector<8x128xf32>
    %454 = arith.mulf %438, %446 : vector<8x128xf32>
    %455 = arith.addf %453, %454 : vector<8x128xf32>
    %456 = math.tanh %455 : vector<8x128xf32>
    %457 = arith.mulf %452, %456 : vector<8x128xf32>
    %458 = tpu.concatenate %457, %427 in 1 : vector<8x128xf32>, vector<8x128xf32> -> vector<8x256xf32>
    %cst_93 = arith.constant dense<0.000000e+00> : vector<8x512xf32>
    %459 = tpu.matmul %458, %12, %cst_93 {dimension_numbers = #tpu.dot_dimension_numbers<[1], [0], [0], [1], [0, 0, 1, 1], [], []>} : vector<8x256xf32>, vector<256x512xf32>, vector<8x512xf32> -> vector<8x512xf32>
    %460 = vector.broadcast %13 : vector<1x512xf32> to vector<8x512xf32>
    %461 = arith.addf %459, %460 : vector<8x512xf32>
    %462 = vector.extract_strided_slice %461 {offsets = [0, 0], sizes = [8, 128], strides = [1, 1]} : vector<8x512xf32> to vector<8x128xf32>
    %463 = arith.negf %462 : vector<8x128xf32>
    %464 = math.exp %463 : vector<8x128xf32>
    %cst_94 = arith.constant 1.000000e+00 : f32
    %465 = vector.broadcast %cst_94 : f32 to vector<8x128xf32>
    %466 = arith.addf %465, %464 : vector<8x128xf32>
    %467 = arith.divf %465, %466 : vector<8x128xf32>
    %468 = vector.extract_strided_slice %461 {offsets = [0, 128], sizes = [8, 128], strides = [1, 1]} : vector<8x512xf32> to vector<8x128xf32>
    %469 = arith.negf %468 : vector<8x128xf32>
    %470 = math.exp %469 : vector<8x128xf32>
    %cst_95 = arith.constant 1.000000e+00 : f32
    %471 = vector.broadcast %cst_95 : f32 to vector<8x128xf32>
    %472 = arith.addf %471, %470 : vector<8x128xf32>
    %473 = arith.divf %471, %472 : vector<8x128xf32>
    %474 = vector.extract_strided_slice %461 {offsets = [0, 256], sizes = [8, 128], strides = [1, 1]} : vector<8x512xf32> to vector<8x128xf32>
    %475 = math.tanh %474 : vector<8x128xf32>
    %476 = vector.extract_strided_slice %461 {offsets = [0, 384], sizes = [8, 128], strides = [1, 1]} : vector<8x512xf32> to vector<8x128xf32>
    %477 = arith.negf %476 : vector<8x128xf32>
    %478 = math.exp %477 : vector<8x128xf32>
    %cst_96 = arith.constant 1.000000e+00 : f32
    %479 = vector.broadcast %cst_96 : f32 to vector<8x128xf32>
    %480 = arith.addf %479, %478 : vector<8x128xf32>
    %481 = arith.divf %479, %480 : vector<8x128xf32>
    %482 = arith.mulf %473, %425 : vector<8x128xf32>
    %483 = arith.mulf %467, %475 : vector<8x128xf32>
    %484 = arith.addf %482, %483 : vector<8x128xf32>
    %485 = math.tanh %484 : vector<8x128xf32>
    %486 = arith.mulf %481, %485 : vector<8x128xf32>
    %c8_i32 = arith.constant 8 : i32
    %c0_97 = arith.constant 0 : index
    %c0_98 = arith.constant 0 : index
    %487 = vector.load %arg7[%c0_97, %c0_98] : memref<128x128xf32, #tpu.memory_space<vmem>>, vector<128x128xf32>
    %cst_99 = arith.constant dense<0.000000e+00> : vector<8x128xf32>
    %488 = tpu.matmul %486, %487, %cst_99 {dimension_numbers = #tpu.dot_dimension_numbers<[1], [0], [0], [1], [0, 0, 1, 1], [], []>} : vector<8x128xf32>, vector<128x128xf32>, vector<8x128xf32> -> vector<8x128xf32>
    %c0_100 = arith.constant 0 : index
    %c0_101 = arith.constant 0 : index
    %489 = vector.load %arg8[%c0_100, %c0_101] : memref<1x128xf32, #tpu.memory_space<vmem>>, vector<1x128xf32>
    %490 = vector.broadcast %489 : vector<1x128xf32> to vector<8x128xf32>
    %491 = arith.addf %488, %490 : vector<8x128xf32>
    %c0_102 = arith.constant 0 : index
    %c0_103 = arith.constant 0 : index
    %492 = vector.load %arg9[%c0_102, %c0_103] : memref<8x128xf32, #tpu.memory_space<vmem>>, vector<8x128xf32>
    tpu.vector_store %arg9[%c0_102, %c0_103], %491 {strides = array<i32>} : memref<8x128xf32, #tpu.memory_space<vmem>>, vector<8x128xf32>,
    return
  }
  func.func @transform_0(%arg0: i32) -> (i32, i32, i32) {
    %c0_i32 = arith.constant 0 : i32
    %c0_i32_0 = arith.constant 0 : i32
    %c0_i32_1 = arith.constant 0 : i32
    return %c0_i32, %arg0, %c0_i32_0 : i32, i32, i32
  }
  func.func @transform_1(%arg0: i32) -> (i32, i32) {
    %c0_i32 = arith.constant 0 : i32
    %c0_i32_0 = arith.constant 0 : i32
    %c0_i32_1 = arith.constant 0 : i32
    return %c0_i32, %c0_i32_0 : i32, i32
  }
  func.func @transform_2(%arg0: i32) -> (i32, i32) {
    %c0_i32 = arith.constant 0 : i32
    %c0_i32_0 = arith.constant 0 : i32
    %c0_i32_1 = arith.constant 0 : i32
    return %c0_i32, %c0_i32_0 : i32, i32
  }
  func.func @transform_3(%arg0: i32) -> (i32, i32) {
    %c0_i32 = arith.constant 0 : i32
    %c0_i32_0 = arith.constant 0 : i32
    %c0_i32_1 = arith.constant 0 : i32
    return %c0_i32, %c0_i32_0 : i32, i32
  }
  func.func @transform_4(%arg0: i32) -> (i32, i32) {
    %c0_i32 = arith.constant 0 : i32
    %c0_i32_0 = arith.constant 0 : i32
    %c0_i32_1 = arith.constant 0 : i32
    return %c0_i32, %c0_i32_0 : i32, i32
  }
  func.func @transform_5(%arg0: i32) -> (i32, i32) {
    %c0_i32 = arith.constant 0 : i32
    %c0_i32_0 = arith.constant 0 : i32
    %c0_i32_1 = arith.constant 0 : i32
    return %c0_i32, %c0_i32_0 : i32, i32
  }
  func.func @transform_6(%arg0: i32) -> (i32, i32) {
    %c0_i32 = arith.constant 0 : i32
    %c0_i32_0 = arith.constant 0 : i32
    %c0_i32_1 = arith.constant 0 : i32
    return %c0_i32, %c0_i32_0 : i32, i32
  }
  func.func @transform_7(%arg0: i32) -> (i32, i32) {
    %c0_i32 = arith.constant 0 : i32
    %c0_i32_0 = arith.constant 0 : i32
    %c0_i32_1 = arith.constant 0 : i32
    return %c0_i32, %c0_i32_0 : i32, i32
  }
  func.func @transform_8(%arg0: i32) -> (i32, i32) {
    %c0_i32 = arith.constant 0 : i32
    %c0_i32_0 = arith.constant 0 : i32
    return %arg0, %c0_i32 : i32, i32
  }
}

</mosaic_0001>

<llo_original>
// kernel: tpu_custom_call.1
$region0: #{tpu_custom_call.1}
  #allocation0 [shape = 'u32[]', space=smem, size = 0x4, offset = 0x4, fixed_abs, tag = 'smem constant byte address 0x4 - core index']
  #allocation1 [shape = 'u32[144,128]{1,0:T(1,128)}', space=vmem, size = 0x12000, scoped, tag = 'internal scratch']
  #allocation2 [shape = 'f32[8,8,512]{2,1,0:T(8,128)}', space=vmem, size = 0x20000, scoped, tag = 'scratch operand']
  %s0 = inlined_call_operand.hbm [shape: f32[8,8,128], index: 0, kind: input, shape index: {}]
  %s1 = inlined_call_operand.hbm [shape: f32[128,512], index: 1, kind: input, shape index: {}]
  %s2 = inlined_call_operand.hbm [shape: f32[128,512], index: 2, kind: input, shape index: {}]
  %s3 = inlined_call_operand.vmem [shape: f32[1,512], index: 3, kind: input, shape index: {}]
  %s4 = inlined_call_operand.hbm [shape: f32[256,512], index: 4, kind: input, shape index: {}]
  %s5 = inlined_call_operand.vmem [shape: f32[1,512], index: 5, kind: input, shape index: {}]
  %s6 = inlined_call_operand.hbm [shape: f32[128,128], index: 6, kind: input, shape index: {}]
  %s7 = inlined_call_operand.vmem [shape: f32[1,128], index: 7, kind: input, shape index: {}]
  %s8 = inlined_call_operand.hbm [shape: f32[8,128], index: 8, kind: output, shape index: {}]
  %s9 = sld [smem:[#allocation0]]
  $region62: #{tpu_custom_call.1} parent=0
    _
  %s11 = ssub.s32 1, %s9
  %s12 = scalar_select 0, %s11, %s9
  $region1: #{tpu_custom_call.1} parent=0
    #allocation3 [shape = 'u8[32768]{0}', space=vmem, size = 0x8000, scoped, tag = 'input window, operand 0, single buffered']
    #allocation4 [shape = 's32[1]{0}', space=sflag, size = 0x4, scoped, tag = 'scoped memory for tpu_custom_call.1']
    #allocation5 [shape = 's32[1]{0}', space=sflag, size = 0x4, scoped, tag = 'scoped memory for tpu_custom_call.1']
    #allocation6 [shape = 'u8[262144]{0}', space=vmem, size = 0x40000, scoped, tag = 'input window, operand 1, single buffered']
    #allocation7 [shape = 's32[1]{0}', space=sflag, size = 0x4, scoped, tag = 'scoped memory for tpu_custom_call.1']
    #allocation8 [shape = 'u8[262144]{0}', space=vmem, size = 0x40000, scoped, tag = 'input window, operand 2, single buffered']
    #allocation9 [shape = 'u8[524288]{0}', space=vmem, size = 0x80000, scoped, tag = 'input window, operand 4, single buffered']
    #allocation10 [shape = 's32[1]{0}', space=sflag, size = 0x4, scoped, tag = 'scoped memory for tpu_custom_call.1']
    #allocation11 [shape = 'u8[65536]{0}', space=vmem, size = 0x10000, scoped, tag = 'input window, operand 6, single buffered']
    #allocation12 [shape = 'u8[4096]{0}', space=vmem, size = 0x1000, scoped, tag = 'output window, operand 0, single buffered']
    %13 = vsyncpa [#allocation4], 0
    %14 = vsyncpa [#allocation7], 0
    %15 = vsyncpa [#allocation10], 0
    %16 = vsyncpa [#allocation5], 0
    // Predicated region
    $region2: #{tpu_custom_call.1} parent=1 // pred_check
      _
    $region3: #{tpu_custom_call.1} parent=1 // pred_check_branch
      %18 = sbr.rel (0) target = $region5
    $region4: #{tpu_custom_call.1} parent=1 // pred_region
      %s20 = ssub.s32 1024, 1024
      %21 = vsyncadd [#allocation4], %s20
      %s22 = sshll.u32 [#allocation3], 4
      %s23 = int_to_ptr.vmem [resolvable:$true] %s22
      %28 = dma.hbm_to_vmem [thread:$0]  %s0, 1024, %s23, [#allocation4], 128, 128, 8
    $region5: #{tpu_custom_call.1} parent=1 // pred_fallthru
      _
    // Predicated region
    $region6: #{tpu_custom_call.1} parent=1 // pred_check
      _
    $region7: #{tpu_custom_call.1} parent=1 // pred_check_branch
      %30 = sbr.rel (0) target = $region9
    $region8: #{tpu_custom_call.1} parent=1 // pred_region
      %s32 = ssub.s32 8192, 8192
      %33 = vsyncadd [#allocation7], %s32
      %s34 = sshll.u32 [#allocation6], 4
      %s35 = int_to_ptr.vmem [resolvable:$true] %s34
      %40 = dma.hbm_to_vmem [thread:$0]  %s1, 8192, %s35, [#allocation7], 512, 512, 32
    $region9: #{tpu_custom_call.1} parent=1 // pred_fallthru
      _
    // Predicated region
    $region10: #{tpu_custom_call.1} parent=1 // pred_check
      _
    $region11: #{tpu_custom_call.1} parent=1 // pred_check_branch
      %42 = sbr.rel (0) target = $region13
    $region12: #{tpu_custom_call.1} parent=1 // pred_region
      %s44 = ssub.s32 8192, 8192
      %45 = vsyncadd [#allocation7], %s44
      %s46 = sshll.u32 [#allocation8], 4
      %s47 = int_to_ptr.vmem [resolvable:$true] %s46
      %52 = dma.hbm_to_vmem [thread:$0]  %s2, 8192, %s47, [#allocation7], 512, 512, 32
    $region13: #{tpu_custom_call.1} parent=1 // pred_fallthru
      _
    // Predicated region
    $region14: #{tpu_custom_call.1} parent=1 // pred_check
      _
    $region15: #{tpu_custom_call.1} parent=1 // pred_check_branch
      %54 = sbr.rel (0) target = $region17
    $region16: #{tpu_custom_call.1} parent=1 // pred_region
      _
    $region17: #{tpu_custom_call.1} parent=1 // pred_fallthru
      _
    // Predicated region
    $region18: #{tpu_custom_call.1} parent=1 // pred_check
      _
    $region19: #{tpu_custom_call.1} parent=1 // pred_check_branch
      %56 = sbr.rel (0) target = $region21
    $region20: #{tpu_custom_call.1} parent=1 // pred_region
      %s58 = ssub.s32 16384, 16384
      %59 = vsyncadd [#allocation10], %s58
      %s60 = sshll.u32 [#allocation9], 4
      %s61 = int_to_ptr.vmem [resolvable:$true] %s60
      %66 = dma.hbm_to_vmem [thread:$0]  %s4, 16384, %s61, [#allocation10], 512, 512, 32
    $region21: #{tpu_custom_call.1} parent=1 // pred_fallthru
      _
    // Predicated region
    $region22: #{tpu_custom_call.1} parent=1 // pred_check
      _
    $region23: #{tpu_custom_call.1} parent=1 // pred_check_branch
      %68 = sbr.rel (0) target = $region25
    $region24: #{tpu_custom_call.1} parent=1 // pred_region
      _
    $region25: #{tpu_custom_call.1} parent=1 // pred_fallthru
      _
    // Predicated region
    $region26: #{tpu_custom_call.1} parent=1 // pred_check
      _
    $region27: #{tpu_custom_call.1} parent=1 // pred_check_branch
      %70 = sbr.rel (0) target = $region29
    $region28: #{tpu_custom_call.1} parent=1 // pred_region
      %s72 = ssub.s32 2048, 2048
      %73 = vsyncadd [#allocation10], %s72
      %s74 = sshll.u32 [#allocation11], 4
      %s75 = int_to_ptr.vmem [resolvable:$true] %s74
      %80 = dma.hbm_to_vmem [thread:$0]  %s6, 2048, %s75, [#allocation10], 128, 128, 8
    $region29: #{tpu_custom_call.1} parent=1 // pred_fallthru
      _
    // Predicated region
    $region30: #{tpu_custom_call.1} parent=1 // pred_check
      _
    $region31: #{tpu_custom_call.1} parent=1 // pred_check_branch
      %82 = sbr.rel (0) target = $region33
    $region32: #{tpu_custom_call.1} parent=1 // pred_region
      _
    $region33: #{tpu_custom_call.1} parent=1 // pred_fallthru
      _
    // Predicated region
    $region34: #{tpu_custom_call.1} parent=1 // pred_check
      _
    $region35: #{tpu_custom_call.1} parent=1 // pred_check_branch
      %84 = sbr.rel (0) target = $region37
    $region36: #{tpu_custom_call.1} parent=1 // pred_region
      %85 = dma.done [#allocation4], 1024
    $region37: #{tpu_custom_call.1} parent=1 // pred_fallthru
      _
    // Predicated region
    $region38: #{tpu_custom_call.1} parent=1 // pred_check
      _
    $region39: #{tpu_custom_call.1} parent=1 // pred_check_branch
      %87 = sbr.rel (0) target = $region41
    $region40: #{tpu_custom_call.1} parent=1 // pred_region
      %88 = dma.done [#allocation7], 8192
    $region41: #{tpu_custom_call.1} parent=1 // pred_fallthru
      _
    // Predicated region
    $region42: #{tpu_custom_call.1} parent=1 // pred_check
      _
    $region43: #{tpu_custom_call.1} parent=1 // pred_check_branch
      %90 = sbr.rel (0) target = $region45
    $region44: #{tpu_custom_call.1} parent=1 // pred_region
      %91 = dma.done [#allocation7], 8192
    $region45: #{tpu_custom_call.1} parent=1 // pred_fallthru
      _
    // Predicated region
    $region46: #{tpu_custom_call.1} parent=1 // pred_check
      _
    $region47: #{tpu_custom_call.1} parent=1 // pred_check_branch
      %93 = sbr.rel (0) target = $region49
    $region48: #{tpu_custom_call.1} parent=1 // pred_region
      %94 = dma.done [#allocation10], 16384
    $region49: #{tpu_custom_call.1} parent=1 // pred_fallthru
      _
    // Predicated region
    $region50: #{tpu_custom_call.1} parent=1 // pred_check
      _
    $region51: #{tpu_custom_call.1} parent=1 // pred_check_branch
      %96 = sbr.rel (0) target = $region53
    $region52: #{tpu_custom_call.1} parent=1 // pred_region
      %97 = dma.done [#allocation10], 2048
    $region53: #{tpu_custom_call.1} parent=1 // pred_fallthru
      _
    %v98 = vld [vmem:[#allocation3] sm:$0xff]
    %v99 = vld [vmem:[#allocation3 + $0x8] sm:$0xff]
    %v100 = vld [vmem:[#allocation3 + $0x10] sm:$0xff]
    %v101 = vld [vmem:[#allocation3 + $0x18] sm:$0xff]
    %v102 = vld [vmem:[#allocation3 + $0x20] sm:$0xff]
    %v103 = vld [vmem:[#allocation3 + $0x28] sm:$0xff]
    %v104 = vld [vmem:[#allocation3 + $0x30] sm:$0xff]
    %v105 = vld [vmem:[#allocation3 + $0x38] sm:$0xff]
    %v106 = vmax.f32 %v98, 0.0
    %v107 = vmax.f32 %v99, 0.0
    %v108 = vmax.f32 %v100, 0.0
    %v109 = vmax.f32 %v101, 0.0
    %v110 = vmax.f32 %v102, 0.0
    %v111 = vmax.f32 %v103, 0.0
    %v112 = vmax.f32 %v104, 0.0
    %v113 = vmax.f32 %v105, 0.0
    %v114 = vld [vmem:[#allocation6] sm:$0xff]
    %v115 = vld [vmem:[#allocation6 + $0x8] sm:$0xff]
    %v116 = vld [vmem:[#allocation6 + $0x10] sm:$0xff]
    %v117 = vld [vmem:[#allocation6 + $0x18] sm:$0xff]
    %v118 = vld [vmem:[#allocation6 + $0x20] sm:$0xff]
    %v119 = vld [vmem:[#allocation6 + $0x28] sm:$0xff]
    %v120 = vld [vmem:[#allocation6 + $0x30] sm:$0xff]
    %v121 = vld [vmem:[#allocation6 + $0x38] sm:$0xff]
    %v122 = vld [vmem:[#allocation6 + $0x40] sm:$0xff]
    %v123 = vld [vmem:[#allocation6 + $0x48] sm:$0xff]
    %v124 = vld [vmem:[#allocation6 + $0x50] sm:$0xff]
    %v125 = vld [vmem:[#allocation6 + $0x58] sm:$0xff]
    %v126 = vld [vmem:[#allocation6 + $0x60] sm:$0xff]
    %v127 = vld [vmem:[#allocation6 + $0x68] sm:$0xff]
    %v128 = vld [vmem:[#allocation6 + $0x70] sm:$0xff]
    %v129 = vld [vmem:[#allocation6 + $0x78] sm:$0xff]
    %v130 = vld [vmem:[#allocation6 + $0x80] sm:$0xff]
    %v131 = vld [vmem:[#allocation6 + $0x88] sm:$0xff]
    %v132 = vld [vmem:[#allocation6 + $0x90] sm:$0xff]
    %v133 = vld [vmem:[#allocation6 + $0x98] sm:$0xff]
    %v134 = vld [vmem:[#allocation6 + $0xa0] sm:$0xff]
    %v135 = vld [vmem:[#allocation6 + $0xa8] sm:$0xff]
    %v136 = vld [vmem:[#allocation6 + $0xb0] sm:$0xff]
    %v137 = vld [vmem:[#allocation6 + $0xb8] sm:$0xff]
    %v138 = vld [vmem:[#allocation6 + $0xc0] sm:$0xff]
    %v139 = vld [vmem:[#allocation6 + $0xc8] sm:$0xff]
    %v140 = vld [vmem:[#allocation6 + $0xd0] sm:$0xff]
    %v141 = vld [vmem:[#allocation6 + $0xd8] sm:$0xff]
    %v142 = vld [vmem:[#allocation6 + $0xe0] sm:$0xff]
    %v143 = vld [vmem:[#allocation6 + $0xe8] sm:$0xff]
    %v144 = vld [vmem:[#allocation6 + $0xf0] sm:$0xff]
    %v145 = vld [vmem:[#allocation6 + $0xf8] sm:$0xff]
    %v146 = vld [vmem:[#allocation6 + $0x100] sm:$0xff]
    %v147 = vld [vmem:[#allocation6 + $0x108] sm:$0xff]
    %v148 = vld [vmem:[#allocation6 + $0x110] sm:$0xff]
    %v149 = vld [vmem:[#allocation6 + $0x118] sm:$0xff]
    %v150 = vld [vmem:[#allocation6 + $0x120] sm:$0xff]
    %v151 = vld [vmem:[#allocation6 + $0x128] sm:$0xff]
    %v152 = vld [vmem:[#allocation6 + $0x130] sm:$0xff]
    %v153 = vld [vmem:[#allocation6 + $0x138] sm:$0xff]
    %v154 = vld [vmem:[#allocation6 + $0x140] sm:$0xff]
    %v155 = vld [vmem:[#allocation6 + $0x148] sm:$0xff]
    %v156 = vld [vmem:[#allocation6 + $0x150] sm:$0xff]
    %v157 = vld [vmem:[#allocation6 + $0x158] sm:$0xff]
    %v158 = vld [vmem:[#allocation6 + $0x160] sm:$0xff]
    %v159 = vld [vmem:[#allocation6 + $0x168] sm:$0xff]
    %v160 = vld [vmem:[#allocation6 + $0x170] sm:$0xff]
    %v161 = vld [vmem:[#allocation6 + $0x178] sm:$0xff]
    %v162 = vld [vmem:[#allocation6 + $0x180] sm:$0xff]
    %v163 = vld [vmem:[#allocation6 + $0x188] sm:$0xff]
    %v164 = vld [vmem:[#allocation6 + $0x190] sm:$0xff]
    %v165 = vld [vmem:[#allocation6 + $0x198] sm:$0xff]
    %v166 = vld [vmem:[#allocation6 + $0x1a0] sm:$0xff]
    %v167 = vld [vmem:[#allocation6 + $0x1a8] sm:$0xff]
    %v168 = vld [vmem:[#allocation6 + $0x1b0] sm:$0xff]
    %v169 = vld [vmem:[#allocation6 + $0x1b8] sm:$0xff]
    %v170 = vld [vmem:[#allocation6 + $0x1c0] sm:$0xff]
    %v171 = vld [vmem:[#allocation6 + $0x1c8] sm:$0xff]
    %v172 = vld [vmem:[#allocation6 + $0x1d0] sm:$0xff]
    %v173 = vld [vmem:[#allocation6 + $0x1d8] sm:$0xff]
    %v174 = vld [vmem:[#allocation6 + $0x1e0] sm:$0xff]
    %v175 = vld [vmem:[#allocation6 + $0x1e8] sm:$0xff]
    %v176 = vld [vmem:[#allocation6 + $0x1f0] sm:$0xff]
    %v177 = vld [vmem:[#allocation6 + $0x1f8] sm:$0xff]
    %v178 = vld [vmem:[%s3] sm:$0xf]
    %v180 = vlaneseq
    %v181 = vshrl.u32 %v180, 7
    %v182 = vsub.s32 0, %v181
    %v183 = vrot.slane %v178, %v182
    %v184 = vlaneseq
    %v185 = vshrl.u32 %v184, 7
    %v186 = vsub.s32 1, %v185
    %v187 = vrot.slane %v178, %v186
    %v188 = vlaneseq
    %v189 = vshrl.u32 %v188, 7
    %v190 = vsub.s32 2, %v189
    %v191 = vrot.slane %v178, %v190
    %v192 = vlaneseq
    %v193 = vshrl.u32 %v192, 7
    %v194 = vsub.s32 3, %v193
    %v195 = vrot.slane %v178, %v194
    %200 = vmatprep.subr.mxu0 %v115
    %201 = vmatpush1.msra.mxu0 %v114
    %202 = vmatprep.subr.mxu0 %v119
    %203 = vmatpush1.msra.mxu0 %v118
    %204 = vmatprep.subr.mxu0 %v123
    %205 = vmatpush1.msra.mxu0 %v122
    %206 = vmatprep.subr.mxu0 %v127
    %207 = vmatpush1.msra.mxu0 %v126
    %208 = vmatprep.subr.mxu0 %v131
    %209 = vmatpush1.msra.mxu0 %v130
    %210 = vmatprep.subr.mxu0 %v135
    %211 = vmatpush1.msra.mxu0 %v134
    %212 = vmatprep.subr.mxu0 %v139
    %213 = vmatpush1.msra.mxu0 %v138
    %214 = vmatprep.subr.mxu0 %v143
    %215 = vmatpush1.msra.mxu0 %v142
    %216 = vmatprep.subr.mxu0 %v147
    %217 = vmatpush1.msra.mxu0 %v146
    %218 = vmatprep.subr.mxu0 %v151
    %219 = vmatpush1.msra.mxu0 %v150
    %220 = vmatprep.subr.mxu0 %v155
    %221 = vmatpush1.msra.mxu0 %v154
    %222 = vmatprep.subr.mxu0 %v159
    %223 = vmatpush1.msra.mxu0 %v158
    %224 = vmatprep.subr.mxu0 %v163
    %225 = vmatpush1.msra.mxu0 %v162
    %226 = vmatprep.subr.mxu0 %v167
    %227 = vmatpush1.msra.mxu0 %v166
    %228 = vmatprep.subr.mxu0 %v171
    %229 = vmatpush1.msra.mxu0 %v170
    %230 = vmatprep.subr.mxu0 %v175
    %231 = vmatpush1.msra.mxu0 %v174
    %232 = vmatprep.subr.mxu0 0.0
    %233 = vmatpush1.msra.mxu0 0.0
    %234 = vmatprep.subr.mxu0 0.0
    %235 = vmatpush1.msra.mxu0 0.0
    %236 = vmatprep.subr.mxu0 0.0
    %237 = vmatpush1.msra.mxu0 0.0
    %238 = vmatprep.subr.mxu0 0.0
    %239 = vmatpush1.msra.mxu0 0.0
    %240 = vmatprep.subr.mxu0 0.0
    %241 = vmatpush1.msra.mxu0 0.0
    %242 = vmatprep.subr.mxu0 0.0
    %243 = vmatpush1.msra.mxu0 0.0
    %244 = vmatprep.subr.mxu0 0.0
    %245 = vmatpush1.msra.mxu0 0.0
    %246 = vmatprep.subr.mxu0 0.0
    %247 = vmatpush1.msra.mxu0 0.0
    %248 = vmatprep.subr.mxu0 0.0
    %249 = vmatpush1.msra.mxu0 0.0
    %250 = vmatprep.subr.mxu0 0.0
    %251 = vmatpush1.msra.mxu0 0.0
    %252 = vmatprep.subr.mxu0 0.0
    %253 = vmatpush1.msra.mxu0 0.0
    %254 = vmatprep.subr.mxu0 0.0
    %255 = vmatpush1.msra.mxu0 0.0
    %256 = vmatprep.subr.mxu0 0.0
    %257 = vmatpush1.msra.mxu0 0.0
    %258 = vmatprep.subr.mxu0 0.0
    %259 = vmatpush1.msra.mxu0 0.0
    %260 = vmatprep.subr.mxu0 0.0
    %261 = vmatpush1.msra.mxu0 0.0
    %262 = vmatprep.subr.mxu0 0.0
    %263 = vmatpush1.msra.mxu0 0.0
    %264 = vmatprep.mubr.f32.mxu0 0.0
    %265 = vmatmul.mubr.f32.gmra.mrb[0].mxu0 %v106
    %v266 = vpop.f32.mrb[0].mxu0
    %v267 = vadd.f32 %v183, %v266
    %v268 = vpop.f32.mrb[0].mxu0
    %v269 = vadd.f32 %v187, %v268
    %270 = vmatprep.mubr.f32.mxu0 0.0
    %271 = vmatmul.mubr.f32.gmra.mrb[0].mxu0 %v107
    %v272 = vpop.f32.mrb[0].mxu0
    %v273 = vadd.f32 %v183, %v272
    %v274 = vpop.f32.mrb[0].mxu0
    %v275 = vadd.f32 %v187, %v274
    %276 = vmatprep.mubr.f32.mxu0 0.0
    %277 = vmatmul.mubr.f32.gmra.mrb[0].mxu0 %v108
    %v278 = vpop.f32.mrb[0].mxu0
    %v279 = vadd.f32 %v183, %v278
    %v280 = vpop.f32.mrb[0].mxu0
    %v281 = vadd.f32 %v187, %v280
    %282 = vmatprep.mubr.f32.mxu0 0.0
    %283 = vmatmul.mubr.f32.gmra.mrb[0].mxu0 %v109
    %v284 = vpop.f32.mrb[0].mxu0
    %v285 = vadd.f32 %v183, %v284
    %v286 = vpop.f32.mrb[0].mxu0
    %v287 = vadd.f32 %v187, %v286
    %288 = vmatprep.mubr.f32.mxu0 0.0
    %289 = vmatmul.mubr.f32.gmra.mrb[0].mxu0 %v110
    %v290 = vpop.f32.mrb[0].mxu0
    %v291 = vadd.f32 %v183, %v290
    %v292 = vpop.f32.mrb[0].mxu0
    %v293 = vadd.f32 %v187, %v292
    %294 = vmatprep.mubr.f32.mxu0 0.0
    %295 = vmatmul.mubr.f32.gmra.mrb[0].mxu0 %v111
    %v296 = vpop.f32.mrb[0].mxu0
    %v297 = vadd.f32 %v183, %v296
    %v298 = vpop.f32.mrb[0].mxu0
    %v299 = vadd.f32 %v187, %v298
    %300 = vmatprep.mubr.f32.mxu0 0.0
    %301 = vmatmul.mubr.f32.gmra.mrb[0].mxu0 %v112
    %v302 = vpop.f32.mrb[0].mxu0
    %v303 = vadd.f32 %v183, %v302
    %v304 = vpop.f32.mrb[0].mxu0
    %v305 = vadd.f32 %v187, %v304
    %306 = vmatprep.mubr.f32.mxu0 0.0
    %307 = vmatmul.mubr.f32.gmra.mrb[0].mxu0 %v113
    %v308 = vpop.f32.mrb[0].mxu0
    %v309 = vadd.f32 %v183, %v308
    %v310 = vpop.f32.mrb[0].mxu0
    %v311 = vadd.f32 %v187, %v310
    %312 = vdwg.mxu0
    %313 = vmatprep.subr.mxu0 %v117
    %314 = vmatpush1.msra.mxu0 %v116
    %315 = vmatprep.subr.mxu0 %v121
    %316 = vmatpush1.msra.mxu0 %v120
    %317 = vmatprep.subr.mxu0 %v125
    %318 = vmatpush1.msra.mxu0 %v124
    %319 = vmatprep.subr.mxu0 %v129
    %320 = vmatpush1.msra.mxu0 %v128
    %321 = vmatprep.subr.mxu0 %v133
    %322 = vmatpush1.msra.mxu0 %v132
    %323 = vmatprep.subr.mxu0 %v137
    %324 = vmatpush1.msra.mxu0 %v136
    %325 = vmatprep.subr.mxu0 %v141
    %326 = vmatpush1.msra.mxu0 %v140
    %327 = vmatprep.subr.mxu0 %v145
    %328 = vmatpush1.msra.mxu0 %v144
    %329 = vmatprep.subr.mxu0 %v149
    %330 = vmatpush1.msra.mxu0 %v148
    %331 = vmatprep.subr.mxu0 %v153
    %332 = vmatpush1.msra.mxu0 %v152
    %333 = vmatprep.subr.mxu0 %v157
    %334 = vmatpush1.msra.mxu0 %v156
    %335 = vmatprep.subr.mxu0 %v161
    %336 = vmatpush1.msra.mxu0 %v160
    %337 = vmatprep.subr.mxu0 %v165
    %338 = vmatpush1.msra.mxu0 %v164
    %339 = vmatprep.subr.mxu0 %v169
    %340 = vmatpush1.msra.mxu0 %v168
    %341 = vmatprep.subr.mxu0 %v173
    %342 = vmatpush1.msra.mxu0 %v172
    %343 = vmatprep.subr.mxu0 %v177
    %344 = vmatpush1.msra.mxu0 %v176
    %345 = vmatprep.subr.mxu0 0.0
    %346 = vmatpush1.msra.mxu0 0.0
    %347 = vmatprep.subr.mxu0 0.0
    %348 = vmatpush1.msra.mxu0 0.0
    %349 = vmatprep.subr.mxu0 0.0
    %350 = vmatpush1.msra.mxu0 0.0
    %351 = vmatprep.subr.mxu0 0.0
    %352 = vmatpush1.msra.mxu0 0.0
    %353 = vmatprep.subr.mxu0 0.0
    %354 = vmatpush1.msra.mxu0 0.0
    %355 = vmatprep.subr.mxu0 0.0
    %356 = vmatpush1.msra.mxu0 0.0
    %357 = vmatprep.subr.mxu0 0.0
    %358 = vmatpush1.msra.mxu0 0.0
    %359 = vmatprep.subr.mxu0 0.0
    %360 = vmatpush1.msra.mxu0 0.0
    %361 = vmatprep.subr.mxu0 0.0
    %362 = vmatpush1.msra.mxu0 0.0
    %363 = vmatprep.subr.mxu0 0.0
    %364 = vmatpush1.msra.mxu0 0.0
    %365 = vmatprep.subr.mxu0 0.0
    %366 = vmatpush1.msra.mxu0 0.0
    %367 = vmatprep.subr.mxu0 0.0
    %368 = vmatpush1.msra.mxu0 0.0
    %369 = vmatprep.subr.mxu0 0.0
    %370 = vmatpush1.msra.mxu0 0.0
    %371 = vmatprep.subr.mxu0 0.0
    %372 = vmatpush1.msra.mxu0 0.0
    %373 = vmatprep.subr.mxu0 0.0
    %374 = vmatpush1.msra.mxu0 0.0
    %375 = vmatprep.subr.mxu0 0.0
    %376 = vmatpush1.msra.mxu0 0.0
    %377 = vmatprep.mubr.f32.mxu0 0.0
    %378 = vmatmul.mubr.f32.gmra.mrb[0].mxu0 %v106
    %v379 = vpop.f32.mrb[0].mxu0
    %v380 = vadd.f32 %v191, %v379
    %v381 = vpop.f32.mrb[0].mxu0
    %v382 = vadd.f32 %v195, %v381
    %383 = vmatprep.mubr.f32.mxu0 0.0
    %384 = vmatmul.mubr.f32.gmra.mrb[0].mxu0 %v107
    %v385 = vpop.f32.mrb[0].mxu0
    %v386 = vadd.f32 %v191, %v385
    %v387 = vpop.f32.mrb[0].mxu0
    %v388 = vadd.f32 %v195, %v387
    %389 = vmatprep.mubr.f32.mxu0 0.0
    %390 = vmatmul.mubr.f32.gmra.mrb[0].mxu0 %v108
    %v391 = vpop.f32.mrb[0].mxu0
    %v392 = vadd.f32 %v191, %v391
    %v393 = vpop.f32.mrb[0].mxu0
    %v394 = vadd.f32 %v195, %v393
    %395 = vmatprep.mubr.f32.mxu0 0.0
    %396 = vmatmul.mubr.f32.gmra.mrb[0].mxu0 %v109
    %v397 = vpop.f32.mrb[0].mxu0
    %v398 = vadd.f32 %v191, %v397
    %v399 = vpop.f32.mrb[0].mxu0
    %v400 = vadd.f32 %v195, %v399
    %401 = vmatprep.mubr.f32.mxu0 0.0
    %402 = vmatmul.mubr.f32.gmra.mrb[0].mxu0 %v110
    %v403 = vpop.f32.mrb[0].mxu0
    %v404 = vadd.f32 %v191, %v403
    %v405 = vpop.f32.mrb[0].mxu0
    %v406 = vadd.f32 %v195, %v405
    %407 = vmatprep.mubr.f32.mxu0 0.0
    %408 = vmatmul.mubr.f32.gmra.mrb[0].mxu0 %v111
    %v409 = vpop.f32.mrb[0].mxu0
    %v410 = vadd.f32 %v191, %v409
    %v411 = vpop.f32.mrb[0].mxu0
    %v412 = vadd.f32 %v195, %v411
    %413 = vmatprep.mubr.f32.mxu0 0.0
    %414 = vmatmul.mubr.f32.gmra.mrb[0].mxu0 %v112
    %v415 = vpop.f32.mrb[0].mxu0
    %v416 = vadd.f32 %v191, %v415
    %v417 = vpop.f32.mrb[0].mxu0
    %v418 = vadd.f32 %v195, %v417
    %419 = vmatprep.mubr.f32.mxu0 0.0
    %420 = vmatmul.mubr.f32.gmra.mrb[0].mxu0 %v113
    %v421 = vpop.f32.mrb[0].mxu0
    %v422 = vadd.f32 %v191, %v421
    %v423 = vpop.f32.mrb[0].mxu0
    %v424 = vadd.f32 %v195, %v423
    %425 = vdwg.mxu0
    %426 = vst [vmem:[#allocation2] sm:$0xff] %v267
    %427 = vst [vmem:[#allocation2 + $0x8] sm:$0xff] %v269
    %428 = vst [vmem:[#allocation2 + $0x10] sm:$0xff] %v380
    %429 = vst [vmem:[#allocation2 + $0x18] sm:$0xff] %v382
    %430 = vst [vmem:[#allocation2 + $0x20] sm:$0xff] %v273
    %431 = vst [vmem:[#allocation2 + $0x28] sm:$0xff] %v275
    %432 = vst [vmem:[#allocation2 + $0x30] sm:$0xff] %v386
    %433 = vst [vmem:[#allocation2 + $0x38] sm:$0xff] %v388
    %434 = vst [vmem:[#allocation2 + $0x40] sm:$0xff] %v279
    %435 = vst [vmem:[#allocation2 + $0x48] sm:$0xff] %v281
    %436 = vst [vmem:[#allocation2 + $0x50] sm:$0xff] %v392
    %437 = vst [vmem:[#allocation2 + $0x58] sm:$0xff] %v394
    %438 = vst [vmem:[#allocation2 + $0x60] sm:$0xff] %v285
    %439 = vst [vmem:[#allocation2 + $0x68] sm:$0xff] %v287
    %440 = vst [vmem:[#allocation2 + $0x70] sm:$0xff] %v398
    %441 = vst [vmem:[#allocation2 + $0x78] sm:$0xff] %v400
    %442 = vst [vmem:[#allocation2 + $0x80] sm:$0xff] %v291
    %443 = vst [vmem:[#allocation2 + $0x88] sm:$0xff] %v293
    %444 = vst [vmem:[#allocation2 + $0x90] sm:$0xff] %v404
    %445 = vst [vmem:[#allocation2 + $0x98] sm:$0xff] %v406
    %446 = vst [vmem:[#allocation2 + $0xa0] sm:$0xff] %v297
    %447 = vst [vmem:[#allocation2 + $0xa8] sm:$0xff] %v299
    %448 = vst [vmem:[#allocation2 + $0xb0] sm:$0xff] %v410
    %449 = vst [vmem:[#allocation2 + $0xb8] sm:$0xff] %v412
    %450 = vst [vmem:[#allocation2 + $0xc0] sm:$0xff] %v303
    %451 = vst [vmem:[#allocation2 + $0xc8] sm:$0xff] %v305
    %452 = vst [vmem:[#allocation2 + $0xd0] sm:$0xff] %v416
    %453 = vst [vmem:[#allocation2 + $0xd8] sm:$0xff] %v418
    %454 = vst [vmem:[#allocation2 + $0xe0] sm:$0xff] %v309
    %455 = vst [vmem:[#allocation2 + $0xe8] sm:$0xff] %v311
    %456 = vst [vmem:[#allocation2 + $0xf0] sm:$0xff] %v422
    %457 = vst [vmem:[#allocation2 + $0xf8] sm:$0xff] %v424
    %v458 = vld [vmem:[#allocation8] sm:$0xff]
    %v459 = vld [vmem:[#allocation8 + $0x8] sm:$0xff]
    %v460 = vld [vmem:[#allocation8 + $0x10] sm:$0xff]
    %v461 = vld [vmem:[#allocation8 + $0x18] sm:$0xff]
    %v462 = vld [vmem:[#allocation8 + $0x20] sm:$0xff]
    %v463 = vld [vmem:[#allocation8 + $0x28] sm:$0xff]
    %v464 = vld [vmem:[#allocation8 + $0x30] sm:$0xff]
    %v465 = vld [vmem:[#allocation8 + $0x38] sm:$0xff]
    %v466 = vld [vmem:[#allocation8 + $0x40] sm:$0xff]
    %v467 = vld [vmem:[#allocation8 + $0x48] sm:$0xff]
    %v468 = vld [vmem:[#allocation8 + $0x50] sm:$0xff]
    %v469 = vld [vmem:[#allocation8 + $0x58] sm:$0xff]
    %v470 = vld [vmem:[#allocation8 + $0x60] sm:$0xff]
    %v471 = vld [vmem:[#allocation8 + $0x68] sm:$0xff]
    %v472 = vld [vmem:[#allocation8 + $0x70] sm:$0xff]
    %v473 = vld [vmem:[#allocation8 + $0x78] sm:$0xff]
    %v474 = vld [vmem:[#allocation8 + $0x80] sm:$0xff]
    %v475 = vld [vmem:[#allocation8 + $0x88] sm:$0xff]
    %v476 = vld [vmem:[#allocation8 + $0x90] sm:$0xff]
    %v477 = vld [vmem:[#allocation8 + $0x98] sm:$0xff]
    %v478 = vld [vmem:[#allocation8 + $0xa0] sm:$0xff]
    %v479 = vld [vmem:[#allocation8 + $0xa8] sm:$0xff]
    %v480 = vld [vmem:[#allocation8 + $0xb0] sm:$0xff]
    %v481 = vld [vmem:[#allocation8 + $0xb8] sm:$0xff]
    %v482 = vld [vmem:[#allocation8 + $0xc0] sm:$0xff]
    %v483 = vld [vmem:[#allocation8 + $0xc8] sm:$0xff]
    %v484 = vld [vmem:[#allocation8 + $0xd0] sm:$0xff]
    %v485 = vld [vmem:[#allocation8 + $0xd8] sm:$0xff]
    %v486 = vld [vmem:[#allocation8 + $0xe0] sm:$0xff]
    %v487 = vld [vmem:[#allocation8 + $0xe8] sm:$0xff]
    %v488 = vld [vmem:[#allocation8 + $0xf0] sm:$0xff]
    %v489 = vld [vmem:[#allocation8 + $0xf8] sm:$0xff]
    %v490 = vld [vmem:[#allocation8 + $0x100] sm:$0xff]
    %v491 = vld [vmem:[#allocation8 + $0x108] sm:$0xff]
    %v492 = vld [vmem:[#allocation8 + $0x110] sm:$0xff]
    %v493 = vld [vmem:[#allocation8 + $0x118] sm:$0xff]
    %v494 = vld [vmem:[#allocation8 + $0x120] sm:$0xff]
    %v495 = vld [vmem:[#allocation8 + $0x128] sm:$0xff]
    %v496 = vld [vmem:[#allocation8 + $0x130] sm:$0xff]
    %v497 = vld [vmem:[#allocation8 + $0x138] sm:$0xff]
    %v498 = vld [vmem:[#allocation8 + $0x140] sm:$0xff]
    %v499 = vld [vmem:[#allocation8 + $0x148] sm:$0xff]
    %v500 = vld [vmem:[#allocation8 + $0x150] sm:$0xff]
    %v501 = vld [vmem:[#allocation8 + $0x158] sm:$0xff]
    %v502 = vld [vmem:[#allocation8 + $0x160] sm:$0xff]
    %v503 = vld [vmem:[#allocation8 + $0x168] sm:$0xff]
    %v504 = vld [vmem:[#allocation8 + $0x170] sm:$0xff]
    %v505 = vld [vmem:[#allocation8 + $0x178] sm:$0xff]
    %v506 = vld [vmem:[#allocation8 + $0x180] sm:$0xff]
    %v507 = vld [vmem:[#allocation8 + $0x188] sm:$0xff]
    %v508 = vld [vmem:[#allocation8 + $0x190] sm:$0xff]
    %v509 = vld [vmem:[#allocation8 + $0x198] sm:$0xff]
    %v510 = vld [vmem:[#allocation8 + $0x1a0] sm:$0xff]
    %v511 = vld [vmem:[#allocation8 + $0x1a8] sm:$0xff]
    %v512 = vld [vmem:[#allocation8 + $0x1b0] sm:$0xff]
    %v513 = vld [vmem:[#allocation8 + $0x1b8] sm:$0xff]
    %v514 = vld [vmem:[#allocation8 + $0x1c0] sm:$0xff]
    %v515 = vld [vmem:[#allocation8 + $0x1c8] sm:$0xff]
    %v516 = vld [vmem:[#allocation8 + $0x1d0] sm:$0xff]
    %v517 = vld [vmem:[#allocation8 + $0x1d8] sm:$0xff]
    %v518 = vld [vmem:[#allocation8 + $0x1e0] sm:$0xff]
    %v519 = vld [vmem:[#allocation8 + $0x1e8] sm:$0xff]
    %v520 = vld [vmem:[#allocation8 + $0x1f0] sm:$0xff]
    %v521 = vld [vmem:[#allocation8 + $0x1f8] sm:$0xff]
    %v522 = vld [vmem:[#allocation9] sm:$0xff]
    %v523 = vld [vmem:[#allocation9 + $0x8] sm:$0xff]
    %v524 = vld [vmem:[#allocation9 + $0x10] sm:$0xff]
    %v525 = vld [vmem:[#allocation9 + $0x18] sm:$0xff]
    %v526 = vld [vmem:[#allocation9 + $0x20] sm:$0xff]
    %v527 = vld [vmem:[#allocation9 + $0x28] sm:$0xff]
    %v528 = vld [vmem:[#allocation9 + $0x30] sm:$0xff]
    %v529 = vld [vmem:[#allocation9 + $0x38] sm:$0xff]
    %v530 = vld [vmem:[#allocation9 + $0x40] sm:$0xff]
    %v531 = vld [vmem:[#allocation9 + $0x48] sm:$0xff]
    %v532 = vld [vmem:[#allocation9 + $0x50] sm:$0xff]
    %v533 = vld [vmem:[#allocation9 + $0x58] sm:$0xff]
    %v534 = vld [vmem:[#allocation9 + $0x60] sm:$0xff]
    %v535 = vld [vmem:[#allocation9 + $0x68] sm:$0xff]
    %v536 = vld [vmem:[#allocation9 + $0x70] sm:$0xff]
    %v537 = vld [vmem:[#allocation9 + $0x78] sm:$0xff]
    %v538 = vld [vmem:[#allocation9 + $0x80] sm:$0xff]
    %v539 = vld [vmem:[#allocation9 + $0x88] sm:$0xff]
    %v540 = vld [vmem:[#allocation9 + $0x90] sm:$0xff]
    %v541 = vld [vmem:[#allocation9 + $0x98] sm:$0xff]
    %v542 = vld [vmem:[#allocation9 + $0xa0] sm:$0xff]
    %v543 = vld [vmem:[#allocation9 + $0xa8] sm:$0xff]
    %v544 = vld [vmem:[#allocation9 + $0xb0] sm:$0xff]
    %v545 = vld [vmem:[#allocation9 + $0xb8] sm:$0xff]
    %v546 = vld [vmem:[#allocation9 + $0xc0] sm:$0xff]
    %v547 = vld [vmem:[#allocation9 + $0xc8] sm:$0xff]
    %v548 = vld [vmem:[#allocation9 + $0xd0] sm:$0xff]
    %v549 = vld [vmem:[#allocation9 + $0xd8] sm:$0xff]
    %v550 = vld [vmem:[#allocation9 + $0xe0] sm:$0xff]
    %v551 = vld [vmem:[#allocation9 + $0xe8] sm:$0xff]
    %v552 = vld [vmem:[#allocation9 + $0xf0] sm:$0xff]
    %v553 = vld [vmem:[#allocation9 + $0xf8] sm:$0xff]
    %v554 = vld [vmem:[#allocation9 + $0x100] sm:$0xff]
    %v555 = vld [vmem:[#allocation9 + $0x108] sm:$0xff]
    %v556 = vld [vmem:[#allocation9 + $0x110] sm:$0xff]
    %v557 = vld [vmem:[#allocation9 + $0x118] sm:$0xff]
    %v558 = vld [vmem:[#allocation9 + $0x120] sm:$0xff]
    %v559 = vld [vmem:[#allocation9 + $0x128] sm:$0xff]
    %v560 = vld [vmem:[#allocation9 + $0x130] sm:$0xff]
    %v561 = vld [vmem:[#allocation9 + $0x138] sm:$0xff]
    %v562 = vld [vmem:[#allocation9 + $0x140] sm:$0xff]
    %v563 = vld [vmem:[#allocation9 + $0x148] sm:$0xff]
    %v564 = vld [vmem:[#allocation9 + $0x150] sm:$0xff]
    %v565 = vld [vmem:[#allocation9 + $0x158] sm:$0xff]
    %v566 = vld [vmem:[#allocation9 + $0x160] sm:$0xff]
    %v567 = vld [vmem:[#allocation9 + $0x168] sm:$0xff]
    %v568 = vld [vmem:[#allocation9 + $0x170] sm:$0xff]
    %v569 = vld [vmem:[#allocation9 + $0x178] sm:$0xff]
    %v570 = vld [vmem:[#allocation9 + $0x180] sm:$0xff]
    %v571 = vld [vmem:[#allocation9 + $0x188] sm:$0xff]
    %v572 = vld [vmem:[#allocation9 + $0x190] sm:$0xff]
    %v573 = vld [vmem:[#allocation9 + $0x198] sm:$0xff]
    %v574 = vld [vmem:[#allocation9 + $0x1a0] sm:$0xff]
    %v575 = vld [vmem:[#allocation9 + $0x1a8] sm:$0xff]
    %v576 = vld [vmem:[#allocation9 + $0x1b0] sm:$0xff]
    %v577 = vld [vmem:[#allocation9 + $0x1b8] sm:$0xff]
    %v578 = vld [vmem:[#allocation9 + $0x1c0] sm:$0xff]
    %v579 = vld [vmem:[#allocation9 + $0x1c8] sm:$0xff]
    %v580 = vld [vmem:[#allocation9 + $0x1d0] sm:$0xff]
    %v581 = vld [vmem:[#allocation9 + $0x1d8] sm:$0xff]
    %v582 = vld [vmem:[#allocation9 + $0x1e0] sm:$0xff]
    %v583 = vld [vmem:[#allocation9 + $0x1e8] sm:$0xff]
    %v584 = vld [vmem:[#allocation9 + $0x1f0] sm:$0xff]
    %v585 = vld [vmem:[#allocation9 + $0x1f8] sm:$0xff]
    %v586 = vld [vmem:[#allocation9 + $0x200] sm:$0xff]
    %v587 = vld [vmem:[#allocation9 + $0x208] sm:$0xff]
    %v588 = vld [vmem:[#allocation9 + $0x210] sm:$0xff]
    %v589 = vld [vmem:[#allocation9 + $0x218] sm:$0xff]
    %v590 = vld [vmem:[#allocation9 + $0x220] sm:$0xff]
    %v591 = vld [vmem:[#allocation9 + $0x228] sm:$0xff]
    %v592 = vld [vmem:[#allocation9 + $0x230] sm:$0xff]
    %v593 = vld [vmem:[#allocation9 + $0x238] sm:$0xff]
    %v594 = vld [vmem:[#allocation9 + $0x240] sm:$0xff]
    %v595 = vld [vmem:[#allocation9 + $0x248] sm:$0xff]
    %v596 = vld [vmem:[#allocation9 + $0x250] sm:$0xff]
    %v597 = vld [vmem:[#allocation9 + $0x258] sm:$0xff]
    %v598 = vld [vmem:[#allocation9 + $0x260] sm:$0xff]
    %v599 = vld [vmem:[#allocation9 + $0x268] sm:$0xff]
    %v600 = vld [vmem:[#allocation9 + $0x270] sm:$0xff]
    %v601 = vld [vmem:[#allocation9 + $0x278] sm:$0xff]
    %v602 = vld [vmem:[#allocation9 + $0x280] sm:$0xff]
    %v603 = vld [vmem:[#allocation9 + $0x288] sm:$0xff]
    %v604 = vld [vmem:[#allocation9 + $0x290] sm:$0xff]
    %v605 = vld [vmem:[#allocation9 + $0x298] sm:$0xff]
    %v606 = vld [vmem:[#allocation9 + $0x2a0] sm:$0xff]
    %v607 = vld [vmem:[#allocation9 + $0x2a8] sm:$0xff]
    %v608 = vld [vmem:[#allocation9 + $0x2b0] sm:$0xff]
    %v609 = vld [vmem:[#allocation9 + $0x2b8] sm:$0xff]
    %v610 = vld [vmem:[#allocation9 + $0x2c0] sm:$0xff]
    %v611 = vld [vmem:[#allocation9 + $0x2c8] sm:$0xff]
    %v612 = vld [vmem:[#allocation9 + $0x2d0] sm:$0xff]
    %v613 = vld [vmem:[#allocation9 + $0x2d8] sm:$0xff]
    %v614 = vld [vmem:[#allocation9 + $0x2e0] sm:$0xff]
    %v615 = vld [vmem:[#allocation9 + $0x2e8] sm:$0xff]
    %v616 = vld [vmem:[#allocation9 + $0x2f0] sm:$0xff]
    %v617 = vld [vmem:[#allocation9 + $0x2f8] sm:$0xff]
    %v618 = vld [vmem:[#allocation9 + $0x300] sm:$0xff]
    %v619 = vld [vmem:[#allocation9 + $0x308] sm:$0xff]
    %v620 = vld [vmem:[#allocation9 + $0x310] sm:$0xff]
    %v621 = vld [vmem:[#allocation9 + $0x318] sm:$0xff]
    %v622 = vld [vmem:[#allocation9 + $0x320] sm:$0xff]
    %v623 = vld [vmem:[#allocation9 + $0x328] sm:$0xff]
    %v624 = vld [vmem:[#allocation9 + $0x330] sm:$0xff]
    %v625 = vld [vmem:[#allocation9 + $0x338] sm:$0xff]
    %v626 = vld [vmem:[#allocation9 + $0x340] sm:$0xff]
    %v627 = vld [vmem:[#allocation9 + $0x348] sm:$0xff]
    %v628 = vld [vmem:[#allocation9 + $0x350] sm:$0xff]
    %v629 = vld [vmem:[#allocation9 + $0x358] sm:$0xff]
    %v630 = vld [vmem:[#allocation9 + $0x360] sm:$0xff]
    %v631 = vld [vmem:[#allocation9 + $0x368] sm:$0xff]
    %v632 = vld [vmem:[#allocation9 + $0x370] sm:$0xff]
    %v633 = vld [vmem:[#allocation9 + $0x378] sm:$0xff]
    %v634 = vld [vmem:[#allocation9 + $0x380] sm:$0xff]
    %v635 = vld [vmem:[#allocation9 + $0x388] sm:$0xff]
    %v636 = vld [vmem:[#allocation9 + $0x390] sm:$0xff]
    %v637 = vld [vmem:[#allocation9 + $0x398] sm:$0xff]
    %v638 = vld [vmem:[#allocation9 + $0x3a0] sm:$0xff]
    %v639 = vld [vmem:[#allocation9 + $0x3a8] sm:$0xff]
    %v640 = vld [vmem:[#allocation9 + $0x3b0] sm:$0xff]
    %v641 = vld [vmem:[#allocation9 + $0x3b8] sm:$0xff]
    %v642 = vld [vmem:[#allocation9 + $0x3c0] sm:$0xff]
    %v643 = vld [vmem:[#allocation9 + $0x3c8] sm:$0xff]
    %v644 = vld [vmem:[#allocation9 + $0x3d0] sm:$0xff]
    %v645 = vld [vmem:[#allocation9 + $0x3d8] sm:$0xff]
    %v646 = vld [vmem:[#allocation9 + $0x3e0] sm:$0xff]
    %v647 = vld [vmem:[#allocation9 + $0x3e8] sm:$0xff]
    %v648 = vld [vmem:[#allocation9 + $0x3f0] sm:$0xff]
    %v649 = vld [vmem:[#allocation9 + $0x3f8] sm:$0xff]
    %v650 = vld [vmem:[%s5] sm:$0xf]
    %v651 = vld [vmem:[#allocation2] sm:$0xff]
    %v652 = vld [vmem:[#allocation2 + $0x8] sm:$0xff]
    %v653 = vld [vmem:[#allocation2 + $0x10] sm:$0xff]
    %v654 = vld [vmem:[#allocation2 + $0x18] sm:$0xff]
    %655 = vmatprep.subr.mxu0 %v459
    %656 = vmatpush1.msra.mxu0 %v458
    %657 = vmatprep.subr.mxu0 %v463
    %658 = vmatpush1.msra.mxu0 %v462
    %659 = vmatprep.subr.mxu0 %v467
    %660 = vmatpush1.msra.mxu0 %v466
    %661 = vmatprep.subr.mxu0 %v471
    %662 = vmatpush1.msra.mxu0 %v470
    %663 = vmatprep.subr.mxu0 %v475
    %664 = vmatpush1.msra.mxu0 %v474
    %665 = vmatprep.subr.mxu0 %v479
    %666 = vmatpush1.msra.mxu0 %v478
    %667 = vmatprep.subr.mxu0 %v483
    %668 = vmatpush1.msra.mxu0 %v482
    %669 = vmatprep.subr.mxu0 %v487
    %670 = vmatpush1.msra.mxu0 %v486
    %671 = vmatprep.subr.mxu0 %v491
    %672 = vmatpush1.msra.mxu0 %v490
    %673 = vmatprep.subr.mxu0 %v495
    %674 = vmatpush1.msra.mxu0 %v494
    %675 = vmatprep.subr.mxu0 %v499
    %676 = vmatpush1.msra.mxu0 %v498
    %677 = vmatprep.subr.mxu0 %v503
    %678 = vmatpush1.msra.mxu0 %v502
    %679 = vmatprep.subr.mxu0 %v507
    %680 = vmatpush1.msra.mxu0 %v506
    %681 = vmatprep.subr.mxu0 %v511
    %682 = vmatpush1.msra.mxu0 %v510
    %683 = vmatprep.subr.mxu0 %v515
    %684 = vmatpush1.msra.mxu0 %v514
    %685 = vmatprep.subr.mxu0 %v519
    %686 = vmatpush1.msra.mxu0 %v518
    %687 = vmatprep.subr.mxu0 0.0
    %688 = vmatpush1.msra.mxu0 0.0
    %689 = vmatprep.subr.mxu0 0.0
    %690 = vmatpush1.msra.mxu0 0.0
    %691 = vmatprep.subr.mxu0 0.0
    %692 = vmatpush1.msra.mxu0 0.0
    %693 = vmatprep.subr.mxu0 0.0
    %694 = vmatpush1.msra.mxu0 0.0
    %695 = vmatprep.subr.mxu0 0.0
    %696 = vmatpush1.msra.mxu0 0.0
    %697 = vmatprep.subr.mxu0 0.0
    %698 = vmatpush1.msra.mxu0 0.0
    %699 = vmatprep.subr.mxu0 0.0
    %700 = vmatpush1.msra.mxu0 0.0
    %701 = vmatprep.subr.mxu0 0.0
    %702 = vmatpush1.msra.mxu0 0.0
    %703 = vmatprep.subr.mxu0 0.0
    %704 = vmatpush1.msra.mxu0 0.0
    %705 = vmatprep.subr.mxu0 0.0
    %706 = vmatpush1.msra.mxu0 0.0
    %707 = vmatprep.subr.mxu0 0.0
    %708 = vmatpush1.msra.mxu0 0.0
    %709 = vmatprep.subr.mxu0 0.0
    %710 = vmatpush1.msra.mxu0 0.0
    %711 = vmatprep.subr.mxu0 0.0
    %712 = vmatpush1.msra.mxu0 0.0
    %713 = vmatprep.subr.mxu0 0.0
    %714 = vmatpush1.msra.mxu0 0.0
    %715 = vmatprep.subr.mxu0 0.0
    %716 = vmatpush1.msra.mxu0 0.0
    %717 = vmatprep.subr.mxu0 0.0
    %718 = vmatpush1.msra.mxu0 0.0
    %719 = vmatprep.mubr.f32.mxu0 0.0
    %720 = vmatmul.mubr.f32.gmra.mrb[0].mxu0 0.0
    %v721 = vpop.f32.mrb[0].mxu0
    %v722 = vadd.f32 0.0, %v721
    %v723 = vpop.f32.mrb[0].mxu0
    %v724 = vadd.f32 0.0, %v723
    %725 = vdwg.mxu0
    %726 = vmatprep.subr.mxu0 %v461
    %727 = vmatpush1.msra.mxu0 %v460
    %728 = vmatprep.subr.mxu0 %v465
    %729 = vmatpush1.msra.mxu0 %v464
    %730 = vmatprep.subr.mxu0 %v469
    %731 = vmatpush1.msra.mxu0 %v468
    %732 = vmatprep.subr.mxu0 %v473
    %733 = vmatpush1.msra.mxu0 %v472
    %734 = vmatprep.subr.mxu0 %v477
    %735 = vmatpush1.msra.mxu0 %v476
    %736 = vmatprep.subr.mxu0 %v481
    %737 = vmatpush1.msra.mxu0 %v480
    %738 = vmatprep.subr.mxu0 %v485
    %739 = vmatpush1.msra.mxu0 %v484
    %740 = vmatprep.subr.mxu0 %v489
    %741 = vmatpush1.msra.mxu0 %v488
    %742 = vmatprep.subr.mxu0 %v493
    %743 = vmatpush1.msra.mxu0 %v492
    %744 = vmatprep.subr.mxu0 %v497
    %745 = vmatpush1.msra.mxu0 %v496
    %746 = vmatprep.subr.mxu0 %v501
    %747 = vmatpush1.msra.mxu0 %v500
    %748 = vmatprep.subr.mxu0 %v505
    %749 = vmatpush1.msra.mxu0 %v504
    %750 = vmatprep.subr.mxu0 %v509
    %751 = vmatpush1.msra.mxu0 %v508
    %752 = vmatprep.subr.mxu0 %v513
    %753 = vmatpush1.msra.mxu0 %v512
    %754 = vmatprep.subr.mxu0 %v517
    %755 = vmatpush1.msra.mxu0 %v516
    %756 = vmatprep.subr.mxu0 %v521
    %757 = vmatpush1.msra.mxu0 %v520
    %758 = vmatprep.subr.mxu0 0.0
    %759 = vmatpush1.msra.mxu0 0.0
    %760 = vmatprep.subr.mxu0 0.0
    %761 = vmatpush1.msra.mxu0 0.0
    %762 = vmatprep.subr.mxu0 0.0
    %763 = vmatpush1.msra.mxu0 0.0
    %764 = vmatprep.subr.mxu0 0.0
    %765 = vmatpush1.msra.mxu0 0.0
    %766 = vmatprep.subr.mxu0 0.0
    %767 = vmatpush1.msra.mxu0 0.0
    %768 = vmatprep.subr.mxu0 0.0
    %769 = vmatpush1.msra.mxu0 0.0
    %770 = vmatprep.subr.mxu0 0.0
    %771 = vmatpush1.msra.mxu0 0.0
    %772 = vmatprep.subr.mxu0 0.0
    %773 = vmatpush1.msra.mxu0 0.0
    %774 = vmatprep.subr.mxu0 0.0
    %775 = vmatpush1.msra.mxu0 0.0
    %776 = vmatprep.subr.mxu0 0.0
    %777 = vmatpush1.msra.mxu0 0.0
    %778 = vmatprep.subr.mxu0 0.0
    %779 = vmatpush1.msra.mxu0 0.0
    %780 = vmatprep.subr.mxu0 0.0
    %781 = vmatpush1.msra.mxu0 0.0
    %782 = vmatprep.subr.mxu0 0.0
    %783 = vmatpush1.msra.mxu0 0.0
    %784 = vmatprep.subr.mxu0 0.0
    %785 = vmatpush1.msra.mxu0 0.0
    %786 = vmatprep.subr.mxu0 0.0
    %787 = vmatpush1.msra.mxu0 0.0
    %788 = vmatprep.subr.mxu0 0.0
    %789 = vmatpush1.msra.mxu0 0.0
    %790 = vmatprep.mubr.f32.mxu0 0.0
    %791 = vmatmul.mubr.f32.gmra.mrb[0].mxu0 0.0
    %v792 = vpop.f32.mrb[0].mxu0
    %v793 = vadd.f32 0.0, %v792
    %v794 = vpop.f32.mrb[0].mxu0
    %v795 = vadd.f32 0.0, %v794
    %796 = vdwg.mxu0
    %v797 = vadd.f32 %v651, %v722
    %v798 = vadd.f32 %v652, %v724
    %v799 = vadd.f32 %v653, %v793
    %v800 = vadd.f32 %v654, %v795
    %v801 = vxor.u32 %v797, 2147483648
    %v802 = vmul.f32 %v801, 1.442695
    %v803 = vpow.pop %v802
    %v804 = vadd.f32 %v803, 1.0
    %v805 = vrcp.pop %v804
    %v806 = vmul.f32 1.0, %v805
    %v807 = vxor.u32 %v798, 2147483648
    %v808 = vmul.f32 %v807, 1.442695
    %v809 = vpow.pop %v808
    %v810 = vadd.f32 %v809, 1.0
    %v811 = vrcp.pop %v810
    %v812 = vmul.f32 1.0, %v811
    %v813 = vtanh.pop %v799
    %v814 = vxor.u32 %v800, 2147483648
    %v815 = vmul.f32 %v814, 1.442695
    %v816 = vpow.pop %v815
    %v817 = vadd.f32 %v816, 1.0
    %v818 = vrcp.pop %v817
    %v819 = vmul.f32 1.0, %v818
    %v820 = vmul.f32 %v812, 0.0
    %v821 = vmul.f32 %v806, %v813
    %v822 = vadd.f32 %v820, %v821
    %v823 = vtanh.pop %v822
    %v824 = vmul.f32 %v819, %v823
    %v826 = vlaneseq
    %v827 = vshrl.u32 %v826, 7
    %v828 = vsub.s32 0, %v827
    %v829 = vrot.slane %v650, %v828
    %v830 = vlaneseq
    %v831 = vshrl.u32 %v830, 7
    %v832 = vsub.s32 1, %v831
    %v833 = vrot.slane %v650, %v832
    %v834 = vlaneseq
    %v835 = vshrl.u32 %v834, 7
    %v836 = vsub.s32 2, %v835
    %v837 = vrot.slane %v650, %v836
    %v838 = vlaneseq
    %v839 = vshrl.u32 %v838, 7
    %v840 = vsub.s32 3, %v839
    %v841 = vrot.slane %v650, %v840
    %846 = vmatprep.subr.mxu0 %v523
    %847 = vmatpush1.msra.mxu0 %v522
    %848 = vmatprep.subr.mxu0 %v527
    %849 = vmatpush1.msra.mxu0 %v526
    %850 = vmatprep.subr.mxu0 %v531
    %851 = vmatpush1.msra.mxu0 %v530
    %852 = vmatprep.subr.mxu0 %v535
    %853 = vmatpush1.msra.mxu0 %v534
    %854 = vmatprep.subr.mxu0 %v539
    %855 = vmatpush1.msra.mxu0 %v538
    %856 = vmatprep.subr.mxu0 %v543
    %857 = vmatpush1.msra.mxu0 %v542
    %858 = vmatprep.subr.mxu0 %v547
    %859 = vmatpush1.msra.mxu0 %v546
    %860 = vmatprep.subr.mxu0 %v551
    %861 = vmatpush1.msra.mxu0 %v550
    %862 = vmatprep.subr.mxu0 %v555
    %863 = vmatpush1.msra.mxu0 %v554
    %864 = vmatprep.subr.mxu0 %v559
    %865 = vmatpush1.msra.mxu0 %v558
    %866 = vmatprep.subr.mxu0 %v563
    %867 = vmatpush1.msra.mxu0 %v562
    %868 = vmatprep.subr.mxu0 %v567
    %869 = vmatpush1.msra.mxu0 %v566
    %870 = vmatprep.subr.mxu0 %v571
    %871 = vmatpush1.msra.mxu0 %v570
    %872 = vmatprep.subr.mxu0 %v575
    %873 = vmatpush1.msra.mxu0 %v574
    %874 = vmatprep.subr.mxu0 %v579
    %875 = vmatpush1.msra.mxu0 %v578
    %876 = vmatprep.subr.mxu0 %v583
    %877 = vmatpush1.msra.mxu0 %v582
    %878 = vmatprep.subr.mxu0 %v587
    %879 = vmatpush1.msra.mxu0 %v586
    %880 = vmatprep.subr.mxu0 %v591
    %881 = vmatpush1.msra.mxu0 %v590
    %882 = vmatprep.subr.mxu0 %v595
    %883 = vmatpush1.msra.mxu0 %v594
    %884 = vmatprep.subr.mxu0 %v599
    %885 = vmatpush1.msra.mxu0 %v598
    %886 = vmatprep.subr.mxu0 %v603
    %887 = vmatpush1.msra.mxu0 %v602
    %888 = vmatprep.subr.mxu0 %v607
    %889 = vmatpush1.msra.mxu0 %v606
    %890 = vmatprep.subr.mxu0 %v611
    %891 = vmatpush1.msra.mxu0 %v610
    %892 = vmatprep.subr.mxu0 %v615
    %893 = vmatpush1.msra.mxu0 %v614
    %894 = vmatprep.subr.mxu0 %v619
    %895 = vmatpush1.msra.mxu0 %v618
    %896 = vmatprep.subr.mxu0 %v623
    %897 = vmatpush1.msra.mxu0 %v622
    %898 = vmatprep.subr.mxu0 %v627
    %899 = vmatpush1.msra.mxu0 %v626
    %900 = vmatprep.subr.mxu0 %v631
    %901 = vmatpush1.msra.mxu0 %v630
    %902 = vmatprep.subr.mxu0 %v635
    %903 = vmatpush1.msra.mxu0 %v634
    %904 = vmatprep.subr.mxu0 %v639
    %905 = vmatpush1.msra.mxu0 %v638
    %906 = vmatprep.subr.mxu0 %v643
    %907 = vmatpush1.msra.mxu0 %v642
    %908 = vmatprep.subr.mxu0 %v647
    %909 = vmatpush1.msra.mxu0 %v646
    %910 = vmatprep.mubr.f32.mxu0 0.0
    %911 = vmatmul.mubr.f32.gmra.mrb[0].mxu0 %v824
    %v912 = vpop.f32.mrb[0].mxu0
    %v913 = vadd.f32 %v829, %v912
    %v914 = vpop.f32.mrb[0].mxu0
    %v915 = vadd.f32 %v833, %v914
    %916 = vdwg.mxu0
    %917 = vmatprep.subr.mxu0 %v525
    %918 = vmatpush1.msra.mxu0 %v524
    %919 = vmatprep.subr.mxu0 %v529
    %920 = vmatpush1.msra.mxu0 %v528
    %921 = vmatprep.subr.mxu0 %v533
    %922 = vmatpush1.msra.mxu0 %v532
    %923 = vmatprep.subr.mxu0 %v537
    %924 = vmatpush1.msra.mxu0 %v536
    %925 = vmatprep.subr.mxu0 %v541
    %926 = vmatpush1.msra.mxu0 %v540
    %927 = vmatprep.subr.mxu0 %v545
    %928 = vmatpush1.msra.mxu0 %v544
    %929 = vmatprep.subr.mxu0 %v549
    %930 = vmatpush1.msra.mxu0 %v548
    %931 = vmatprep.subr.mxu0 %v553
    %932 = vmatpush1.msra.mxu0 %v552
    %933 = vmatprep.subr.mxu0 %v557
    %934 = vmatpush1.msra.mxu0 %v556
    %935 = vmatprep.subr.mxu0 %v561
    %936 = vmatpush1.msra.mxu0 %v560
    %937 = vmatprep.subr.mxu0 %v565
    %938 = vmatpush1.msra.mxu0 %v564
    %939 = vmatprep.subr.mxu0 %v569
    %940 = vmatpush1.msra.mxu0 %v568
    %941 = vmatprep.subr.mxu0 %v573
    %942 = vmatpush1.msra.mxu0 %v572
    %943 = vmatprep.subr.mxu0 %v577
    %944 = vmatpush1.msra.mxu0 %v576
    %945 = vmatprep.subr.mxu0 %v581
    %946 = vmatpush1.msra.mxu0 %v580
    %947 = vmatprep.subr.mxu0 %v585
    %948 = vmatpush1.msra.mxu0 %v584
    %949 = vmatprep.subr.mxu0 %v589
    %950 = vmatpush1.msra.mxu0 %v588
    %951 = vmatprep.subr.mxu0 %v593
    %952 = vmatpush1.msra.mxu0 %v592
    %953 = vmatprep.subr.mxu0 %v597
    %954 = vmatpush1.msra.mxu0 %v596
    %955 = vmatprep.subr.mxu0 %v601
    %956 = vmatpush1.msra.mxu0 %v600
    %957 = vmatprep.subr.mxu0 %v605
    %958 = vmatpush1.msra.mxu0 %v604
    %959 = vmatprep.subr.mxu0 %v609
    %960 = vmatpush1.msra.mxu0 %v608
    %961 = vmatprep.subr.mxu0 %v613
    %962 = vmatpush1.msra.mxu0 %v612
    %963 = vmatprep.subr.mxu0 %v617
    %964 = vmatpush1.msra.mxu0 %v616
    %965 = vmatprep.subr.mxu0 %v621
    %966 = vmatpush1.msra.mxu0 %v620
    %967 = vmatprep.subr.mxu0 %v625
    %968 = vmatpush1.msra.mxu0 %v624
    %969 = vmatprep.subr.mxu0 %v629
    %970 = vmatpush1.msra.mxu0 %v628
    %971 = vmatprep.subr.mxu0 %v633
    %972 = vmatpush1.msra.mxu0 %v632
    %973 = vmatprep.subr.mxu0 %v637
    %974 = vmatpush1.msra.mxu0 %v636
    %975 = vmatprep.subr.mxu0 %v641
    %976 = vmatpush1.msra.mxu0 %v640
    %977 = vmatprep.subr.mxu0 %v645
    %978 = vmatpush1.msra.mxu0 %v644
    %979 = vmatprep.subr.mxu0 %v649
    %980 = vmatpush1.msra.mxu0 %v648
    %981 = vmatprep.mubr.f32.mxu0 0.0
    %982 = vmatmul.mubr.f32.gmra.mrb[0].mxu0 %v824
    %v983 = vpop.f32.mrb[0].mxu0
    %v984 = vadd.f32 %v837, %v983
    %v985 = vpop.f32.mrb[0].mxu0
    %v986 = vadd.f32 %v841, %v985
    %987 = vdwg.mxu0
    %v988 = vxor.u32 %v913, 2147483648
    %v989 = vmul.f32 %v988, 1.442695
    %v990 = vpow.pop %v989
    %v991 = vadd.f32 %v990, 1.0
    %v992 = vrcp.pop %v991
    %v993 = vmul.f32 1.0, %v992
    %v994 = vxor.u32 %v915, 2147483648
    %v995 = vmul.f32 %v994, 1.442695
    %v996 = vpow.pop %v995
    %v997 = vadd.f32 %v996, 1.0
    %v998 = vrcp.pop %v997
    %v999 = vmul.f32 1.0, %v998
    %v1000 = vtanh.pop %v984
    %v1001 = vxor.u32 %v986, 2147483648
    %v1002 = vmul.f32 %v1001, 1.442695
    %v1003 = vpow.pop %v1002
    %v1004 = vadd.f32 %v1003, 1.0
    %v1005 = vrcp.pop %v1004
    %v1006 = vmul.f32 1.0, %v1005
    %v1007 = vmul.f32 %v999, 0.0
    %v1008 = vmul.f32 %v993, %v1000
    %v1009 = vadd.f32 %v1007, %v1008
    %v1010 = vtanh.pop %v1009
    %v1011 = vmul.f32 %v1006, %v1010
    %s1012 = scalar_lea.vmem [#allocation2], 32
    %v1013 = vld [vmem:[%s1012] sm:$0xff]
    %v1014 = vld [vmem:[%s1012 + $0x8] sm:$0xff]
    %v1015 = vld [vmem:[%s1012 + $0x10] sm:$0xff]
    %v1016 = vld [vmem:[%s1012 + $0x18] sm:$0xff]
    %1017 = vmatprep.subr.mxu0 %v459
    %1018 = vmatpush1.msra.mxu0 %v458
    %1019 = vmatprep.subr.mxu0 %v463
    %1020 = vmatpush1.msra.mxu0 %v462
    %1021 = vmatprep.subr.mxu0 %v467
    %1022 = vmatpush1.msra.mxu0 %v466
    %1023 = vmatprep.subr.mxu0 %v471
    %1024 = vmatpush1.msra.mxu0 %v470
    %1025 = vmatprep.subr.mxu0 %v475
    %1026 = vmatpush1.msra.mxu0 %v474
    %1027 = vmatprep.subr.mxu0 %v479
    %1028 = vmatpush1.msra.mxu0 %v478
    %1029 = vmatprep.subr.mxu0 %v483
    %1030 = vmatpush1.msra.mxu0 %v482
    %1031 = vmatprep.subr.mxu0 %v487
    %1032 = vmatpush1.msra.mxu0 %v486
    %1033 = vmatprep.subr.mxu0 %v491
    %1034 = vmatpush1.msra.mxu0 %v490
    %1035 = vmatprep.subr.mxu0 %v495
    %1036 = vmatpush1.msra.mxu0 %v494
    %1037 = vmatprep.subr.mxu0 %v499
    %1038 = vmatpush1.msra.mxu0 %v498
    %1039 = vmatprep.subr.mxu0 %v503
    %1040 = vmatpush1.msra.mxu0 %v502
    %1041 = vmatprep.subr.mxu0 %v507
    %1042 = vmatpush1.msra.mxu0 %v506
    %1043 = vmatprep.subr.mxu0 %v511
    %1044 = vmatpush1.msra.mxu0 %v510
    %1045 = vmatprep.subr.mxu0 %v515
    %1046 = vmatpush1.msra.mxu0 %v514
    %1047 = vmatprep.subr.mxu0 %v519
    %1048 = vmatpush1.msra.mxu0 %v518
    %1049 = vmatprep.subr.mxu0 0.0
    %1050 = vmatpush1.msra.mxu0 0.0
    %1051 = vmatprep.subr.mxu0 0.0
    %1052 = vmatpush1.msra.mxu0 0.0
    %1053 = vmatprep.subr.mxu0 0.0
    %1054 = vmatpush1.msra.mxu0 0.0
    %1055 = vmatprep.subr.mxu0 0.0
    %1056 = vmatpush1.msra.mxu0 0.0
    %1057 = vmatprep.subr.mxu0 0.0
    %1058 = vmatpush1.msra.mxu0 0.0
    %1059 = vmatprep.subr.mxu0 0.0
    %1060 = vmatpush1.msra.mxu0 0.0
    %1061 = vmatprep.subr.mxu0 0.0
    %1062 = vmatpush1.msra.mxu0 0.0
    %1063 = vmatprep.subr.mxu0 0.0
    %1064 = vmatpush1.msra.mxu0 0.0
    %1065 = vmatprep.subr.mxu0 0.0
    %1066 = vmatpush1.msra.mxu0 0.0
    %1067 = vmatprep.subr.mxu0 0.0
    %1068 = vmatpush1.msra.mxu0 0.0
    %1069 = vmatprep.subr.mxu0 0.0
    %1070 = vmatpush1.msra.mxu0 0.0
    %1071 = vmatprep.subr.mxu0 0.0
    %1072 = vmatpush1.msra.mxu0 0.0
    %1073 = vmatprep.subr.mxu0 0.0
    %1074 = vmatpush1.msra.mxu0 0.0
    %1075 = vmatprep.subr.mxu0 0.0
    %1076 = vmatpush1.msra.mxu0 0.0
    %1077 = vmatprep.subr.mxu0 0.0
    %1078 = vmatpush1.msra.mxu0 0.0
    %1079 = vmatprep.subr.mxu0 0.0
    %1080 = vmatpush1.msra.mxu0 0.0
    %1081 = vmatprep.mubr.f32.mxu0 0.0
    %1082 = vmatmul.mubr.f32.gmra.mrb[0].mxu0 %v824
    %v1083 = vpop.f32.mrb[0].mxu0
    %v1084 = vadd.f32 0.0, %v1083
    %v1085 = vpop.f32.mrb[0].mxu0
    %v1086 = vadd.f32 0.0, %v1085
    %1087 = vdwg.mxu0
    %1088 = vmatprep.subr.mxu0 %v461
    %1089 = vmatpush1.msra.mxu0 %v460
    %1090 = vmatprep.subr.mxu0 %v465
    %1091 = vmatpush1.msra.mxu0 %v464
    %1092 = vmatprep.subr.mxu0 %v469
    %1093 = vmatpush1.msra.mxu0 %v468
    %1094 = vmatprep.subr.mxu0 %v473
    %1095 = vmatpush1.msra.mxu0 %v472
    %1096 = vmatprep.subr.mxu0 %v477
    %1097 = vmatpush1.msra.mxu0 %v476
    %1098 = vmatprep.subr.mxu0 %v481
    %1099 = vmatpush1.msra.mxu0 %v480
    %1100 = vmatprep.subr.mxu0 %v485
    %1101 = vmatpush1.msra.mxu0 %v484
    %1102 = vmatprep.subr.mxu0 %v489
    %1103 = vmatpush1.msra.mxu0 %v488
    %1104 = vmatprep.subr.mxu0 %v493
    %1105 = vmatpush1.msra.mxu0 %v492
    %1106 = vmatprep.subr.mxu0 %v497
    %1107 = vmatpush1.msra.mxu0 %v496
    %1108 = vmatprep.subr.mxu0 %v501
    %1109 = vmatpush1.msra.mxu0 %v500
    %1110 = vmatprep.subr.mxu0 %v505
    %1111 = vmatpush1.msra.mxu0 %v504
    %1112 = vmatprep.subr.mxu0 %v509
    %1113 = vmatpush1.msra.mxu0 %v508
    %1114 = vmatprep.subr.mxu0 %v513
    %1115 = vmatpush1.msra.mxu0 %v512
    %1116 = vmatprep.subr.mxu0 %v517
    %1117 = vmatpush1.msra.mxu0 %v516
    %1118 = vmatprep.subr.mxu0 %v521
    %1119 = vmatpush1.msra.mxu0 %v520
    %1120 = vmatprep.subr.mxu0 0.0
    %1121 = vmatpush1.msra.mxu0 0.0
    %1122 = vmatprep.subr.mxu0 0.0
    %1123 = vmatpush1.msra.mxu0 0.0
    %1124 = vmatprep.subr.mxu0 0.0
    %1125 = vmatpush1.msra.mxu0 0.0
    %1126 = vmatprep.subr.mxu0 0.0
    %1127 = vmatpush1.msra.mxu0 0.0
    %1128 = vmatprep.subr.mxu0 0.0
    %1129 = vmatpush1.msra.mxu0 0.0
    %1130 = vmatprep.subr.mxu0 0.0
    %1131 = vmatpush1.msra.mxu0 0.0
    %1132 = vmatprep.subr.mxu0 0.0
    %1133 = vmatpush1.msra.mxu0 0.0
    %1134 = vmatprep.subr.mxu0 0.0
    %1135 = vmatpush1.msra.mxu0 0.0
    %1136 = vmatprep.subr.mxu0 0.0
    %1137 = vmatpush1.msra.mxu0 0.0
    %1138 = vmatprep.subr.mxu0 0.0
    %1139 = vmatpush1.msra.mxu0 0.0
    %1140 = vmatprep.subr.mxu0 0.0
    %1141 = vmatpush1.msra.mxu0 0.0
    %1142 = vmatprep.subr.mxu0 0.0
    %1143 = vmatpush1.msra.mxu0 0.0
    %1144 = vmatprep.subr.mxu0 0.0
    %1145 = vmatpush1.msra.mxu0 0.0
    %1146 = vmatprep.subr.mxu0 0.0
    %1147 = vmatpush1.msra.mxu0 0.0
    %1148 = vmatprep.subr.mxu0 0.0
    %1149 = vmatpush1.msra.mxu0 0.0
    %1150 = vmatprep.subr.mxu0 0.0
    %1151 = vmatpush1.msra.mxu0 0.0
    %1152 = vmatprep.mubr.f32.mxu0 0.0
    %1153 = vmatmul.mubr.f32.gmra.mrb[0].mxu0 %v824
    %v1154 = vpop.f32.mrb[0].mxu0
    %v1155 = vadd.f32 0.0, %v1154
    %v1156 = vpop.f32.mrb[0].mxu0
    %v1157 = vadd.f32 0.0, %v1156
    %1158 = vdwg.mxu0
    %v1159 = vadd.f32 %v1013, %v1084
    %v1160 = vadd.f32 %v1014, %v1086
    %v1161 = vadd.f32 %v1015, %v1155
    %v1162 = vadd.f32 %v1016, %v1157
    %v1163 = vxor.u32 %v1159, 2147483648
    %v1164 = vmul.f32 %v1163, 1.442695
    %v1165 = vpow.pop %v1164
    %v1166 = vadd.f32 %v1165, 1.0
    %v1167 = vrcp.pop %v1166
    %v1168 = vmul.f32 1.0, %v1167
    %v1169 = vxor.u32 %v1160, 2147483648
    %v1170 = vmul.f32 %v1169, 1.442695
    %v1171 = vpow.pop %v1170
    %v1172 = vadd.f32 %v1171, 1.0
    %v1173 = vrcp.pop %v1172
    %v1174 = vmul.f32 1.0, %v1173
    %v1175 = vtanh.pop %v1161
    %v1176 = vxor.u32 %v1162, 2147483648
    %v1177 = vmul.f32 %v1176, 1.442695
    %v1178 = vpow.pop %v1177
    %v1179 = vadd.f32 %v1178, 1.0
    %v1180 = vrcp.pop %v1179
    %v1181 = vmul.f32 1.0, %v1180
    %v1182 = vmul.f32 %v1174, %v822
    %v1183 = vmul.f32 %v1168, %v1175
    %v1184 = vadd.f32 %v1182, %v1183
    %v1185 = vtanh.pop %v1184
    %v1186 = vmul.f32 %v1181, %v1185
    %1187 = vmatprep.subr.mxu0 %v523
    %1188 = vmatpush1.msra.mxu0 %v522
    %1189 = vmatprep.subr.mxu0 %v527
    %1190 = vmatpush1.msra.mxu0 %v526
    %1191 = vmatprep.subr.mxu0 %v531
    %1192 = vmatpush1.msra.mxu0 %v530
    %1193 = vmatprep.subr.mxu0 %v535
    %1194 = vmatpush1.msra.mxu0 %v534
    %1195 = vmatprep.subr.mxu0 %v539
    %1196 = vmatpush1.msra.mxu0 %v538
    %1197 = vmatprep.subr.mxu0 %v543
    %1198 = vmatpush1.msra.mxu0 %v542
    %1199 = vmatprep.subr.mxu0 %v547
    %1200 = vmatpush1.msra.mxu0 %v546
    %1201 = vmatprep.subr.mxu0 %v551
    %1202 = vmatpush1.msra.mxu0 %v550
    %1203 = vmatprep.subr.mxu0 %v555
    %1204 = vmatpush1.msra.mxu0 %v554
    %1205 = vmatprep.subr.mxu0 %v559
    %1206 = vmatpush1.msra.mxu0 %v558
    %1207 = vmatprep.subr.mxu0 %v563
    %1208 = vmatpush1.msra.mxu0 %v562
    %1209 = vmatprep.subr.mxu0 %v567
    %1210 = vmatpush1.msra.mxu0 %v566
    %1211 = vmatprep.subr.mxu0 %v571
    %1212 = vmatpush1.msra.mxu0 %v570
    %1213 = vmatprep.subr.mxu0 %v575
    %1214 = vmatpush1.msra.mxu0 %v574
    %1215 = vmatprep.subr.mxu0 %v579
    %1216 = vmatpush1.msra.mxu0 %v578
    %1217 = vmatprep.subr.mxu0 %v583
    %1218 = vmatpush1.msra.mxu0 %v582
    %1219 = vmatprep.subr.mxu0 %v587
    %1220 = vmatpush1.msra.mxu0 %v586
    %1221 = vmatprep.subr.mxu0 %v591
    %1222 = vmatpush1.msra.mxu0 %v590
    %1223 = vmatprep.subr.mxu0 %v595
    %1224 = vmatpush1.msra.mxu0 %v594
    %1225 = vmatprep.subr.mxu0 %v599
    %1226 = vmatpush1.msra.mxu0 %v598
    %1227 = vmatprep.subr.mxu0 %v603
    %1228 = vmatpush1.msra.mxu0 %v602
    %1229 = vmatprep.subr.mxu0 %v607
    %1230 = vmatpush1.msra.mxu0 %v606
    %1231 = vmatprep.subr.mxu0 %v611
    %1232 = vmatpush1.msra.mxu0 %v610
    %1233 = vmatprep.subr.mxu0 %v615
    %1234 = vmatpush1.msra.mxu0 %v614
    %1235 = vmatprep.subr.mxu0 %v619
    %1236 = vmatpush1.msra.mxu0 %v618
    %1237 = vmatprep.subr.mxu0 %v623
    %1238 = vmatpush1.msra.mxu0 %v622
    %1239 = vmatprep.subr.mxu0 %v627
    %1240 = vmatpush1.msra.mxu0 %v626
    %1241 = vmatprep.subr.mxu0 %v631
    %1242 = vmatpush1.msra.mxu0 %v630
    %1243 = vmatprep.subr.mxu0 %v635
    %1244 = vmatpush1.msra.mxu0 %v634
    %1245 = vmatprep.subr.mxu0 %v639
    %1246 = vmatpush1.msra.mxu0 %v638
    %1247 = vmatprep.subr.mxu0 %v643
    %1248 = vmatpush1.msra.mxu0 %v642
    %1249 = vmatprep.subr.mxu0 %v647
    %1250 = vmatpush1.msra.mxu0 %v646
    %1251 = vmatprep.mubr.f32.mxu0 %v1011
    %1252 = vmatmul.mubr.f32.gmra.mrb[0].mxu0 %v1186
    %v1253 = vpop.f32.mrb[0].mxu0
    %v1254 = vadd.f32 %v829, %v1253
    %v1255 = vpop.f32.mrb[0].mxu0
    %v1256 = vadd.f32 %v833, %v1255
    %1257 = vdwg.mxu0
    %1258 = vmatprep.subr.mxu0 %v525
    %1259 = vmatpush1.msra.mxu0 %v524
    %1260 = vmatprep.subr.mxu0 %v529
    %1261 = vmatpush1.msra.mxu0 %v528
    %1262 = vmatprep.subr.mxu0 %v533
    %1263 = vmatpush1.msra.mxu0 %v532
    %1264 = vmatprep.subr.mxu0 %v537
    %1265 = vmatpush1.msra.mxu0 %v536
    %1266 = vmatprep.subr.mxu0 %v541
    %1267 = vmatpush1.msra.mxu0 %v540
    %1268 = vmatprep.subr.mxu0 %v545
    %1269 = vmatpush1.msra.mxu0 %v544
    %1270 = vmatprep.subr.mxu0 %v549
    %1271 = vmatpush1.msra.mxu0 %v548
    %1272 = vmatprep.subr.mxu0 %v553
    %1273 = vmatpush1.msra.mxu0 %v552
    %1274 = vmatprep.subr.mxu0 %v557
    %1275 = vmatpush1.msra.mxu0 %v556
    %1276 = vmatprep.subr.mxu0 %v561
    %1277 = vmatpush1.msra.mxu0 %v560
    %1278 = vmatprep.subr.mxu0 %v565
    %1279 = vmatpush1.msra.mxu0 %v564
    %1280 = vmatprep.subr.mxu0 %v569
    %1281 = vmatpush1.msra.mxu0 %v568
    %1282 = vmatprep.subr.mxu0 %v573
    %1283 = vmatpush1.msra.mxu0 %v572
    %1284 = vmatprep.subr.mxu0 %v577
    %1285 = vmatpush1.msra.mxu0 %v576
    %1286 = vmatprep.subr.mxu0 %v581
    %1287 = vmatpush1.msra.mxu0 %v580
    %1288 = vmatprep.subr.mxu0 %v585
    %1289 = vmatpush1.msra.mxu0 %v584
    %1290 = vmatprep.subr.mxu0 %v589
    %1291 = vmatpush1.msra.mxu0 %v588
    %1292 = vmatprep.subr.mxu0 %v593
    %1293 = vmatpush1.msra.mxu0 %v592
    %1294 = vmatprep.subr.mxu0 %v597
    %1295 = vmatpush1.msra.mxu0 %v596
    %1296 = vmatprep.subr.mxu0 %v601
    %1297 = vmatpush1.msra.mxu0 %v600
    %1298 = vmatprep.subr.mxu0 %v605
    %1299 = vmatpush1.msra.mxu0 %v604
    %1300 = vmatprep.subr.mxu0 %v609
    %1301 = vmatpush1.msra.mxu0 %v608
    %1302 = vmatprep.subr.mxu0 %v613
    %1303 = vmatpush1.msra.mxu0 %v612
    %1304 = vmatprep.subr.mxu0 %v617
    %1305 = vmatpush1.msra.mxu0 %v616
    %1306 = vmatprep.subr.mxu0 %v621
    %1307 = vmatpush1.msra.mxu0 %v620
    %1308 = vmatprep.subr.mxu0 %v625
    %1309 = vmatpush1.msra.mxu0 %v624
    %1310 = vmatprep.subr.mxu0 %v629
    %1311 = vmatpush1.msra.mxu0 %v628
    %1312 = vmatprep.subr.mxu0 %v633
    %1313 = vmatpush1.msra.mxu0 %v632
    %1314 = vmatprep.subr.mxu0 %v637
    %1315 = vmatpush1.msra.mxu0 %v636
    %1316 = vmatprep.subr.mxu0 %v641
    %1317 = vmatpush1.msra.mxu0 %v640
    %1318 = vmatprep.subr.mxu0 %v645
    %1319 = vmatpush1.msra.mxu0 %v644
    %1320 = vmatprep.subr.mxu0 %v649
    %1321 = vmatpush1.msra.mxu0 %v648
    %1322 = vmatprep.mubr.f32.mxu0 %v1011
    %1323 = vmatmul.mubr.f32.gmra.mrb[0].mxu0 %v1186
    %v1324 = vpop.f32.mrb[0].mxu0
    %v1325 = vadd.f32 %v837, %v1324
    %v1326 = vpop.f32.mrb[0].mxu0
    %v1327 = vadd.f32 %v841, %v1326
    %1328 = vdwg.mxu0
    %v1329 = vxor.u32 %v1254, 2147483648
    %v1330 = vmul.f32 %v1329, 1.442695
    %v1331 = vpow.pop %v1330
    %v1332 = vadd.f32 %v1331, 1.0
    %v1333 = vrcp.pop %v1332
    %v1334 = vmul.f32 1.0, %v1333
    %v1335 = vxor.u32 %v1256, 2147483648
    %v1336 = vmul.f32 %v1335, 1.442695
    %v1337 = vpow.pop %v1336
    %v1338 = vadd.f32 %v1337, 1.0
    %v1339 = vrcp.pop %v1338
    %v1340 = vmul.f32 1.0, %v1339
    %v1341 = vtanh.pop %v1325
    %v1342 = vxor.u32 %v1327, 2147483648
    %v1343 = vmul.f32 %v1342, 1.442695
    %v1344 = vpow.pop %v1343
    %v1345 = vadd.f32 %v1344, 1.0
    %v1346 = vrcp.pop %v1345
    %v1347 = vmul.f32 1.0, %v1346
    %v1348 = vmul.f32 %v1340, %v1009
    %v1349 = vmul.f32 %v1334, %v1341
    %v1350 = vadd.f32 %v1348, %v1349
    %v1351 = vtanh.pop %v1350
    %v1352 = vmul.f32 %v1347, %v1351
    %s1353 = scalar_lea.vmem [#allocation2], 64
    %v1354 = vld [vmem:[%s1353] sm:$0xff]
    %v1355 = vld [vmem:[%s1353 + $0x8] sm:$0xff]
    %v1356 = vld [vmem:[%s1353 + $0x10] sm:$0xff]
    %v1357 = vld [vmem:[%s1353 + $0x18] sm:$0xff]
    %1358 = vmatprep.subr.mxu0 %v459
    %1359 = vmatpush1.msra.mxu0 %v458
    %1360 = vmatprep.subr.mxu0 %v463
    %1361 = vmatpush1.msra.mxu0 %v462
    %1362 = vmatprep.subr.mxu0 %v467
    %1363 = vmatpush1.msra.mxu0 %v466
    %1364 = vmatprep.subr.mxu0 %v471
    %1365 = vmatpush1.msra.mxu0 %v470
    %1366 = vmatprep.subr.mxu0 %v475
    %1367 = vmatpush1.msra.mxu0 %v474
    %1368 = vmatprep.subr.mxu0 %v479
    %1369 = vmatpush1.msra.mxu0 %v478
    %1370 = vmatprep.subr.mxu0 %v483
    %1371 = vmatpush1.msra.mxu0 %v482
    %1372 = vmatprep.subr.mxu0 %v487
    %1373 = vmatpush1.msra.mxu0 %v486
    %1374 = vmatprep.subr.mxu0 %v491
    %1375 = vmatpush1.msra.mxu0 %v490
    %1376 = vmatprep.subr.mxu0 %v495
    %1377 = vmatpush1.msra.mxu0 %v494
    %1378 = vmatprep.subr.mxu0 %v499
    %1379 = vmatpush1.msra.mxu0 %v498
    %1380 = vmatprep.subr.mxu0 %v503
    %1381 = vmatpush1.msra.mxu0 %v502
    %1382 = vmatprep.subr.mxu0 %v507
    %1383 = vmatpush1.msra.mxu0 %v506
    %1384 = vmatprep.subr.mxu0 %v511
    %1385 = vmatpush1.msra.mxu0 %v510
    %1386 = vmatprep.subr.mxu0 %v515
    %1387 = vmatpush1.msra.mxu0 %v514
    %1388 = vmatprep.subr.mxu0 %v519
    %1389 = vmatpush1.msra.mxu0 %v518
    %1390 = vmatprep.subr.mxu0 0.0
    %1391 = vmatpush1.msra.mxu0 0.0
    %1392 = vmatprep.subr.mxu0 0.0
    %1393 = vmatpush1.msra.mxu0 0.0
    %1394 = vmatprep.subr.mxu0 0.0
    %1395 = vmatpush1.msra.mxu0 0.0
    %1396 = vmatprep.subr.mxu0 0.0
    %1397 = vmatpush1.msra.mxu0 0.0
    %1398 = vmatprep.subr.mxu0 0.0
    %1399 = vmatpush1.msra.mxu0 0.0
    %1400 = vmatprep.subr.mxu0 0.0
    %1401 = vmatpush1.msra.mxu0 0.0
    %1402 = vmatprep.subr.mxu0 0.0
    %1403 = vmatpush1.msra.mxu0 0.0
    %1404 = vmatprep.subr.mxu0 0.0
    %1405 = vmatpush1.msra.mxu0 0.0
    %1406 = vmatprep.subr.mxu0 0.0
    %1407 = vmatpush1.msra.mxu0 0.0
    %1408 = vmatprep.subr.mxu0 0.0
    %1409 = vmatpush1.msra.mxu0 0.0
    %1410 = vmatprep.subr.mxu0 0.0
    %1411 = vmatpush1.msra.mxu0 0.0
    %1412 = vmatprep.subr.mxu0 0.0
    %1413 = vmatpush1.msra.mxu0 0.0
    %1414 = vmatprep.subr.mxu0 0.0
    %1415 = vmatpush1.msra.mxu0 0.0
    %1416 = vmatprep.subr.mxu0 0.0
    %1417 = vmatpush1.msra.mxu0 0.0
    %1418 = vmatprep.subr.mxu0 0.0
    %1419 = vmatpush1.msra.mxu0 0.0
    %1420 = vmatprep.subr.mxu0 0.0
    %1421 = vmatpush1.msra.mxu0 0.0
    %1422 = vmatprep.mubr.f32.mxu0 0.0
    %1423 = vmatmul.mubr.f32.gmra.mrb[0].mxu0 %v1186
    %v1424 = vpop.f32.mrb[0].mxu0
    %v1425 = vadd.f32 0.0, %v1424
    %v1426 = vpop.f32.mrb[0].mxu0
    %v1427 = vadd.f32 0.0, %v1426
    %1428 = vdwg.mxu0
    %1429 = vmatprep.subr.mxu0 %v461
    %1430 = vmatpush1.msra.mxu0 %v460
    %1431 = vmatprep.subr.mxu0 %v465
    %1432 = vmatpush1.msra.mxu0 %v464
    %1433 = vmatprep.subr.mxu0 %v469
    %1434 = vmatpush1.msra.mxu0 %v468
    %1435 = vmatprep.subr.mxu0 %v473
    %1436 = vmatpush1.msra.mxu0 %v472
    %1437 = vmatprep.subr.mxu0 %v477
    %1438 = vmatpush1.msra.mxu0 %v476
    %1439 = vmatprep.subr.mxu0 %v481
    %1440 = vmatpush1.msra.mxu0 %v480
    %1441 = vmatprep.subr.mxu0 %v485
    %1442 = vmatpush1.msra.mxu0 %v484
    %1443 = vmatprep.subr.mxu0 %v489
    %1444 = vmatpush1.msra.mxu0 %v488
    %1445 = vmatprep.subr.mxu0 %v493
    %1446 = vmatpush1.msra.mxu0 %v492
    %1447 = vmatprep.subr.mxu0 %v497
    %1448 = vmatpush1.msra.mxu0 %v496
    %1449 = vmatprep.subr.mxu0 %v501
    %1450 = vmatpush1.msra.mxu0 %v500
    %1451 = vmatprep.subr.mxu0 %v505
    %1452 = vmatpush1.msra.mxu0 %v504
    %1453 = vmatprep.subr.mxu0 %v509
    %1454 = vmatpush1.msra.mxu0 %v508
    %1455 = vmatprep.subr.mxu0 %v513
    %1456 = vmatpush1.msra.mxu0 %v512
    %1457 = vmatprep.subr.mxu0 %v517
    %1458 = vmatpush1.msra.mxu0 %v516
    %1459 = vmatprep.subr.mxu0 %v521
    %1460 = vmatpush1.msra.mxu0 %v520
    %1461 = vmatprep.subr.mxu0 0.0
    %1462 = vmatpush1.msra.mxu0 0.0
    %1463 = vmatprep.subr.mxu0 0.0
    %1464 = vmatpush1.msra.mxu0 0.0
    %1465 = vmatprep.subr.mxu0 0.0
    %1466 = vmatpush1.msra.mxu0 0.0
    %1467 = vmatprep.subr.mxu0 0.0
    %1468 = vmatpush1.msra.mxu0 0.0
    %1469 = vmatprep.subr.mxu0 0.0
    %1470 = vmatpush1.msra.mxu0 0.0
    %1471 = vmatprep.subr.mxu0 0.0
    %1472 = vmatpush1.msra.mxu0 0.0
    %1473 = vmatprep.subr.mxu0 0.0
    %1474 = vmatpush1.msra.mxu0 0.0
    %1475 = vmatprep.subr.mxu0 0.0
    %1476 = vmatpush1.msra.mxu0 0.0
    %1477 = vmatprep.subr.mxu0 0.0
    %1478 = vmatpush1.msra.mxu0 0.0
    %1479 = vmatprep.subr.mxu0 0.0
    %1480 = vmatpush1.msra.mxu0 0.0
    %1481 = vmatprep.subr.mxu0 0.0
    %1482 = vmatpush1.msra.mxu0 0.0
    %1483 = vmatprep.subr.mxu0 0.0
    %1484 = vmatpush1.msra.mxu0 0.0
    %1485 = vmatprep.subr.mxu0 0.0
    %1486 = vmatpush1.msra.mxu0 0.0
    %1487 = vmatprep.subr.mxu0 0.0
    %1488 = vmatpush1.msra.mxu0 0.0
    %1489 = vmatprep.subr.mxu0 0.0
    %1490 = vmatpush1.msra.mxu0 0.0
    %1491 = vmatprep.subr.mxu0 0.0
    %1492 = vmatpush1.msra.mxu0 0.0
    %1493 = vmatprep.mubr.f32.mxu0 0.0
    %1494 = vmatmul.mubr.f32.gmra.mrb[0].mxu0 %v1186
    %v1495 = vpop.f32.mrb[0].mxu0
    %v1496 = vadd.f32 0.0, %v1495
    %v1497 = vpop.f32.mrb[0].mxu0
    %v1498 = vadd.f32 0.0, %v1497
    %1499 = vdwg.mxu0
    %v1500 = vadd.f32 %v1354, %v1425
    %v1501 = vadd.f32 %v1355, %v1427
    %v1502 = vadd.f32 %v1356, %v1496
    %v1503 = vadd.f32 %v1357, %v1498
    %v1504 = vxor.u32 %v1500, 2147483648
    %v1505 = vmul.f32 %v1504, 1.442695
    %v1506 = vpow.pop %v1505
    %v1507 = vadd.f32 %v1506, 1.0
    %v1508 = vrcp.pop %v1507
    %v1509 = vmul.f32 1.0, %v1508
    %v1510 = vxor.u32 %v1501, 2147483648
    %v1511 = vmul.f32 %v1510, 1.442695
    %v1512 = vpow.pop %v1511
    %v1513 = vadd.f32 %v1512, 1.0
    %v1514 = vrcp.pop %v1513
    %v1515 = vmul.f32 1.0, %v1514
    %v1516 = vtanh.pop %v1502
    %v1517 = vxor.u32 %v1503, 2147483648
    %v1518 = vmul.f32 %v1517, 1.442695
    %v1519 = vpow.pop %v1518
    %v1520 = vadd.f32 %v1519, 1.0
    %v1521 = vrcp.pop %v1520
    %v1522 = vmul.f32 1.0, %v1521
    %v1523 = vmul.f32 %v1515, %v1184
    %v1524 = vmul.f32 %v1509, %v1516
    %v1525 = vadd.f32 %v1523, %v1524
    %v1526 = vtanh.pop %v1525
    %v1527 = vmul.f32 %v1522, %v1526
    %1528 = vmatprep.subr.mxu0 %v523
    %1529 = vmatpush1.msra.mxu0 %v522
    %1530 = vmatprep.subr.mxu0 %v527
    %1531 = vmatpush1.msra.mxu0 %v526
    %1532 = vmatprep.subr.mxu0 %v531
    %1533 = vmatpush1.msra.mxu0 %v530
    %1534 = vmatprep.subr.mxu0 %v535
    %1535 = vmatpush1.msra.mxu0 %v534
    %1536 = vmatprep.subr.mxu0 %v539
    %1537 = vmatpush1.msra.mxu0 %v538
    %1538 = vmatprep.subr.mxu0 %v543
    %1539 = vmatpush1.msra.mxu0 %v542
    %1540 = vmatprep.subr.mxu0 %v547
    %1541 = vmatpush1.msra.mxu0 %v546
    %1542 = vmatprep.subr.mxu0 %v551
    %1543 = vmatpush1.msra.mxu0 %v550
    %1544 = vmatprep.subr.mxu0 %v555
    %1545 = vmatpush1.msra.mxu0 %v554
    %1546 = vmatprep.subr.mxu0 %v559
    %1547 = vmatpush1.msra.mxu0 %v558
    %1548 = vmatprep.subr.mxu0 %v563
    %1549 = vmatpush1.msra.mxu0 %v562
    %1550 = vmatprep.subr.mxu0 %v567
    %1551 = vmatpush1.msra.mxu0 %v566
    %1552 = vmatprep.subr.mxu0 %v571
    %1553 = vmatpush1.msra.mxu0 %v570
    %1554 = vmatprep.subr.mxu0 %v575
    %1555 = vmatpush1.msra.mxu0 %v574
    %1556 = vmatprep.subr.mxu0 %v579
    %1557 = vmatpush1.msra.mxu0 %v578
    %1558 = vmatprep.subr.mxu0 %v583
    %1559 = vmatpush1.msra.mxu0 %v582
    %1560 = vmatprep.subr.mxu0 %v587
    %1561 = vmatpush1.msra.mxu0 %v586
    %1562 = vmatprep.subr.mxu0 %v591
    %1563 = vmatpush1.msra.mxu0 %v590
    %1564 = vmatprep.subr.mxu0 %v595
    %1565 = vmatpush1.msra.mxu0 %v594
    %1566 = vmatprep.subr.mxu0 %v599
    %1567 = vmatpush1.msra.mxu0 %v598
    %1568 = vmatprep.subr.mxu0 %v603
    %1569 = vmatpush1.msra.mxu0 %v602
    %1570 = vmatprep.subr.mxu0 %v607
    %1571 = vmatpush1.msra.mxu0 %v606
    %1572 = vmatprep.subr.mxu0 %v611
    %1573 = vmatpush1.msra.mxu0 %v610
    %1574 = vmatprep.subr.mxu0 %v615
    %1575 = vmatpush1.msra.mxu0 %v614
    %1576 = vmatprep.subr.mxu0 %v619
    %1577 = vmatpush1.msra.mxu0 %v618
    %1578 = vmatprep.subr.mxu0 %v623
    %1579 = vmatpush1.msra.mxu0 %v622
    %1580 = vmatprep.subr.mxu0 %v627
    %1581 = vmatpush1.msra.mxu0 %v626
    %1582 = vmatprep.subr.mxu0 %v631
    %1583 = vmatpush1.msra.mxu0 %v630
    %1584 = vmatprep.subr.mxu0 %v635
    %1585 = vmatpush1.msra.mxu0 %v634
    %1586 = vmatprep.subr.mxu0 %v639
    %1587 = vmatpush1.msra.mxu0 %v638
    %1588 = vmatprep.subr.mxu0 %v643
    %1589 = vmatpush1.msra.mxu0 %v642
    %1590 = vmatprep.subr.mxu0 %v647
    %1591 = vmatpush1.msra.mxu0 %v646
    %1592 = vmatprep.mubr.f32.mxu0 %v1352
    %1593 = vmatmul.mubr.f32.gmra.mrb[0].mxu0 %v1527
    %v1594 = vpop.f32.mrb[0].mxu0
    %v1595 = vadd.f32 %v829, %v1594
    %v1596 = vpop.f32.mrb[0].mxu0
    %v1597 = vadd.f32 %v833, %v1596
    %1598 = vdwg.mxu0
    %1599 = vmatprep.subr.mxu0 %v525
    %1600 = vmatpush1.msra.mxu0 %v524
    %1601 = vmatprep.subr.mxu0 %v529
    %1602 = vmatpush1.msra.mxu0 %v528
    %1603 = vmatprep.subr.mxu0 %v533
    %1604 = vmatpush1.msra.mxu0 %v532
    %1605 = vmatprep.subr.mxu0 %v537
    %1606 = vmatpush1.msra.mxu0 %v536
    %1607 = vmatprep.subr.mxu0 %v541
    %1608 = vmatpush1.msra.mxu0 %v540
    %1609 = vmatprep.subr.mxu0 %v545
    %1610 = vmatpush1.msra.mxu0 %v544
    %1611 = vmatprep.subr.mxu0 %v549
    %1612 = vmatpush1.msra.mxu0 %v548
    %1613 = vmatprep.subr.mxu0 %v553
    %1614 = vmatpush1.msra.mxu0 %v552
    %1615 = vmatprep.subr.mxu0 %v557
    %1616 = vmatpush1.msra.mxu0 %v556
    %1617 = vmatprep.subr.mxu0 %v561
    %1618 = vmatpush1.msra.mxu0 %v560
    %1619 = vmatprep.subr.mxu0 %v565
    %1620 = vmatpush1.msra.mxu0 %v564
    %1621 = vmatprep.subr.mxu0 %v569
    %1622 = vmatpush1.msra.mxu0 %v568
    %1623 = vmatprep.subr.mxu0 %v573
    %1624 = vmatpush1.msra.mxu0 %v572
    %1625 = vmatprep.subr.mxu0 %v577
    %1626 = vmatpush1.msra.mxu0 %v576
    %1627 = vmatprep.subr.mxu0 %v581
    %1628 = vmatpush1.msra.mxu0 %v580
    %1629 = vmatprep.subr.mxu0 %v585
    %1630 = vmatpush1.msra.mxu0 %v584
    %1631 = vmatprep.subr.mxu0 %v589
    %1632 = vmatpush1.msra.mxu0 %v588
    %1633 = vmatprep.subr.mxu0 %v593
    %1634 = vmatpush1.msra.mxu0 %v592
    %1635 = vmatprep.subr.mxu0 %v597
    %1636 = vmatpush1.msra.mxu0 %v596
    %1637 = vmatprep.subr.mxu0 %v601
    %1638 = vmatpush1.msra.mxu0 %v600
    %1639 = vmatprep.subr.mxu0 %v605
    %1640 = vmatpush1.msra.mxu0 %v604
    %1641 = vmatprep.subr.mxu0 %v609
    %1642 = vmatpush1.msra.mxu0 %v608
    %1643 = vmatprep.subr.mxu0 %v613
    %1644 = vmatpush1.msra.mxu0 %v612
    %1645 = vmatprep.subr.mxu0 %v617
    %1646 = vmatpush1.msra.mxu0 %v616
    %1647 = vmatprep.subr.mxu0 %v621
    %1648 = vmatpush1.msra.mxu0 %v620
    %1649 = vmatprep.subr.mxu0 %v625
    %1650 = vmatpush1.msra.mxu0 %v624
    %1651 = vmatprep.subr.mxu0 %v629
    %1652 = vmatpush1.msra.mxu0 %v628
    %1653 = vmatprep.subr.mxu0 %v633
    %1654 = vmatpush1.msra.mxu0 %v632
    %1655 = vmatprep.subr.mxu0 %v637
    %1656 = vmatpush1.msra.mxu0 %v636
    %1657 = vmatprep.subr.mxu0 %v641
    %1658 = vmatpush1.msra.mxu0 %v640
    %1659 = vmatprep.subr.mxu0 %v645
    %1660 = vmatpush1.msra.mxu0 %v644
    %1661 = vmatprep.subr.mxu0 %v649
    %1662 = vmatpush1.msra.mxu0 %v648
    %1663 = vmatprep.mubr.f32.mxu0 %v1352
    %1664 = vmatmul.mubr.f32.gmra.mrb[0].mxu0 %v1527
    %v1665 = vpop.f32.mrb[0].mxu0
    %v1666 = vadd.f32 %v837, %v1665
    %v1667 = vpop.f32.mrb[0].mxu0
    %v1668 = vadd.f32 %v841, %v1667
    %1669 = vdwg.mxu0
    %v1670 = vxor.u32 %v1595, 2147483648
    %v1671 = vmul.f32 %v1670, 1.442695
    %v1672 = vpow.pop %v1671
    %v1673 = vadd.f32 %v1672, 1.0
    %v1674 = vrcp.pop %v1673
    %v1675 = vmul.f32 1.0, %v1674
    %v1676 = vxor.u32 %v1597, 2147483648
    %v1677 = vmul.f32 %v1676, 1.442695
    %v1678 = vpow.pop %v1677
    %v1679 = vadd.f32 %v1678, 1.0
    %v1680 = vrcp.pop %v1679
    %v1681 = vmul.f32 1.0, %v1680
    %v1682 = vtanh.pop %v1666
    %v1683 = vxor.u32 %v1668, 2147483648
    %v1684 = vmul.f32 %v1683, 1.442695
    %v1685 = vpow.pop %v1684
    %v1686 = vadd.f32 %v1685, 1.0
    %v1687 = vrcp.pop %v1686
    %v1688 = vmul.f32 1.0, %v1687
    %v1689 = vmul.f32 %v1681, %v1350
    %v1690 = vmul.f32 %v1675, %v1682
    %v1691 = vadd.f32 %v1689, %v1690
    %v1692 = vtanh.pop %v1691
    %v1693 = vmul.f32 %v1688, %v1692
    %s1694 = scalar_lea.vmem [#allocation2], 96
    %v1695 = vld [vmem:[%s1694] sm:$0xff]
    %v1696 = vld [vmem:[%s1694 + $0x8] sm:$0xff]
    %v1697 = vld [vmem:[%s1694 + $0x10] sm:$0xff]
    %v1698 = vld [vmem:[%s1694 + $0x18] sm:$0xff]
    %1699 = vmatprep.subr.mxu0 %v459
    %1700 = vmatpush1.msra.mxu0 %v458
    %1701 = vmatprep.subr.mxu0 %v463
    %1702 = vmatpush1.msra.mxu0 %v462
    %1703 = vmatprep.subr.mxu0 %v467
    %1704 = vmatpush1.msra.mxu0 %v466
    %1705 = vmatprep.subr.mxu0 %v471
    %1706 = vmatpush1.msra.mxu0 %v470
    %1707 = vmatprep.subr.mxu0 %v475
    %1708 = vmatpush1.msra.mxu0 %v474
    %1709 = vmatprep.subr.mxu0 %v479
    %1710 = vmatpush1.msra.mxu0 %v478
    %1711 = vmatprep.subr.mxu0 %v483
    %1712 = vmatpush1.msra.mxu0 %v482
    %1713 = vmatprep.subr.mxu0 %v487
    %1714 = vmatpush1.msra.mxu0 %v486
    %1715 = vmatprep.subr.mxu0 %v491
    %1716 = vmatpush1.msra.mxu0 %v490
    %1717 = vmatprep.subr.mxu0 %v495
    %1718 = vmatpush1.msra.mxu0 %v494
    %1719 = vmatprep.subr.mxu0 %v499
    %1720 = vmatpush1.msra.mxu0 %v498
    %1721 = vmatprep.subr.mxu0 %v503
    %1722 = vmatpush1.msra.mxu0 %v502
    %1723 = vmatprep.subr.mxu0 %v507
    %1724 = vmatpush1.msra.mxu0 %v506
    %1725 = vmatprep.subr.mxu0 %v511
    %1726 = vmatpush1.msra.mxu0 %v510
    %1727 = vmatprep.subr.mxu0 %v515
    %1728 = vmatpush1.msra.mxu0 %v514
    %1729 = vmatprep.subr.mxu0 %v519
    %1730 = vmatpush1.msra.mxu0 %v518
    %1731 = vmatprep.subr.mxu0 0.0
    %1732 = vmatpush1.msra.mxu0 0.0
    %1733 = vmatprep.subr.mxu0 0.0
    %1734 = vmatpush1.msra.mxu0 0.0
    %1735 = vmatprep.subr.mxu0 0.0
    %1736 = vmatpush1.msra.mxu0 0.0
    %1737 = vmatprep.subr.mxu0 0.0
    %1738 = vmatpush1.msra.mxu0 0.0
    %1739 = vmatprep.subr.mxu0 0.0
    %1740 = vmatpush1.msra.mxu0 0.0
    %1741 = vmatprep.subr.mxu0 0.0
    %1742 = vmatpush1.msra.mxu0 0.0
    %1743 = vmatprep.subr.mxu0 0.0
    %1744 = vmatpush1.msra.mxu0 0.0
    %1745 = vmatprep.subr.mxu0 0.0
    %1746 = vmatpush1.msra.mxu0 0.0
    %1747 = vmatprep.subr.mxu0 0.0
    %1748 = vmatpush1.msra.mxu0 0.0
    %1749 = vmatprep.subr.mxu0 0.0
    %1750 = vmatpush1.msra.mxu0 0.0
    %1751 = vmatprep.subr.mxu0 0.0
    %1752 = vmatpush1.msra.mxu0 0.0
    %1753 = vmatprep.subr.mxu0 0.0
    %1754 = vmatpush1.msra.mxu0 0.0
    %1755 = vmatprep.subr.mxu0 0.0
    %1756 = vmatpush1.msra.mxu0 0.0
    %1757 = vmatprep.subr.mxu0 0.0
    %1758 = vmatpush1.msra.mxu0 0.0
    %1759 = vmatprep.subr.mxu0 0.0
    %1760 = vmatpush1.msra.mxu0 0.0
    %1761 = vmatprep.subr.mxu0 0.0
    %1762 = vmatpush1.msra.mxu0 0.0
    %1763 = vmatprep.mubr.f32.mxu0 0.0
    %1764 = vmatmul.mubr.f32.gmra.mrb[0].mxu0 %v1527
    %v1765 = vpop.f32.mrb[0].mxu0
    %v1766 = vadd.f32 0.0, %v1765
    %v1767 = vpop.f32.mrb[0].mxu0
    %v1768 = vadd.f32 0.0, %v1767
    %1769 = vdwg.mxu0
    %1770 = vmatprep.subr.mxu0 %v461
    %1771 = vmatpush1.msra.mxu0 %v460
    %1772 = vmatprep.subr.mxu0 %v465
    %1773 = vmatpush1.msra.mxu0 %v464
    %1774 = vmatprep.subr.mxu0 %v469
    %1775 = vmatpush1.msra.mxu0 %v468
    %1776 = vmatprep.subr.mxu0 %v473
    %1777 = vmatpush1.msra.mxu0 %v472
    %1778 = vmatprep.subr.mxu0 %v477
    %1779 = vmatpush1.msra.mxu0 %v476
    %1780 = vmatprep.subr.mxu0 %v481
    %1781 = vmatpush1.msra.mxu0 %v480
    %1782 = vmatprep.subr.mxu0 %v485
    %1783 = vmatpush1.msra.mxu0 %v484
    %1784 = vmatprep.subr.mxu0 %v489
    %1785 = vmatpush1.msra.mxu0 %v488
    %1786 = vmatprep.subr.mxu0 %v493
    %1787 = vmatpush1.msra.mxu0 %v492
    %1788 = vmatprep.subr.mxu0 %v497
    %1789 = vmatpush1.msra.mxu0 %v496
    %1790 = vmatprep.subr.mxu0 %v501
    %1791 = vmatpush1.msra.mxu0 %v500
    %1792 = vmatprep.subr.mxu0 %v505
    %1793 = vmatpush1.msra.mxu0 %v504
    %1794 = vmatprep.subr.mxu0 %v509
    %1795 = vmatpush1.msra.mxu0 %v508
    %1796 = vmatprep.subr.mxu0 %v513
    %1797 = vmatpush1.msra.mxu0 %v512
    %1798 = vmatprep.subr.mxu0 %v517
    %1799 = vmatpush1.msra.mxu0 %v516
    %1800 = vmatprep.subr.mxu0 %v521
    %1801 = vmatpush1.msra.mxu0 %v520
    %1802 = vmatprep.subr.mxu0 0.0
    %1803 = vmatpush1.msra.mxu0 0.0
    %1804 = vmatprep.subr.mxu0 0.0
    %1805 = vmatpush1.msra.mxu0 0.0
    %1806 = vmatprep.subr.mxu0 0.0
    %1807 = vmatpush1.msra.mxu0 0.0
    %1808 = vmatprep.subr.mxu0 0.0
    %1809 = vmatpush1.msra.mxu0 0.0
    %1810 = vmatprep.subr.mxu0 0.0
    %1811 = vmatpush1.msra.mxu0 0.0
    %1812 = vmatprep.subr.mxu0 0.0
    %1813 = vmatpush1.msra.mxu0 0.0
    %1814 = vmatprep.subr.mxu0 0.0
    %1815 = vmatpush1.msra.mxu0 0.0
    %1816 = vmatprep.subr.mxu0 0.0
    %1817 = vmatpush1.msra.mxu0 0.0
    %1818 = vmatprep.subr.mxu0 0.0
    %1819 = vmatpush1.msra.mxu0 0.0
    %1820 = vmatprep.subr.mxu0 0.0
    %1821 = vmatpush1.msra.mxu0 0.0
    %1822 = vmatprep.subr.mxu0 0.0
    %1823 = vmatpush1.msra.mxu0 0.0
    %1824 = vmatprep.subr.mxu0 0.0
    %1825 = vmatpush1.msra.mxu0 0.0
    %1826 = vmatprep.subr.mxu0 0.0
    %1827 = vmatpush1.msra.mxu0 0.0
    %1828 = vmatprep.subr.mxu0 0.0
    %1829 = vmatpush1.msra.mxu0 0.0
    %1830 = vmatprep.subr.mxu0 0.0
    %1831 = vmatpush1.msra.mxu0 0.0
    %1832 = vmatprep.subr.mxu0 0.0
    %1833 = vmatpush1.msra.mxu0 0.0
    %1834 = vmatprep.mubr.f32.mxu0 0.0
    %1835 = vmatmul.mubr.f32.gmra.mrb[0].mxu0 %v1527
    %v1836 = vpop.f32.mrb[0].mxu0
    %v1837 = vadd.f32 0.0, %v1836
    %v1838 = vpop.f32.mrb[0].mxu0
    %v1839 = vadd.f32 0.0, %v1838
    %1840 = vdwg.mxu0
    %v1841 = vadd.f32 %v1695, %v1766
    %v1842 = vadd.f32 %v1696, %v1768
    %v1843 = vadd.f32 %v1697, %v1837
    %v1844 = vadd.f32 %v1698, %v1839
    %v1845 = vxor.u32 %v1841, 2147483648
    %v1846 = vmul.f32 %v1845, 1.442695
    %v1847 = vpow.pop %v1846
    %v1848 = vadd.f32 %v1847, 1.0
    %v1849 = vrcp.pop %v1848
    %v1850 = vmul.f32 1.0, %v1849
    %v1851 = vxor.u32 %v1842, 2147483648
    %v1852 = vmul.f32 %v1851, 1.442695
    %v1853 = vpow.pop %v1852
    %v1854 = vadd.f32 %v1853, 1.0
    %v1855 = vrcp.pop %v1854
    %v1856 = vmul.f32 1.0, %v1855
    %v1857 = vtanh.pop %v1843
    %v1858 = vxor.u32 %v1844, 2147483648
    %v1859 = vmul.f32 %v1858, 1.442695
    %v1860 = vpow.pop %v1859
    %v1861 = vadd.f32 %v1860, 1.0
    %v1862 = vrcp.pop %v1861
    %v1863 = vmul.f32 1.0, %v1862
    %v1864 = vmul.f32 %v1856, %v1525
    %v1865 = vmul.f32 %v1850, %v1857
    %v1866 = vadd.f32 %v1864, %v1865
    %v1867 = vtanh.pop %v1866
    %v1868 = vmul.f32 %v1863, %v1867
    %1869 = vmatprep.subr.mxu0 %v523
    %1870 = vmatpush1.msra.mxu0 %v522
    %1871 = vmatprep.subr.mxu0 %v527
    %1872 = vmatpush1.msra.mxu0 %v526
    %1873 = vmatprep.subr.mxu0 %v531
    %1874 = vmatpush1.msra.mxu0 %v530
    %1875 = vmatprep.subr.mxu0 %v535
    %1876 = vmatpush1.msra.mxu0 %v534
    %1877 = vmatprep.subr.mxu0 %v539
    %1878 = vmatpush1.msra.mxu0 %v538
    %1879 = vmatprep.subr.mxu0 %v543
    %1880 = vmatpush1.msra.mxu0 %v542
    %1881 = vmatprep.subr.mxu0 %v547
    %1882 = vmatpush1.msra.mxu0 %v546
    %1883 = vmatprep.subr.mxu0 %v551
    %1884 = vmatpush1.msra.mxu0 %v550
    %1885 = vmatprep.subr.mxu0 %v555
    %1886 = vmatpush1.msra.mxu0 %v554
    %1887 = vmatprep.subr.mxu0 %v559
    %1888 = vmatpush1.msra.mxu0 %v558
    %1889 = vmatprep.subr.mxu0 %v563
    %1890 = vmatpush1.msra.mxu0 %v562
    %1891 = vmatprep.subr.mxu0 %v567
    %1892 = vmatpush1.msra.mxu0 %v566
    %1893 = vmatprep.subr.mxu0 %v571
    %1894 = vmatpush1.msra.mxu0 %v570
    %1895 = vmatprep.subr.mxu0 %v575
    %1896 = vmatpush1.msra.mxu0 %v574
    %1897 = vmatprep.subr.mxu0 %v579
    %1898 = vmatpush1.msra.mxu0 %v578
    %1899 = vmatprep.subr.mxu0 %v583
    %1900 = vmatpush1.msra.mxu0 %v582
    %1901 = vmatprep.subr.mxu0 %v587
    %1902 = vmatpush1.msra.mxu0 %v586
    %1903 = vmatprep.subr.mxu0 %v591
    %1904 = vmatpush1.msra.mxu0 %v590
    %1905 = vmatprep.subr.mxu0 %v595
    %1906 = vmatpush1.msra.mxu0 %v594
    %1907 = vmatprep.subr.mxu0 %v599
    %1908 = vmatpush1.msra.mxu0 %v598
    %1909 = vmatprep.subr.mxu0 %v603
    %1910 = vmatpush1.msra.mxu0 %v602
    %1911 = vmatprep.subr.mxu0 %v607
    %1912 = vmatpush1.msra.mxu0 %v606
    %1913 = vmatprep.subr.mxu0 %v611
    %1914 = vmatpush1.msra.mxu0 %v610
    %1915 = vmatprep.subr.mxu0 %v615
    %1916 = vmatpush1.msra.mxu0 %v614
    %1917 = vmatprep.subr.mxu0 %v619
    %1918 = vmatpush1.msra.mxu0 %v618
    %1919 = vmatprep.subr.mxu0 %v623
    %1920 = vmatpush1.msra.mxu0 %v622
    %1921 = vmatprep.subr.mxu0 %v627
    %1922 = vmatpush1.msra.mxu0 %v626
    %1923 = vmatprep.subr.mxu0 %v631
    %1924 = vmatpush1.msra.mxu0 %v630
    %1925 = vmatprep.subr.mxu0 %v635
    %1926 = vmatpush1.msra.mxu0 %v634
    %1927 = vmatprep.subr.mxu0 %v639
    %1928 = vmatpush1.msra.mxu0 %v638
    %1929 = vmatprep.subr.mxu0 %v643
    %1930 = vmatpush1.msra.mxu0 %v642
    %1931 = vmatprep.subr.mxu0 %v647
    %1932 = vmatpush1.msra.mxu0 %v646
    %1933 = vmatprep.mubr.f32.mxu0 %v1693
    %1934 = vmatmul.mubr.f32.gmra.mrb[0].mxu0 %v1868
    %v1935 = vpop.f32.mrb[0].mxu0
    %v1936 = vadd.f32 %v829, %v1935
    %v1937 = vpop.f32.mrb[0].mxu0
    %v1938 = vadd.f32 %v833, %v1937
    %1939 = vdwg.mxu0
    %1940 = vmatprep.subr.mxu0 %v525
    %1941 = vmatpush1.msra.mxu0 %v524
    %1942 = vmatprep.subr.mxu0 %v529
    %1943 = vmatpush1.msra.mxu0 %v528
    %1944 = vmatprep.subr.mxu0 %v533
    %1945 = vmatpush1.msra.mxu0 %v532
    %1946 = vmatprep.subr.mxu0 %v537
    %1947 = vmatpush1.msra.mxu0 %v536
    %1948 = vmatprep.subr.mxu0 %v541
    %1949 = vmatpush1.msra.mxu0 %v540
    %1950 = vmatprep.subr.mxu0 %v545
    %1951 = vmatpush1.msra.mxu0 %v544
    %1952 = vmatprep.subr.mxu0 %v549
    %1953 = vmatpush1.msra.mxu0 %v548
    %1954 = vmatprep.subr.mxu0 %v553
    %1955 = vmatpush1.msra.mxu0 %v552
    %1956 = vmatprep.subr.mxu0 %v557
    %1957 = vmatpush1.msra.mxu0 %v556
    %1958 = vmatprep.subr.mxu0 %v561
    %1959 = vmatpush1.msra.mxu0 %v560
    %1960 = vmatprep.subr.mxu0 %v565
    %1961 = vmatpush1.msra.mxu0 %v564
    %1962 = vmatprep.subr.mxu0 %v569
    %1963 = vmatpush1.msra.mxu0 %v568
    %1964 = vmatprep.subr.mxu0 %v573
    %1965 = vmatpush1.msra.mxu0 %v572
    %1966 = vmatprep.subr.mxu0 %v577
    %1967 = vmatpush1.msra.mxu0 %v576
    %1968 = vmatprep.subr.mxu0 %v581
    %1969 = vmatpush1.msra.mxu0 %v580
    %1970 = vmatprep.subr.mxu0 %v585
    %1971 = vmatpush1.msra.mxu0 %v584
    %1972 = vmatprep.subr.mxu0 %v589
    %1973 = vmatpush1.msra.mxu0 %v588
    %1974 = vmatprep.subr.mxu0 %v593
    %1975 = vmatpush1.msra.mxu0 %v592
    %1976 = vmatprep.subr.mxu0 %v597
    %1977 = vmatpush1.msra.mxu0 %v596
    %1978 = vmatprep.subr.mxu0 %v601
    %1979 = vmatpush1.msra.mxu0 %v600
    %1980 = vmatprep.subr.mxu0 %v605
    %1981 = vmatpush1.msra.mxu0 %v604
    %1982 = vmatprep.subr.mxu0 %v609
    %1983 = vmatpush1.msra.mxu0 %v608
    %1984 = vmatprep.subr.mxu0 %v613
    %1985 = vmatpush1.msra.mxu0 %v612
    %1986 = vmatprep.subr.mxu0 %v617
    %1987 = vmatpush1.msra.mxu0 %v616
    %1988 = vmatprep.subr.mxu0 %v621
    %1989 = vmatpush1.msra.mxu0 %v620
    %1990 = vmatprep.subr.mxu0 %v625
    %1991 = vmatpush1.msra.mxu0 %v624
    %1992 = vmatprep.subr.mxu0 %v629
    %1993 = vmatpush1.msra.mxu0 %v628
    %1994 = vmatprep.subr.mxu0 %v633
    %1995 = vmatpush1.msra.mxu0 %v632
    %1996 = vmatprep.subr.mxu0 %v637
    %1997 = vmatpush1.msra.mxu0 %v636
    %1998 = vmatprep.subr.mxu0 %v641
    %1999 = vmatpush1.msra.mxu0 %v640
    %2000 = vmatprep.subr.mxu0 %v645
    %2001 = vmatpush1.msra.mxu0 %v644
    %2002 = vmatprep.subr.mxu0 %v649
    %2003 = vmatpush1.msra.mxu0 %v648
    %2004 = vmatprep.mubr.f32.mxu0 %v1693
    %2005 = vmatmul.mubr.f32.gmra.mrb[0].mxu0 %v1868
    %v2006 = vpop.f32.mrb[0].mxu0
    %v2007 = vadd.f32 %v837, %v2006
    %v2008 = vpop.f32.mrb[0].mxu0
    %v2009 = vadd.f32 %v841, %v2008
    %2010 = vdwg.mxu0
    %v2011 = vxor.u32 %v1936, 2147483648
    %v2012 = vmul.f32 %v2011, 1.442695
    %v2013 = vpow.pop %v2012
    %v2014 = vadd.f32 %v2013, 1.0
    %v2015 = vrcp.pop %v2014
    %v2016 = vmul.f32 1.0, %v2015
    %v2017 = vxor.u32 %v1938, 2147483648
    %v2018 = vmul.f32 %v2017, 1.442695
    %v2019 = vpow.pop %v2018
    %v2020 = vadd.f32 %v2019, 1.0
    %v2021 = vrcp.pop %v2020
    %v2022 = vmul.f32 1.0, %v2021
    %v2023 = vtanh.pop %v2007
    %v2024 = vxor.u32 %v2009, 2147483648
    %v2025 = vmul.f32 %v2024, 1.442695
    %v2026 = vpow.pop %v2025
    %v2027 = vadd.f32 %v2026, 1.0
    %v2028 = vrcp.pop %v2027
    %v2029 = vmul.f32 1.0, %v2028
    %v2030 = vmul.f32 %v2022, %v1691
    %v2031 = vmul.f32 %v2016, %v2023
    %v2032 = vadd.f32 %v2030, %v2031
    %v2033 = vtanh.pop %v2032
    %v2034 = vmul.f32 %v2029, %v2033
    %s2035 = scalar_lea.vmem [#allocation2], 128
    %v2036 = vld [vmem:[%s2035] sm:$0xff]
    %v2037 = vld [vmem:[%s2035 + $0x8] sm:$0xff]
    %v2038 = vld [vmem:[%s2035 + $0x10] sm:$0xff]
    %v2039 = vld [vmem:[%s2035 + $0x18] sm:$0xff]
    %2040 = vmatprep.subr.mxu0 %v459
    %2041 = vmatpush1.msra.mxu0 %v458
    %2042 = vmatprep.subr.mxu0 %v463
    %2043 = vmatpush1.msra.mxu0 %v462
    %2044 = vmatprep.subr.mxu0 %v467
    %2045 = vmatpush1.msra.mxu0 %v466
    %2046 = vmatprep.subr.mxu0 %v471
    %2047 = vmatpush1.msra.mxu0 %v470
    %2048 = vmatprep.subr.mxu0 %v475
    %2049 = vmatpush1.msra.mxu0 %v474
    %2050 = vmatprep.subr.mxu0 %v479
    %2051 = vmatpush1.msra.mxu0 %v478
    %2052 = vmatprep.subr.mxu0 %v483
    %2053 = vmatpush1.msra.mxu0 %v482
    %2054 = vmatprep.subr.mxu0 %v487
    %2055 = vmatpush1.msra.mxu0 %v486
    %2056 = vmatprep.subr.mxu0 %v491
    %2057 = vmatpush1.msra.mxu0 %v490
    %2058 = vmatprep.subr.mxu0 %v495
    %2059 = vmatpush1.msra.mxu0 %v494
    %2060 = vmatprep.subr.mxu0 %v499
    %2061 = vmatpush1.msra.mxu0 %v498
    %2062 = vmatprep.subr.mxu0 %v503
    %2063 = vmatpush1.msra.mxu0 %v502
    %2064 = vmatprep.subr.mxu0 %v507
    %2065 = vmatpush1.msra.mxu0 %v506
    %2066 = vmatprep.subr.mxu0 %v511
    %2067 = vmatpush1.msra.mxu0 %v510
    %2068 = vmatprep.subr.mxu0 %v515
    %2069 = vmatpush1.msra.mxu0 %v514
    %2070 = vmatprep.subr.mxu0 %v519
    %2071 = vmatpush1.msra.mxu0 %v518
    %2072 = vmatprep.subr.mxu0 0.0
    %2073 = vmatpush1.msra.mxu0 0.0
    %2074 = vmatprep.subr.mxu0 0.0
    %2075 = vmatpush1.msra.mxu0 0.0
    %2076 = vmatprep.subr.mxu0 0.0
    %2077 = vmatpush1.msra.mxu0 0.0
    %2078 = vmatprep.subr.mxu0 0.0
    %2079 = vmatpush1.msra.mxu0 0.0
    %2080 = vmatprep.subr.mxu0 0.0
    %2081 = vmatpush1.msra.mxu0 0.0
    %2082 = vmatprep.subr.mxu0 0.0
    %2083 = vmatpush1.msra.mxu0 0.0
    %2084 = vmatprep.subr.mxu0 0.0
    %2085 = vmatpush1.msra.mxu0 0.0
    %2086 = vmatprep.subr.mxu0 0.0
    %2087 = vmatpush1.msra.mxu0 0.0
    %2088 = vmatprep.subr.mxu0 0.0
    %2089 = vmatpush1.msra.mxu0 0.0
    %2090 = vmatprep.subr.mxu0 0.0
    %2091 = vmatpush1.msra.mxu0 0.0
    %2092 = vmatprep.subr.mxu0 0.0
    %2093 = vmatpush1.msra.mxu0 0.0
    %2094 = vmatprep.subr.mxu0 0.0
    %2095 = vmatpush1.msra.mxu0 0.0
    %2096 = vmatprep.subr.mxu0 0.0
    %2097 = vmatpush1.msra.mxu0 0.0
    %2098 = vmatprep.subr.mxu0 0.0
    %2099 = vmatpush1.msra.mxu0 0.0
    %2100 = vmatprep.subr.mxu0 0.0
    %2101 = vmatpush1.msra.mxu0 0.0
    %2102 = vmatprep.subr.mxu0 0.0
    %2103 = vmatpush1.msra.mxu0 0.0
    %2104 = vmatprep.mubr.f32.mxu0 0.0
    %2105 = vmatmul.mubr.f32.gmra.mrb[0].mxu0 %v1868
    %v2106 = vpop.f32.mrb[0].mxu0
    %v2107 = vadd.f32 0.0, %v2106
    %v2108 = vpop.f32.mrb[0].mxu0
    %v2109 = vadd.f32 0.0, %v2108
    %2110 = vdwg.mxu0
    %2111 = vmatprep.subr.mxu0 %v461
    %2112 = vmatpush1.msra.mxu0 %v460
    %2113 = vmatprep.subr.mxu0 %v465
    %2114 = vmatpush1.msra.mxu0 %v464
    %2115 = vmatprep.subr.mxu0 %v469
    %2116 = vmatpush1.msra.mxu0 %v468
    %2117 = vmatprep.subr.mxu0 %v473
    %2118 = vmatpush1.msra.mxu0 %v472
    %2119 = vmatprep.subr.mxu0 %v477
    %2120 = vmatpush1.msra.mxu0 %v476
    %2121 = vmatprep.subr.mxu0 %v481
    %2122 = vmatpush1.msra.mxu0 %v480
    %2123 = vmatprep.subr.mxu0 %v485
    %2124 = vmatpush1.msra.mxu0 %v484
    %2125 = vmatprep.subr.mxu0 %v489
    %2126 = vmatpush1.msra.mxu0 %v488
    %2127 = vmatprep.subr.mxu0 %v493
    %2128 = vmatpush1.msra.mxu0 %v492
    %2129 = vmatprep.subr.mxu0 %v497
    %2130 = vmatpush1.msra.mxu0 %v496
    %2131 = vmatprep.subr.mxu0 %v501
    %2132 = vmatpush1.msra.mxu0 %v500
    %2133 = vmatprep.subr.mxu0 %v505
    %2134 = vmatpush1.msra.mxu0 %v504
    %2135 = vmatprep.subr.mxu0 %v509
    %2136 = vmatpush1.msra.mxu0 %v508
    %2137 = vmatprep.subr.mxu0 %v513
    %2138 = vmatpush1.msra.mxu0 %v512
    %2139 = vmatprep.subr.mxu0 %v517
    %2140 = vmatpush1.msra.mxu0 %v516
    %2141 = vmatprep.subr.mxu0 %v521
    %2142 = vmatpush1.msra.mxu0 %v520
    %2143 = vmatprep.subr.mxu0 0.0
    %2144 = vmatpush1.msra.mxu0 0.0
    %2145 = vmatprep.subr.mxu0 0.0
    %2146 = vmatpush1.msra.mxu0 0.0
    %2147 = vmatprep.subr.mxu0 0.0
    %2148 = vmatpush1.msra.mxu0 0.0
    %2149 = vmatprep.subr.mxu0 0.0
    %2150 = vmatpush1.msra.mxu0 0.0
    %2151 = vmatprep.subr.mxu0 0.0
    %2152 = vmatpush1.msra.mxu0 0.0
    %2153 = vmatprep.subr.mxu0 0.0
    %2154 = vmatpush1.msra.mxu0 0.0
    %2155 = vmatprep.subr.mxu0 0.0
    %2156 = vmatpush1.msra.mxu0 0.0
    %2157 = vmatprep.subr.mxu0 0.0
    %2158 = vmatpush1.msra.mxu0 0.0
    %2159 = vmatprep.subr.mxu0 0.0
    %2160 = vmatpush1.msra.mxu0 0.0
    %2161 = vmatprep.subr.mxu0 0.0
    %2162 = vmatpush1.msra.mxu0 0.0
    %2163 = vmatprep.subr.mxu0 0.0
    %2164 = vmatpush1.msra.mxu0 0.0
    %2165 = vmatprep.subr.mxu0 0.0
    %2166 = vmatpush1.msra.mxu0 0.0
    %2167 = vmatprep.subr.mxu0 0.0
    %2168 = vmatpush1.msra.mxu0 0.0
    %2169 = vmatprep.subr.mxu0 0.0
    %2170 = vmatpush1.msra.mxu0 0.0
    %2171 = vmatprep.subr.mxu0 0.0
    %2172 = vmatpush1.msra.mxu0 0.0
    %2173 = vmatprep.subr.mxu0 0.0
    %2174 = vmatpush1.msra.mxu0 0.0
    %2175 = vmatprep.mubr.f32.mxu0 0.0
    %2176 = vmatmul.mubr.f32.gmra.mrb[0].mxu0 %v1868
    %v2177 = vpop.f32.mrb[0].mxu0
    %v2178 = vadd.f32 0.0, %v2177
    %v2179 = vpop.f32.mrb[0].mxu0
    %v2180 = vadd.f32 0.0, %v2179
    %2181 = vdwg.mxu0
    %v2182 = vadd.f32 %v2036, %v2107
    %v2183 = vadd.f32 %v2037, %v2109
    %v2184 = vadd.f32 %v2038, %v2178
    %v2185 = vadd.f32 %v2039, %v2180
    %v2186 = vxor.u32 %v2182, 2147483648
    %v2187 = vmul.f32 %v2186, 1.442695
    %v2188 = vpow.pop %v2187
    %v2189 = vadd.f32 %v2188, 1.0
    %v2190 = vrcp.pop %v2189
    %v2191 = vmul.f32 1.0, %v2190
    %v2192 = vxor.u32 %v2183, 2147483648
    %v2193 = vmul.f32 %v2192, 1.442695
    %v2194 = vpow.pop %v2193
    %v2195 = vadd.f32 %v2194, 1.0
    %v2196 = vrcp.pop %v2195
    %v2197 = vmul.f32 1.0, %v2196
    %v2198 = vtanh.pop %v2184
    %v2199 = vxor.u32 %v2185, 2147483648
    %v2200 = vmul.f32 %v2199, 1.442695
    %v2201 = vpow.pop %v2200
    %v2202 = vadd.f32 %v2201, 1.0
    %v2203 = vrcp.pop %v2202
    %v2204 = vmul.f32 1.0, %v2203
    %v2205 = vmul.f32 %v2197, %v1866
    %v2206 = vmul.f32 %v2191, %v2198
    %v2207 = vadd.f32 %v2205, %v2206
    %v2208 = vtanh.pop %v2207
    %v2209 = vmul.f32 %v2204, %v2208
    %2210 = vmatprep.subr.mxu0 %v523
    %2211 = vmatpush1.msra.mxu0 %v522
    %2212 = vmatprep.subr.mxu0 %v527
    %2213 = vmatpush1.msra.mxu0 %v526
    %2214 = vmatprep.subr.mxu0 %v531
    %2215 = vmatpush1.msra.mxu0 %v530
    %2216 = vmatprep.subr.mxu0 %v535
    %2217 = vmatpush1.msra.mxu0 %v534
    %2218 = vmatprep.subr.mxu0 %v539
    %2219 = vmatpush1.msra.mxu0 %v538
    %2220 = vmatprep.subr.mxu0 %v543
    %2221 = vmatpush1.msra.mxu0 %v542
    %2222 = vmatprep.subr.mxu0 %v547
    %2223 = vmatpush1.msra.mxu0 %v546
    %2224 = vmatprep.subr.mxu0 %v551
    %2225 = vmatpush1.msra.mxu0 %v550
    %2226 = vmatprep.subr.mxu0 %v555
    %2227 = vmatpush1.msra.mxu0 %v554
    %2228 = vmatprep.subr.mxu0 %v559
    %2229 = vmatpush1.msra.mxu0 %v558
    %2230 = vmatprep.subr.mxu0 %v563
    %2231 = vmatpush1.msra.mxu0 %v562
    %2232 = vmatprep.subr.mxu0 %v567
    %2233 = vmatpush1.msra.mxu0 %v566
    %2234 = vmatprep.subr.mxu0 %v571
    %2235 = vmatpush1.msra.mxu0 %v570
    %2236 = vmatprep.subr.mxu0 %v575
    %2237 = vmatpush1.msra.mxu0 %v574
    %2238 = vmatprep.subr.mxu0 %v579
    %2239 = vmatpush1.msra.mxu0 %v578
    %2240 = vmatprep.subr.mxu0 %v583
    %2241 = vmatpush1.msra.mxu0 %v582
    %2242 = vmatprep.subr.mxu0 %v587
    %2243 = vmatpush1.msra.mxu0 %v586
    %2244 = vmatprep.subr.mxu0 %v591
    %2245 = vmatpush1.msra.mxu0 %v590
    %2246 = vmatprep.subr.mxu0 %v595
    %2247 = vmatpush1.msra.mxu0 %v594
    %2248 = vmatprep.subr.mxu0 %v599
    %2249 = vmatpush1.msra.mxu0 %v598
    %2250 = vmatprep.subr.mxu0 %v603
    %2251 = vmatpush1.msra.mxu0 %v602
    %2252 = vmatprep.subr.mxu0 %v607
    %2253 = vmatpush1.msra.mxu0 %v606
    %2254 = vmatprep.subr.mxu0 %v611
    %2255 = vmatpush1.msra.mxu0 %v610
    %2256 = vmatprep.subr.mxu0 %v615
    %2257 = vmatpush1.msra.mxu0 %v614
    %2258 = vmatprep.subr.mxu0 %v619
    %2259 = vmatpush1.msra.mxu0 %v618
    %2260 = vmatprep.subr.mxu0 %v623
    %2261 = vmatpush1.msra.mxu0 %v622
    %2262 = vmatprep.subr.mxu0 %v627
    %2263 = vmatpush1.msra.mxu0 %v626
    %2264 = vmatprep.subr.mxu0 %v631
    %2265 = vmatpush1.msra.mxu0 %v630
    %2266 = vmatprep.subr.mxu0 %v635
    %2267 = vmatpush1.msra.mxu0 %v634
    %2268 = vmatprep.subr.mxu0 %v639
    %2269 = vmatpush1.msra.mxu0 %v638
    %2270 = vmatprep.subr.mxu0 %v643
    %2271 = vmatpush1.msra.mxu0 %v642
    %2272 = vmatprep.subr.mxu0 %v647
    %2273 = vmatpush1.msra.mxu0 %v646
    %2274 = vmatprep.mubr.f32.mxu0 %v2034
    %2275 = vmatmul.mubr.f32.gmra.mrb[0].mxu0 %v2209
    %v2276 = vpop.f32.mrb[0].mxu0
    %v2277 = vadd.f32 %v829, %v2276
    %v2278 = vpop.f32.mrb[0].mxu0
    %v2279 = vadd.f32 %v833, %v2278
    %2280 = vdwg.mxu0
    %2281 = vmatprep.subr.mxu0 %v525
    %2282 = vmatpush1.msra.mxu0 %v524
    %2283 = vmatprep.subr.mxu0 %v529
    %2284 = vmatpush1.msra.mxu0 %v528
    %2285 = vmatprep.subr.mxu0 %v533
    %2286 = vmatpush1.msra.mxu0 %v532
    %2287 = vmatprep.subr.mxu0 %v537
    %2288 = vmatpush1.msra.mxu0 %v536
    %2289 = vmatprep.subr.mxu0 %v541
    %2290 = vmatpush1.msra.mxu0 %v540
    %2291 = vmatprep.subr.mxu0 %v545
    %2292 = vmatpush1.msra.mxu0 %v544
    %2293 = vmatprep.subr.mxu0 %v549
    %2294 = vmatpush1.msra.mxu0 %v548
    %2295 = vmatprep.subr.mxu0 %v553
    %2296 = vmatpush1.msra.mxu0 %v552
    %2297 = vmatprep.subr.mxu0 %v557
    %2298 = vmatpush1.msra.mxu0 %v556
    %2299 = vmatprep.subr.mxu0 %v561
    %2300 = vmatpush1.msra.mxu0 %v560
    %2301 = vmatprep.subr.mxu0 %v565
    %2302 = vmatpush1.msra.mxu0 %v564
    %2303 = vmatprep.subr.mxu0 %v569
    %2304 = vmatpush1.msra.mxu0 %v568
    %2305 = vmatprep.subr.mxu0 %v573
    %2306 = vmatpush1.msra.mxu0 %v572
    %2307 = vmatprep.subr.mxu0 %v577
    %2308 = vmatpush1.msra.mxu0 %v576
    %2309 = vmatprep.subr.mxu0 %v581
    %2310 = vmatpush1.msra.mxu0 %v580
    %2311 = vmatprep.subr.mxu0 %v585
    %2312 = vmatpush1.msra.mxu0 %v584
    %2313 = vmatprep.subr.mxu0 %v589
    %2314 = vmatpush1.msra.mxu0 %v588
    %2315 = vmatprep.subr.mxu0 %v593
    %2316 = vmatpush1.msra.mxu0 %v592
    %2317 = vmatprep.subr.mxu0 %v597
    %2318 = vmatpush1.msra.mxu0 %v596
    %2319 = vmatprep.subr.mxu0 %v601
    %2320 = vmatpush1.msra.mxu0 %v600
    %2321 = vmatprep.subr.mxu0 %v605
    %2322 = vmatpush1.msra.mxu0 %v604
    %2323 = vmatprep.subr.mxu0 %v609
    %2324 = vmatpush1.msra.mxu0 %v608
    %2325 = vmatprep.subr.mxu0 %v613
    %2326 = vmatpush1.msra.mxu0 %v612
    %2327 = vmatprep.subr.mxu0 %v617
    %2328 = vmatpush1.msra.mxu0 %v616
    %2329 = vmatprep.subr.mxu0 %v621
    %2330 = vmatpush1.msra.mxu0 %v620
    %2331 = vmatprep.subr.mxu0 %v625
    %2332 = vmatpush1.msra.mxu0 %v624
    %2333 = vmatprep.subr.mxu0 %v629
    %2334 = vmatpush1.msra.mxu0 %v628
    %2335 = vmatprep.subr.mxu0 %v633
    %2336 = vmatpush1.msra.mxu0 %v632
    %2337 = vmatprep.subr.mxu0 %v637
    %2338 = vmatpush1.msra.mxu0 %v636
    %2339 = vmatprep.subr.mxu0 %v641
    %2340 = vmatpush1.msra.mxu0 %v640
    %2341 = vmatprep.subr.mxu0 %v645
    %2342 = vmatpush1.msra.mxu0 %v644
    %2343 = vmatprep.subr.mxu0 %v649
    %2344 = vmatpush1.msra.mxu0 %v648
    %2345 = vmatprep.mubr.f32.mxu0 %v2034
    %2346 = vmatmul.mubr.f32.gmra.mrb[0].mxu0 %v2209
    %v2347 = vpop.f32.mrb[0].mxu0
    %v2348 = vadd.f32 %v837, %v2347
    %v2349 = vpop.f32.mrb[0].mxu0
    %v2350 = vadd.f32 %v841, %v2349
    %2351 = vdwg.mxu0
    %v2352 = vxor.u32 %v2277, 2147483648
    %v2353 = vmul.f32 %v2352, 1.442695
    %v2354 = vpow.pop %v2353
    %v2355 = vadd.f32 %v2354, 1.0
    %v2356 = vrcp.pop %v2355
    %v2357 = vmul.f32 1.0, %v2356
    %v2358 = vxor.u32 %v2279, 2147483648
    %v2359 = vmul.f32 %v2358, 1.442695
    %v2360 = vpow.pop %v2359
    %v2361 = vadd.f32 %v2360, 1.0
    %v2362 = vrcp.pop %v2361
    %v2363 = vmul.f32 1.0, %v2362
    %v2364 = vtanh.pop %v2348
    %v2365 = vxor.u32 %v2350, 2147483648
    %v2366 = vmul.f32 %v2365, 1.442695
    %v2367 = vpow.pop %v2366
    %v2368 = vadd.f32 %v2367, 1.0
    %v2369 = vrcp.pop %v2368
    %v2370 = vmul.f32 1.0, %v2369
    %v2371 = vmul.f32 %v2363, %v2032
    %v2372 = vmul.f32 %v2357, %v2364
    %v2373 = vadd.f32 %v2371, %v2372
    %v2374 = vtanh.pop %v2373
    %v2375 = vmul.f32 %v2370, %v2374
    %s2376 = scalar_lea.vmem [#allocation2], 160
    %v2377 = vld [vmem:[%s2376] sm:$0xff]
    %v2378 = vld [vmem:[%s2376 + $0x8] sm:$0xff]
    %v2379 = vld [vmem:[%s2376 + $0x10] sm:$0xff]
    %v2380 = vld [vmem:[%s2376 + $0x18] sm:$0xff]
    %2381 = vmatprep.subr.mxu0 %v459
    %2382 = vmatpush1.msra.mxu0 %v458
    %2383 = vmatprep.subr.mxu0 %v463
    %2384 = vmatpush1.msra.mxu0 %v462
    %2385 = vmatprep.subr.mxu0 %v467
    %2386 = vmatpush1.msra.mxu0 %v466
    %2387 = vmatprep.subr.mxu0 %v471
    %2388 = vmatpush1.msra.mxu0 %v470
    %2389 = vmatprep.subr.mxu0 %v475
    %2390 = vmatpush1.msra.mxu0 %v474
    %2391 = vmatprep.subr.mxu0 %v479
    %2392 = vmatpush1.msra.mxu0 %v478
    %2393 = vmatprep.subr.mxu0 %v483
    %2394 = vmatpush1.msra.mxu0 %v482
    %2395 = vmatprep.subr.mxu0 %v487
    %2396 = vmatpush1.msra.mxu0 %v486
    %2397 = vmatprep.subr.mxu0 %v491
    %2398 = vmatpush1.msra.mxu0 %v490
    %2399 = vmatprep.subr.mxu0 %v495
    %2400 = vmatpush1.msra.mxu0 %v494
    %2401 = vmatprep.subr.mxu0 %v499
    %2402 = vmatpush1.msra.mxu0 %v498
    %2403 = vmatprep.subr.mxu0 %v503
    %2404 = vmatpush1.msra.mxu0 %v502
    %2405 = vmatprep.subr.mxu0 %v507
    %2406 = vmatpush1.msra.mxu0 %v506
    %2407 = vmatprep.subr.mxu0 %v511
    %2408 = vmatpush1.msra.mxu0 %v510
    %2409 = vmatprep.subr.mxu0 %v515
    %2410 = vmatpush1.msra.mxu0 %v514
    %2411 = vmatprep.subr.mxu0 %v519
    %2412 = vmatpush1.msra.mxu0 %v518
    %2413 = vmatprep.subr.mxu0 0.0
    %2414 = vmatpush1.msra.mxu0 0.0
    %2415 = vmatprep.subr.mxu0 0.0
    %2416 = vmatpush1.msra.mxu0 0.0
    %2417 = vmatprep.subr.mxu0 0.0
    %2418 = vmatpush1.msra.mxu0 0.0
    %2419 = vmatprep.subr.mxu0 0.0
    %2420 = vmatpush1.msra.mxu0 0.0
    %2421 = vmatprep.subr.mxu0 0.0
    %2422 = vmatpush1.msra.mxu0 0.0
    %2423 = vmatprep.subr.mxu0 0.0
    %2424 = vmatpush1.msra.mxu0 0.0
    %2425 = vmatprep.subr.mxu0 0.0
    %2426 = vmatpush1.msra.mxu0 0.0
    %2427 = vmatprep.subr.mxu0 0.0
    %2428 = vmatpush1.msra.mxu0 0.0
    %2429 = vmatprep.subr.mxu0 0.0
    %2430 = vmatpush1.msra.mxu0 0.0
    %2431 = vmatprep.subr.mxu0 0.0
    %2432 = vmatpush1.msra.mxu0 0.0
    %2433 = vmatprep.subr.mxu0 0.0
    %2434 = vmatpush1.msra.mxu0 0.0
    %2435 = vmatprep.subr.mxu0 0.0
    %2436 = vmatpush1.msra.mxu0 0.0
    %2437 = vmatprep.subr.mxu0 0.0
    %2438 = vmatpush1.msra.mxu0 0.0
    %2439 = vmatprep.subr.mxu0 0.0
    %2440 = vmatpush1.msra.mxu0 0.0
    %2441 = vmatprep.subr.mxu0 0.0
    %2442 = vmatpush1.msra.mxu0 0.0
    %2443 = vmatprep.subr.mxu0 0.0
    %2444 = vmatpush1.msra.mxu0 0.0
    %2445 = vmatprep.mubr.f32.mxu0 0.0
    %2446 = vmatmul.mubr.f32.gmra.mrb[0].mxu0 %v2209
    %v2447 = vpop.f32.mrb[0].mxu0
    %v2448 = vadd.f32 0.0, %v2447
    %v2449 = vpop.f32.mrb[0].mxu0
    %v2450 = vadd.f32 0.0, %v2449
    %2451 = vdwg.mxu0
    %2452 = vmatprep.subr.mxu0 %v461
    %2453 = vmatpush1.msra.mxu0 %v460
    %2454 = vmatprep.subr.mxu0 %v465
    %2455 = vmatpush1.msra.mxu0 %v464
    %2456 = vmatprep.subr.mxu0 %v469
    %2457 = vmatpush1.msra.mxu0 %v468
    %2458 = vmatprep.subr.mxu0 %v473
    %2459 = vmatpush1.msra.mxu0 %v472
    %2460 = vmatprep.subr.mxu0 %v477
    %2461 = vmatpush1.msra.mxu0 %v476
    %2462 = vmatprep.subr.mxu0 %v481
    %2463 = vmatpush1.msra.mxu0 %v480
    %2464 = vmatprep.subr.mxu0 %v485
    %2465 = vmatpush1.msra.mxu0 %v484
    %2466 = vmatprep.subr.mxu0 %v489
    %2467 = vmatpush1.msra.mxu0 %v488
    %2468 = vmatprep.subr.mxu0 %v493
    %2469 = vmatpush1.msra.mxu0 %v492
    %2470 = vmatprep.subr.mxu0 %v497
    %2471 = vmatpush1.msra.mxu0 %v496
    %2472 = vmatprep.subr.mxu0 %v501
    %2473 = vmatpush1.msra.mxu0 %v500
    %2474 = vmatprep.subr.mxu0 %v505
    %2475 = vmatpush1.msra.mxu0 %v504
    %2476 = vmatprep.subr.mxu0 %v509
    %2477 = vmatpush1.msra.mxu0 %v508
    %2478 = vmatprep.subr.mxu0 %v513
    %2479 = vmatpush1.msra.mxu0 %v512
    %2480 = vmatprep.subr.mxu0 %v517
    %2481 = vmatpush1.msra.mxu0 %v516
    %2482 = vmatprep.subr.mxu0 %v521
    %2483 = vmatpush1.msra.mxu0 %v520
    %2484 = vmatprep.subr.mxu0 0.0
    %2485 = vmatpush1.msra.mxu0 0.0
    %2486 = vmatprep.subr.mxu0 0.0
    %2487 = vmatpush1.msra.mxu0 0.0
    %2488 = vmatprep.subr.mxu0 0.0
    %2489 = vmatpush1.msra.mxu0 0.0
    %2490 = vmatprep.subr.mxu0 0.0
    %2491 = vmatpush1.msra.mxu0 0.0
    %2492 = vmatprep.subr.mxu0 0.0
    %2493 = vmatpush1.msra.mxu0 0.0
    %2494 = vmatprep.subr.mxu0 0.0
    %2495 = vmatpush1.msra.mxu0 0.0
    %2496 = vmatprep.subr.mxu0 0.0
    %2497 = vmatpush1.msra.mxu0 0.0
    %2498 = vmatprep.subr.mxu0 0.0
    %2499 = vmatpush1.msra.mxu0 0.0
    %2500 = vmatprep.subr.mxu0 0.0
    %2501 = vmatpush1.msra.mxu0 0.0
    %2502 = vmatprep.subr.mxu0 0.0
    %2503 = vmatpush1.msra.mxu0 0.0
    %2504 = vmatprep.subr.mxu0 0.0
    %2505 = vmatpush1.msra.mxu0 0.0
    %2506 = vmatprep.subr.mxu0 0.0
    %2507 = vmatpush1.msra.mxu0 0.0
    %2508 = vmatprep.subr.mxu0 0.0
    %2509 = vmatpush1.msra.mxu0 0.0
    %2510 = vmatprep.subr.mxu0 0.0
    %2511 = vmatpush1.msra.mxu0 0.0
    %2512 = vmatprep.subr.mxu0 0.0
    %2513 = vmatpush1.msra.mxu0 0.0
    %2514 = vmatprep.subr.mxu0 0.0
    %2515 = vmatpush1.msra.mxu0 0.0
    %2516 = vmatprep.mubr.f32.mxu0 0.0
    %2517 = vmatmul.mubr.f32.gmra.mrb[0].mxu0 %v2209
    %v2518 = vpop.f32.mrb[0].mxu0
    %v2519 = vadd.f32 0.0, %v2518
    %v2520 = vpop.f32.mrb[0].mxu0
    %v2521 = vadd.f32 0.0, %v2520
    %2522 = vdwg.mxu0
    %v2523 = vadd.f32 %v2377, %v2448
    %v2524 = vadd.f32 %v2378, %v2450
    %v2525 = vadd.f32 %v2379, %v2519
    %v2526 = vadd.f32 %v2380, %v2521
    %v2527 = vxor.u32 %v2523, 2147483648
    %v2528 = vmul.f32 %v2527, 1.442695
    %v2529 = vpow.pop %v2528
    %v2530 = vadd.f32 %v2529, 1.0
    %v2531 = vrcp.pop %v2530
    %v2532 = vmul.f32 1.0, %v2531
    %v2533 = vxor.u32 %v2524, 2147483648
    %v2534 = vmul.f32 %v2533, 1.442695
    %v2535 = vpow.pop %v2534
    %v2536 = vadd.f32 %v2535, 1.0
    %v2537 = vrcp.pop %v2536
    %v2538 = vmul.f32 1.0, %v2537
    %v2539 = vtanh.pop %v2525
    %v2540 = vxor.u32 %v2526, 2147483648
    %v2541 = vmul.f32 %v2540, 1.442695
    %v2542 = vpow.pop %v2541
    %v2543 = vadd.f32 %v2542, 1.0
    %v2544 = vrcp.pop %v2543
    %v2545 = vmul.f32 1.0, %v2544
    %v2546 = vmul.f32 %v2538, %v2207
    %v2547 = vmul.f32 %v2532, %v2539
    %v2548 = vadd.f32 %v2546, %v2547
    %v2549 = vtanh.pop %v2548
    %v2550 = vmul.f32 %v2545, %v2549
    %2551 = vmatprep.subr.mxu0 %v523
    %2552 = vmatpush1.msra.mxu0 %v522
    %2553 = vmatprep.subr.mxu0 %v527
    %2554 = vmatpush1.msra.mxu0 %v526
    %2555 = vmatprep.subr.mxu0 %v531
    %2556 = vmatpush1.msra.mxu0 %v530
    %2557 = vmatprep.subr.mxu0 %v535
    %2558 = vmatpush1.msra.mxu0 %v534
    %2559 = vmatprep.subr.mxu0 %v539
    %2560 = vmatpush1.msra.mxu0 %v538
    %2561 = vmatprep.subr.mxu0 %v543
    %2562 = vmatpush1.msra.mxu0 %v542
    %2563 = vmatprep.subr.mxu0 %v547
    %2564 = vmatpush1.msra.mxu0 %v546
    %2565 = vmatprep.subr.mxu0 %v551
    %2566 = vmatpush1.msra.mxu0 %v550
    %2567 = vmatprep.subr.mxu0 %v555
    %2568 = vmatpush1.msra.mxu0 %v554
    %2569 = vmatprep.subr.mxu0 %v559
    %2570 = vmatpush1.msra.mxu0 %v558
    %2571 = vmatprep.subr.mxu0 %v563
    %2572 = vmatpush1.msra.mxu0 %v562
    %2573 = vmatprep.subr.mxu0 %v567
    %2574 = vmatpush1.msra.mxu0 %v566
    %2575 = vmatprep.subr.mxu0 %v571
    %2576 = vmatpush1.msra.mxu0 %v570
    %2577 = vmatprep.subr.mxu0 %v575
    %2578 = vmatpush1.msra.mxu0 %v574
    %2579 = vmatprep.subr.mxu0 %v579
    %2580 = vmatpush1.msra.mxu0 %v578
    %2581 = vmatprep.subr.mxu0 %v583
    %2582 = vmatpush1.msra.mxu0 %v582
    %2583 = vmatprep.subr.mxu0 %v587
    %2584 = vmatpush1.msra.mxu0 %v586
    %2585 = vmatprep.subr.mxu0 %v591
    %2586 = vmatpush1.msra.mxu0 %v590
    %2587 = vmatprep.subr.mxu0 %v595
    %2588 = vmatpush1.msra.mxu0 %v594
    %2589 = vmatprep.subr.mxu0 %v599
    %2590 = vmatpush1.msra.mxu0 %v598
    %2591 = vmatprep.subr.mxu0 %v603
    %2592 = vmatpush1.msra.mxu0 %v602
    %2593 = vmatprep.subr.mxu0 %v607
    %2594 = vmatpush1.msra.mxu0 %v606
    %2595 = vmatprep.subr.mxu0 %v611
    %2596 = vmatpush1.msra.mxu0 %v610
    %2597 = vmatprep.subr.mxu0 %v615
    %2598 = vmatpush1.msra.mxu0 %v614
    %2599 = vmatprep.subr.mxu0 %v619
    %2600 = vmatpush1.msra.mxu0 %v618
    %2601 = vmatprep.subr.mxu0 %v623
    %2602 = vmatpush1.msra.mxu0 %v622
    %2603 = vmatprep.subr.mxu0 %v627
    %2604 = vmatpush1.msra.mxu0 %v626
    %2605 = vmatprep.subr.mxu0 %v631
    %2606 = vmatpush1.msra.mxu0 %v630
    %2607 = vmatprep.subr.mxu0 %v635
    %2608 = vmatpush1.msra.mxu0 %v634
    %2609 = vmatprep.subr.mxu0 %v639
    %2610 = vmatpush1.msra.mxu0 %v638
    %2611 = vmatprep.subr.mxu0 %v643
    %2612 = vmatpush1.msra.mxu0 %v642
    %2613 = vmatprep.subr.mxu0 %v647
    %2614 = vmatpush1.msra.mxu0 %v646
    %2615 = vmatprep.mubr.f32.mxu0 %v2375
    %2616 = vmatmul.mubr.f32.gmra.mrb[0].mxu0 %v2550
    %v2617 = vpop.f32.mrb[0].mxu0
    %v2618 = vadd.f32 %v829, %v2617
    %v2619 = vpop.f32.mrb[0].mxu0
    %v2620 = vadd.f32 %v833, %v2619
    %2621 = vdwg.mxu0
    %2622 = vmatprep.subr.mxu0 %v525
    %2623 = vmatpush1.msra.mxu0 %v524
    %2624 = vmatprep.subr.mxu0 %v529
    %2625 = vmatpush1.msra.mxu0 %v528
    %2626 = vmatprep.subr.mxu0 %v533
    %2627 = vmatpush1.msra.mxu0 %v532
    %2628 = vmatprep.subr.mxu0 %v537
    %2629 = vmatpush1.msra.mxu0 %v536
    %2630 = vmatprep.subr.mxu0 %v541
    %2631 = vmatpush1.msra.mxu0 %v540
    %2632 = vmatprep.subr.mxu0 %v545
    %2633 = vmatpush1.msra.mxu0 %v544
    %2634 = vmatprep.subr.mxu0 %v549
    %2635 = vmatpush1.msra.mxu0 %v548
    %2636 = vmatprep.subr.mxu0 %v553
    %2637 = vmatpush1.msra.mxu0 %v552
    %2638 = vmatprep.subr.mxu0 %v557
    %2639 = vmatpush1.msra.mxu0 %v556
    %2640 = vmatprep.subr.mxu0 %v561
    %2641 = vmatpush1.msra.mxu0 %v560
    %2642 = vmatprep.subr.mxu0 %v565
    %2643 = vmatpush1.msra.mxu0 %v564
    %2644 = vmatprep.subr.mxu0 %v569
    %2645 = vmatpush1.msra.mxu0 %v568
    %2646 = vmatprep.subr.mxu0 %v573
    %2647 = vmatpush1.msra.mxu0 %v572
    %2648 = vmatprep.subr.mxu0 %v577
    %2649 = vmatpush1.msra.mxu0 %v576
    %2650 = vmatprep.subr.mxu0 %v581
    %2651 = vmatpush1.msra.mxu0 %v580
    %2652 = vmatprep.subr.mxu0 %v585
    %2653 = vmatpush1.msra.mxu0 %v584
    %2654 = vmatprep.subr.mxu0 %v589
    %2655 = vmatpush1.msra.mxu0 %v588
    %2656 = vmatprep.subr.mxu0 %v593
    %2657 = vmatpush1.msra.mxu0 %v592
    %2658 = vmatprep.subr.mxu0 %v597
    %2659 = vmatpush1.msra.mxu0 %v596
    %2660 = vmatprep.subr.mxu0 %v601
    %2661 = vmatpush1.msra.mxu0 %v600
    %2662 = vmatprep.subr.mxu0 %v605
    %2663 = vmatpush1.msra.mxu0 %v604
    %2664 = vmatprep.subr.mxu0 %v609
    %2665 = vmatpush1.msra.mxu0 %v608
    %2666 = vmatprep.subr.mxu0 %v613
    %2667 = vmatpush1.msra.mxu0 %v612
    %2668 = vmatprep.subr.mxu0 %v617
    %2669 = vmatpush1.msra.mxu0 %v616
    %2670 = vmatprep.subr.mxu0 %v621
    %2671 = vmatpush1.msra.mxu0 %v620
    %2672 = vmatprep.subr.mxu0 %v625
    %2673 = vmatpush1.msra.mxu0 %v624
    %2674 = vmatprep.subr.mxu0 %v629
    %2675 = vmatpush1.msra.mxu0 %v628
    %2676 = vmatprep.subr.mxu0 %v633
    %2677 = vmatpush1.msra.mxu0 %v632
    %2678 = vmatprep.subr.mxu0 %v637
    %2679 = vmatpush1.msra.mxu0 %v636
    %2680 = vmatprep.subr.mxu0 %v641
    %2681 = vmatpush1.msra.mxu0 %v640
    %2682 = vmatprep.subr.mxu0 %v645
    %2683 = vmatpush1.msra.mxu0 %v644
    %2684 = vmatprep.subr.mxu0 %v649
    %2685 = vmatpush1.msra.mxu0 %v648
    %2686 = vmatprep.mubr.f32.mxu0 %v2375
    %2687 = vmatmul.mubr.f32.gmra.mrb[0].mxu0 %v2550
    %v2688 = vpop.f32.mrb[0].mxu0
    %v2689 = vadd.f32 %v837, %v2688
    %v2690 = vpop.f32.mrb[0].mxu0
    %v2691 = vadd.f32 %v841, %v2690
    %2692 = vdwg.mxu0
    %v2693 = vxor.u32 %v2618, 2147483648
    %v2694 = vmul.f32 %v2693, 1.442695
    %v2695 = vpow.pop %v2694
    %v2696 = vadd.f32 %v2695, 1.0
    %v2697 = vrcp.pop %v2696
    %v2698 = vmul.f32 1.0, %v2697
    %v2699 = vxor.u32 %v2620, 2147483648
    %v2700 = vmul.f32 %v2699, 1.442695
    %v2701 = vpow.pop %v2700
    %v2702 = vadd.f32 %v2701, 1.0
    %v2703 = vrcp.pop %v2702
    %v2704 = vmul.f32 1.0, %v2703
    %v2705 = vtanh.pop %v2689
    %v2706 = vxor.u32 %v2691, 2147483648
    %v2707 = vmul.f32 %v2706, 1.442695
    %v2708 = vpow.pop %v2707
    %v2709 = vadd.f32 %v2708, 1.0
    %v2710 = vrcp.pop %v2709
    %v2711 = vmul.f32 1.0, %v2710
    %v2712 = vmul.f32 %v2704, %v2373
    %v2713 = vmul.f32 %v2698, %v2705
    %v2714 = vadd.f32 %v2712, %v2713
    %v2715 = vtanh.pop %v2714
    %v2716 = vmul.f32 %v2711, %v2715
    %s2717 = scalar_lea.vmem [#allocation2], 192
    %v2718 = vld [vmem:[%s2717] sm:$0xff]
    %v2719 = vld [vmem:[%s2717 + $0x8] sm:$0xff]
    %v2720 = vld [vmem:[%s2717 + $0x10] sm:$0xff]
    %v2721 = vld [vmem:[%s2717 + $0x18] sm:$0xff]
    %2722 = vmatprep.subr.mxu0 %v459
    %2723 = vmatpush1.msra.mxu0 %v458
    %2724 = vmatprep.subr.mxu0 %v463
    %2725 = vmatpush1.msra.mxu0 %v462
    %2726 = vmatprep.subr.mxu0 %v467
    %2727 = vmatpush1.msra.mxu0 %v466
    %2728 = vmatprep.subr.mxu0 %v471
    %2729 = vmatpush1.msra.mxu0 %v470
    %2730 = vmatprep.subr.mxu0 %v475
    %2731 = vmatpush1.msra.mxu0 %v474
    %2732 = vmatprep.subr.mxu0 %v479
    %2733 = vmatpush1.msra.mxu0 %v478
    %2734 = vmatprep.subr.mxu0 %v483
    %2735 = vmatpush1.msra.mxu0 %v482
    %2736 = vmatprep.subr.mxu0 %v487
    %2737 = vmatpush1.msra.mxu0 %v486
    %2738 = vmatprep.subr.mxu0 %v491
    %2739 = vmatpush1.msra.mxu0 %v490
    %2740 = vmatprep.subr.mxu0 %v495
    %2741 = vmatpush1.msra.mxu0 %v494
    %2742 = vmatprep.subr.mxu0 %v499
    %2743 = vmatpush1.msra.mxu0 %v498
    %2744 = vmatprep.subr.mxu0 %v503
    %2745 = vmatpush1.msra.mxu0 %v502
    %2746 = vmatprep.subr.mxu0 %v507
    %2747 = vmatpush1.msra.mxu0 %v506
    %2748 = vmatprep.subr.mxu0 %v511
    %2749 = vmatpush1.msra.mxu0 %v510
    %2750 = vmatprep.subr.mxu0 %v515
    %2751 = vmatpush1.msra.mxu0 %v514
    %2752 = vmatprep.subr.mxu0 %v519
    %2753 = vmatpush1.msra.mxu0 %v518
    %2754 = vmatprep.subr.mxu0 0.0
    %2755 = vmatpush1.msra.mxu0 0.0
    %2756 = vmatprep.subr.mxu0 0.0
    %2757 = vmatpush1.msra.mxu0 0.0
    %2758 = vmatprep.subr.mxu0 0.0
    %2759 = vmatpush1.msra.mxu0 0.0
    %2760 = vmatprep.subr.mxu0 0.0
    %2761 = vmatpush1.msra.mxu0 0.0
    %2762 = vmatprep.subr.mxu0 0.0
    %2763 = vmatpush1.msra.mxu0 0.0
    %2764 = vmatprep.subr.mxu0 0.0
    %2765 = vmatpush1.msra.mxu0 0.0
    %2766 = vmatprep.subr.mxu0 0.0
    %2767 = vmatpush1.msra.mxu0 0.0
    %2768 = vmatprep.subr.mxu0 0.0
    %2769 = vmatpush1.msra.mxu0 0.0
    %2770 = vmatprep.subr.mxu0 0.0
    %2771 = vmatpush1.msra.mxu0 0.0
    %2772 = vmatprep.subr.mxu0 0.0
    %2773 = vmatpush1.msra.mxu0 0.0
    %2774 = vmatprep.subr.mxu0 0.0
    %2775 = vmatpush1.msra.mxu0 0.0
    %2776 = vmatprep.subr.mxu0 0.0
    %2777 = vmatpush1.msra.mxu0 0.0
    %2778 = vmatprep.subr.mxu0 0.0
    %2779 = vmatpush1.msra.mxu0 0.0
    %2780 = vmatprep.subr.mxu0 0.0
    %2781 = vmatpush1.msra.mxu0 0.0
    %2782 = vmatprep.subr.mxu0 0.0
    %2783 = vmatpush1.msra.mxu0 0.0
    %2784 = vmatprep.subr.mxu0 0.0
    %2785 = vmatpush1.msra.mxu0 0.0
    %2786 = vmatprep.mubr.f32.mxu0 0.0
    %2787 = vmatmul.mubr.f32.gmra.mrb[0].mxu0 %v2550
    %v2788 = vpop.f32.mrb[0].mxu0
    %v2789 = vadd.f32 0.0, %v2788
    %v2790 = vpop.f32.mrb[0].mxu0
    %v2791 = vadd.f32 0.0, %v2790
    %2792 = vdwg.mxu0
    %2793 = vmatprep.subr.mxu0 %v461
    %2794 = vmatpush1.msra.mxu0 %v460
    %2795 = vmatprep.subr.mxu0 %v465
    %2796 = vmatpush1.msra.mxu0 %v464
    %2797 = vmatprep.subr.mxu0 %v469
    %2798 = vmatpush1.msra.mxu0 %v468
    %2799 = vmatprep.subr.mxu0 %v473
    %2800 = vmatpush1.msra.mxu0 %v472
    %2801 = vmatprep.subr.mxu0 %v477
    %2802 = vmatpush1.msra.mxu0 %v476
    %2803 = vmatprep.subr.mxu0 %v481
    %2804 = vmatpush1.msra.mxu0 %v480
    %2805 = vmatprep.subr.mxu0 %v485
    %2806 = vmatpush1.msra.mxu0 %v484
    %2807 = vmatprep.subr.mxu0 %v489
    %2808 = vmatpush1.msra.mxu0 %v488
    %2809 = vmatprep.subr.mxu0 %v493
    %2810 = vmatpush1.msra.mxu0 %v492
    %2811 = vmatprep.subr.mxu0 %v497
    %2812 = vmatpush1.msra.mxu0 %v496
    %2813 = vmatprep.subr.mxu0 %v501
    %2814 = vmatpush1.msra.mxu0 %v500
    %2815 = vmatprep.subr.mxu0 %v505
    %2816 = vmatpush1.msra.mxu0 %v504
    %2817 = vmatprep.subr.mxu0 %v509
    %2818 = vmatpush1.msra.mxu0 %v508
    %2819 = vmatprep.subr.mxu0 %v513
    %2820 = vmatpush1.msra.mxu0 %v512
    %2821 = vmatprep.subr.mxu0 %v517
    %2822 = vmatpush1.msra.mxu0 %v516
    %2823 = vmatprep.subr.mxu0 %v521
    %2824 = vmatpush1.msra.mxu0 %v520
    %2825 = vmatprep.subr.mxu0 0.0
    %2826 = vmatpush1.msra.mxu0 0.0
    %2827 = vmatprep.subr.mxu0 0.0
    %2828 = vmatpush1.msra.mxu0 0.0
    %2829 = vmatprep.subr.mxu0 0.0
    %2830 = vmatpush1.msra.mxu0 0.0
    %2831 = vmatprep.subr.mxu0 0.0
    %2832 = vmatpush1.msra.mxu0 0.0
    %2833 = vmatprep.subr.mxu0 0.0
    %2834 = vmatpush1.msra.mxu0 0.0
    %2835 = vmatprep.subr.mxu0 0.0
    %2836 = vmatpush1.msra.mxu0 0.0
    %2837 = vmatprep.subr.mxu0 0.0
    %2838 = vmatpush1.msra.mxu0 0.0
    %2839 = vmatprep.subr.mxu0 0.0
    %2840 = vmatpush1.msra.mxu0 0.0
    %2841 = vmatprep.subr.mxu0 0.0
    %2842 = vmatpush1.msra.mxu0 0.0
    %2843 = vmatprep.subr.mxu0 0.0
    %2844 = vmatpush1.msra.mxu0 0.0
    %2845 = vmatprep.subr.mxu0 0.0
    %2846 = vmatpush1.msra.mxu0 0.0
    %2847 = vmatprep.subr.mxu0 0.0
    %2848 = vmatpush1.msra.mxu0 0.0
    %2849 = vmatprep.subr.mxu0 0.0
    %2850 = vmatpush1.msra.mxu0 0.0
    %2851 = vmatprep.subr.mxu0 0.0
    %2852 = vmatpush1.msra.mxu0 0.0
    %2853 = vmatprep.subr.mxu0 0.0
    %2854 = vmatpush1.msra.mxu0 0.0
    %2855 = vmatprep.subr.mxu0 0.0
    %2856 = vmatpush1.msra.mxu0 0.0
    %2857 = vmatprep.mubr.f32.mxu0 0.0
    %2858 = vmatmul.mubr.f32.gmra.mrb[0].mxu0 %v2550
    %v2859 = vpop.f32.mrb[0].mxu0
    %v2860 = vadd.f32 0.0, %v2859
    %v2861 = vpop.f32.mrb[0].mxu0
    %v2862 = vadd.f32 0.0, %v2861
    %2863 = vdwg.mxu0
    %v2864 = vadd.f32 %v2718, %v2789
    %v2865 = vadd.f32 %v2719, %v2791
    %v2866 = vadd.f32 %v2720, %v2860
    %v2867 = vadd.f32 %v2721, %v2862
    %v2868 = vxor.u32 %v2864, 2147483648
    %v2869 = vmul.f32 %v2868, 1.442695
    %v2870 = vpow.pop %v2869
    %v2871 = vadd.f32 %v2870, 1.0
    %v2872 = vrcp.pop %v2871
    %v2873 = vmul.f32 1.0, %v2872
    %v2874 = vxor.u32 %v2865, 2147483648
    %v2875 = vmul.f32 %v2874, 1.442695
    %v2876 = vpow.pop %v2875
    %v2877 = vadd.f32 %v2876, 1.0
    %v2878 = vrcp.pop %v2877
    %v2879 = vmul.f32 1.0, %v2878
    %v2880 = vtanh.pop %v2866
    %v2881 = vxor.u32 %v2867, 2147483648
    %v2882 = vmul.f32 %v2881, 1.442695
    %v2883 = vpow.pop %v2882
    %v2884 = vadd.f32 %v2883, 1.0
    %v2885 = vrcp.pop %v2884
    %v2886 = vmul.f32 1.0, %v2885
    %v2887 = vmul.f32 %v2879, %v2548
    %v2888 = vmul.f32 %v2873, %v2880
    %v2889 = vadd.f32 %v2887, %v2888
    %v2890 = vtanh.pop %v2889
    %v2891 = vmul.f32 %v2886, %v2890
    %2892 = vmatprep.subr.mxu0 %v523
    %2893 = vmatpush1.msra.mxu0 %v522
    %2894 = vmatprep.subr.mxu0 %v527
    %2895 = vmatpush1.msra.mxu0 %v526
    %2896 = vmatprep.subr.mxu0 %v531
    %2897 = vmatpush1.msra.mxu0 %v530
    %2898 = vmatprep.subr.mxu0 %v535
    %2899 = vmatpush1.msra.mxu0 %v534
    %2900 = vmatprep.subr.mxu0 %v539
    %2901 = vmatpush1.msra.mxu0 %v538
    %2902 = vmatprep.subr.mxu0 %v543
    %2903 = vmatpush1.msra.mxu0 %v542
    %2904 = vmatprep.subr.mxu0 %v547
    %2905 = vmatpush1.msra.mxu0 %v546
    %2906 = vmatprep.subr.mxu0 %v551
    %2907 = vmatpush1.msra.mxu0 %v550
    %2908 = vmatprep.subr.mxu0 %v555
    %2909 = vmatpush1.msra.mxu0 %v554
    %2910 = vmatprep.subr.mxu0 %v559
    %2911 = vmatpush1.msra.mxu0 %v558
    %2912 = vmatprep.subr.mxu0 %v563
    %2913 = vmatpush1.msra.mxu0 %v562
    %2914 = vmatprep.subr.mxu0 %v567
    %2915 = vmatpush1.msra.mxu0 %v566
    %2916 = vmatprep.subr.mxu0 %v571
    %2917 = vmatpush1.msra.mxu0 %v570
    %2918 = vmatprep.subr.mxu0 %v575
    %2919 = vmatpush1.msra.mxu0 %v574
    %2920 = vmatprep.subr.mxu0 %v579
    %2921 = vmatpush1.msra.mxu0 %v578
    %2922 = vmatprep.subr.mxu0 %v583
    %2923 = vmatpush1.msra.mxu0 %v582
    %2924 = vmatprep.subr.mxu0 %v587
    %2925 = vmatpush1.msra.mxu0 %v586
    %2926 = vmatprep.subr.mxu0 %v591
    %2927 = vmatpush1.msra.mxu0 %v590
    %2928 = vmatprep.subr.mxu0 %v595
    %2929 = vmatpush1.msra.mxu0 %v594
    %2930 = vmatprep.subr.mxu0 %v599
    %2931 = vmatpush1.msra.mxu0 %v598
    %2932 = vmatprep.subr.mxu0 %v603
    %2933 = vmatpush1.msra.mxu0 %v602
    %2934 = vmatprep.subr.mxu0 %v607
    %2935 = vmatpush1.msra.mxu0 %v606
    %2936 = vmatprep.subr.mxu0 %v611
    %2937 = vmatpush1.msra.mxu0 %v610
    %2938 = vmatprep.subr.mxu0 %v615
    %2939 = vmatpush1.msra.mxu0 %v614
    %2940 = vmatprep.subr.mxu0 %v619
    %2941 = vmatpush1.msra.mxu0 %v618
    %2942 = vmatprep.subr.mxu0 %v623
    %2943 = vmatpush1.msra.mxu0 %v622
    %2944 = vmatprep.subr.mxu0 %v627
    %2945 = vmatpush1.msra.mxu0 %v626
    %2946 = vmatprep.subr.mxu0 %v631
    %2947 = vmatpush1.msra.mxu0 %v630
    %2948 = vmatprep.subr.mxu0 %v635
    %2949 = vmatpush1.msra.mxu0 %v634
    %2950 = vmatprep.subr.mxu0 %v639
    %2951 = vmatpush1.msra.mxu0 %v638
    %2952 = vmatprep.subr.mxu0 %v643
    %2953 = vmatpush1.msra.mxu0 %v642
    %2954 = vmatprep.subr.mxu0 %v647
    %2955 = vmatpush1.msra.mxu0 %v646
    %2956 = vmatprep.mubr.f32.mxu0 %v2716
    %2957 = vmatmul.mubr.f32.gmra.mrb[0].mxu0 %v2891
    %v2958 = vpop.f32.mrb[0].mxu0
    %v2959 = vadd.f32 %v829, %v2958
    %v2960 = vpop.f32.mrb[0].mxu0
    %v2961 = vadd.f32 %v833, %v2960
    %2962 = vdwg.mxu0
    %2963 = vmatprep.subr.mxu0 %v525
    %2964 = vmatpush1.msra.mxu0 %v524
    %2965 = vmatprep.subr.mxu0 %v529
    %2966 = vmatpush1.msra.mxu0 %v528
    %2967 = vmatprep.subr.mxu0 %v533
    %2968 = vmatpush1.msra.mxu0 %v532
    %2969 = vmatprep.subr.mxu0 %v537
    %2970 = vmatpush1.msra.mxu0 %v536
    %2971 = vmatprep.subr.mxu0 %v541
    %2972 = vmatpush1.msra.mxu0 %v540
    %2973 = vmatprep.subr.mxu0 %v545
    %2974 = vmatpush1.msra.mxu0 %v544
    %2975 = vmatprep.subr.mxu0 %v549
    %2976 = vmatpush1.msra.mxu0 %v548
    %2977 = vmatprep.subr.mxu0 %v553
    %2978 = vmatpush1.msra.mxu0 %v552
    %2979 = vmatprep.subr.mxu0 %v557
    %2980 = vmatpush1.msra.mxu0 %v556
    %2981 = vmatprep.subr.mxu0 %v561
    %2982 = vmatpush1.msra.mxu0 %v560
    %2983 = vmatprep.subr.mxu0 %v565
    %2984 = vmatpush1.msra.mxu0 %v564
    %2985 = vmatprep.subr.mxu0 %v569
    %2986 = vmatpush1.msra.mxu0 %v568
    %2987 = vmatprep.subr.mxu0 %v573
    %2988 = vmatpush1.msra.mxu0 %v572
    %2989 = vmatprep.subr.mxu0 %v577
    %2990 = vmatpush1.msra.mxu0 %v576
    %2991 = vmatprep.subr.mxu0 %v581
    %2992 = vmatpush1.msra.mxu0 %v580
    %2993 = vmatprep.subr.mxu0 %v585
    %2994 = vmatpush1.msra.mxu0 %v584
    %2995 = vmatprep.subr.mxu0 %v589
    %2996 = vmatpush1.msra.mxu0 %v588
    %2997 = vmatprep.subr.mxu0 %v593
    %2998 = vmatpush1.msra.mxu0 %v592
    %2999 = vmatprep.subr.mxu0 %v597
    %3000 = vmatpush1.msra.mxu0 %v596
    %3001 = vmatprep.subr.mxu0 %v601
    %3002 = vmatpush1.msra.mxu0 %v600
    %3003 = vmatprep.subr.mxu0 %v605
    %3004 = vmatpush1.msra.mxu0 %v604
    %3005 = vmatprep.subr.mxu0 %v609
    %3006 = vmatpush1.msra.mxu0 %v608
    %3007 = vmatprep.subr.mxu0 %v613
    %3008 = vmatpush1.msra.mxu0 %v612
    %3009 = vmatprep.subr.mxu0 %v617
    %3010 = vmatpush1.msra.mxu0 %v616
    %3011 = vmatprep.subr.mxu0 %v621
    %3012 = vmatpush1.msra.mxu0 %v620
    %3013 = vmatprep.subr.mxu0 %v625
    %3014 = vmatpush1.msra.mxu0 %v624
    %3015 = vmatprep.subr.mxu0 %v629
    %3016 = vmatpush1.msra.mxu0 %v628
    %3017 = vmatprep.subr.mxu0 %v633
    %3018 = vmatpush1.msra.mxu0 %v632
    %3019 = vmatprep.subr.mxu0 %v637
    %3020 = vmatpush1.msra.mxu0 %v636
    %3021 = vmatprep.subr.mxu0 %v641
    %3022 = vmatpush1.msra.mxu0 %v640
    %3023 = vmatprep.subr.mxu0 %v645
    %3024 = vmatpush1.msra.mxu0 %v644
    %3025 = vmatprep.subr.mxu0 %v649
    %3026 = vmatpush1.msra.mxu0 %v648
    %3027 = vmatprep.mubr.f32.mxu0 %v2716
    %3028 = vmatmul.mubr.f32.gmra.mrb[0].mxu0 %v2891
    %v3029 = vpop.f32.mrb[0].mxu0
    %v3030 = vadd.f32 %v837, %v3029
    %v3031 = vpop.f32.mrb[0].mxu0
    %v3032 = vadd.f32 %v841, %v3031
    %3033 = vdwg.mxu0
    %v3034 = vxor.u32 %v2959, 2147483648
    %v3035 = vmul.f32 %v3034, 1.442695
    %v3036 = vpow.pop %v3035
    %v3037 = vadd.f32 %v3036, 1.0
    %v3038 = vrcp.pop %v3037
    %v3039 = vmul.f32 1.0, %v3038
    %v3040 = vxor.u32 %v2961, 2147483648
    %v3041 = vmul.f32 %v3040, 1.442695
    %v3042 = vpow.pop %v3041
    %v3043 = vadd.f32 %v3042, 1.0
    %v3044 = vrcp.pop %v3043
    %v3045 = vmul.f32 1.0, %v3044
    %v3046 = vtanh.pop %v3030
    %v3047 = vxor.u32 %v3032, 2147483648
    %v3048 = vmul.f32 %v3047, 1.442695
    %v3049 = vpow.pop %v3048
    %v3050 = vadd.f32 %v3049, 1.0
    %v3051 = vrcp.pop %v3050
    %v3052 = vmul.f32 1.0, %v3051
    %v3053 = vmul.f32 %v3045, %v2714
    %v3054 = vmul.f32 %v3039, %v3046
    %v3055 = vadd.f32 %v3053, %v3054
    %v3056 = vtanh.pop %v3055
    %v3057 = vmul.f32 %v3052, %v3056
    %s3058 = scalar_lea.vmem [#allocation2], 224
    %v3059 = vld [vmem:[%s3058] sm:$0xff]
    %v3060 = vld [vmem:[%s3058 + $0x8] sm:$0xff]
    %v3061 = vld [vmem:[%s3058 + $0x10] sm:$0xff]
    %v3062 = vld [vmem:[%s3058 + $0x18] sm:$0xff]
    %3063 = vmatprep.subr.mxu0 %v459
    %3064 = vmatpush1.msra.mxu0 %v458
    %3065 = vmatprep.subr.mxu0 %v463
    %3066 = vmatpush1.msra.mxu0 %v462
    %3067 = vmatprep.subr.mxu0 %v467
    %3068 = vmatpush1.msra.mxu0 %v466
    %3069 = vmatprep.subr.mxu0 %v471
    %3070 = vmatpush1.msra.mxu0 %v470
    %3071 = vmatprep.subr.mxu0 %v475
    %3072 = vmatpush1.msra.mxu0 %v474
    %3073 = vmatprep.subr.mxu0 %v479
    %3074 = vmatpush1.msra.mxu0 %v478
    %3075 = vmatprep.subr.mxu0 %v483
    %3076 = vmatpush1.msra.mxu0 %v482
    %3077 = vmatprep.subr.mxu0 %v487
    %3078 = vmatpush1.msra.mxu0 %v486
    %3079 = vmatprep.subr.mxu0 %v491
    %3080 = vmatpush1.msra.mxu0 %v490
    %3081 = vmatprep.subr.mxu0 %v495
    %3082 = vmatpush1.msra.mxu0 %v494
    %3083 = vmatprep.subr.mxu0 %v499
    %3084 = vmatpush1.msra.mxu0 %v498
    %3085 = vmatprep.subr.mxu0 %v503
    %3086 = vmatpush1.msra.mxu0 %v502
    %3087 = vmatprep.subr.mxu0 %v507
    %3088 = vmatpush1.msra.mxu0 %v506
    %3089 = vmatprep.subr.mxu0 %v511
    %3090 = vmatpush1.msra.mxu0 %v510
    %3091 = vmatprep.subr.mxu0 %v515
    %3092 = vmatpush1.msra.mxu0 %v514
    %3093 = vmatprep.subr.mxu0 %v519
    %3094 = vmatpush1.msra.mxu0 %v518
    %3095 = vmatprep.subr.mxu0 0.0
    %3096 = vmatpush1.msra.mxu0 0.0
    %3097 = vmatprep.subr.mxu0 0.0
    %3098 = vmatpush1.msra.mxu0 0.0
    %3099 = vmatprep.subr.mxu0 0.0
    %3100 = vmatpush1.msra.mxu0 0.0
    %3101 = vmatprep.subr.mxu0 0.0
    %3102 = vmatpush1.msra.mxu0 0.0
    %3103 = vmatprep.subr.mxu0 0.0
    %3104 = vmatpush1.msra.mxu0 0.0
    %3105 = vmatprep.subr.mxu0 0.0
    %3106 = vmatpush1.msra.mxu0 0.0
    %3107 = vmatprep.subr.mxu0 0.0
    %3108 = vmatpush1.msra.mxu0 0.0
    %3109 = vmatprep.subr.mxu0 0.0
    %3110 = vmatpush1.msra.mxu0 0.0
    %3111 = vmatprep.subr.mxu0 0.0
    %3112 = vmatpush1.msra.mxu0 0.0
    %3113 = vmatprep.subr.mxu0 0.0
    %3114 = vmatpush1.msra.mxu0 0.0
    %3115 = vmatprep.subr.mxu0 0.0
    %3116 = vmatpush1.msra.mxu0 0.0
    %3117 = vmatprep.subr.mxu0 0.0
    %3118 = vmatpush1.msra.mxu0 0.0
    %3119 = vmatprep.subr.mxu0 0.0
    %3120 = vmatpush1.msra.mxu0 0.0
    %3121 = vmatprep.subr.mxu0 0.0
    %3122 = vmatpush1.msra.mxu0 0.0
    %3123 = vmatprep.subr.mxu0 0.0
    %3124 = vmatpush1.msra.mxu0 0.0
    %3125 = vmatprep.subr.mxu0 0.0
    %3126 = vmatpush1.msra.mxu0 0.0
    %3127 = vmatprep.mubr.f32.mxu0 0.0
    %3128 = vmatmul.mubr.f32.gmra.mrb[0].mxu0 %v2891
    %v3129 = vpop.f32.mrb[0].mxu0
    %v3130 = vadd.f32 0.0, %v3129
    %v3131 = vpop.f32.mrb[0].mxu0
    %v3132 = vadd.f32 0.0, %v3131
    %3133 = vdwg.mxu0
    %3134 = vmatprep.subr.mxu0 %v461
    %3135 = vmatpush1.msra.mxu0 %v460
    %3136 = vmatprep.subr.mxu0 %v465
    %3137 = vmatpush1.msra.mxu0 %v464
    %3138 = vmatprep.subr.mxu0 %v469
    %3139 = vmatpush1.msra.mxu0 %v468
    %3140 = vmatprep.subr.mxu0 %v473
    %3141 = vmatpush1.msra.mxu0 %v472
    %3142 = vmatprep.subr.mxu0 %v477
    %3143 = vmatpush1.msra.mxu0 %v476
    %3144 = vmatprep.subr.mxu0 %v481
    %3145 = vmatpush1.msra.mxu0 %v480
    %3146 = vmatprep.subr.mxu0 %v485
    %3147 = vmatpush1.msra.mxu0 %v484
    %3148 = vmatprep.subr.mxu0 %v489
    %3149 = vmatpush1.msra.mxu0 %v488
    %3150 = vmatprep.subr.mxu0 %v493
    %3151 = vmatpush1.msra.mxu0 %v492
    %3152 = vmatprep.subr.mxu0 %v497
    %3153 = vmatpush1.msra.mxu0 %v496
    %3154 = vmatprep.subr.mxu0 %v501
    %3155 = vmatpush1.msra.mxu0 %v500
    %3156 = vmatprep.subr.mxu0 %v505
    %3157 = vmatpush1.msra.mxu0 %v504
    %3158 = vmatprep.subr.mxu0 %v509
    %3159 = vmatpush1.msra.mxu0 %v508
    %3160 = vmatprep.subr.mxu0 %v513
    %3161 = vmatpush1.msra.mxu0 %v512
    %3162 = vmatprep.subr.mxu0 %v517
    %3163 = vmatpush1.msra.mxu0 %v516
    %3164 = vmatprep.subr.mxu0 %v521
    %3165 = vmatpush1.msra.mxu0 %v520
    %3166 = vmatprep.subr.mxu0 0.0
    %3167 = vmatpush1.msra.mxu0 0.0
    %3168 = vmatprep.subr.mxu0 0.0
    %3169 = vmatpush1.msra.mxu0 0.0
    %3170 = vmatprep.subr.mxu0 0.0
    %3171 = vmatpush1.msra.mxu0 0.0
    %3172 = vmatprep.subr.mxu0 0.0
    %3173 = vmatpush1.msra.mxu0 0.0
    %3174 = vmatprep.subr.mxu0 0.0
    %3175 = vmatpush1.msra.mxu0 0.0
    %3176 = vmatprep.subr.mxu0 0.0
    %3177 = vmatpush1.msra.mxu0 0.0
    %3178 = vmatprep.subr.mxu0 0.0
    %3179 = vmatpush1.msra.mxu0 0.0
    %3180 = vmatprep.subr.mxu0 0.0
    %3181 = vmatpush1.msra.mxu0 0.0
    %3182 = vmatprep.subr.mxu0 0.0
    %3183 = vmatpush1.msra.mxu0 0.0
    %3184 = vmatprep.subr.mxu0 0.0
    %3185 = vmatpush1.msra.mxu0 0.0
    %3186 = vmatprep.subr.mxu0 0.0
    %3187 = vmatpush1.msra.mxu0 0.0
    %3188 = vmatprep.subr.mxu0 0.0
    %3189 = vmatpush1.msra.mxu0 0.0
    %3190 = vmatprep.subr.mxu0 0.0
    %3191 = vmatpush1.msra.mxu0 0.0
    %3192 = vmatprep.subr.mxu0 0.0
    %3193 = vmatpush1.msra.mxu0 0.0
    %3194 = vmatprep.subr.mxu0 0.0
    %3195 = vmatpush1.msra.mxu0 0.0
    %3196 = vmatprep.subr.mxu0 0.0
    %3197 = vmatpush1.msra.mxu0 0.0
    %3198 = vmatprep.mubr.f32.mxu0 0.0
    %3199 = vmatmul.mubr.f32.gmra.mrb[0].mxu0 %v2891
    %v3200 = vpop.f32.mrb[0].mxu0
    %v3201 = vadd.f32 0.0, %v3200
    %v3202 = vpop.f32.mrb[0].mxu0
    %v3203 = vadd.f32 0.0, %v3202
    %3204 = vdwg.mxu0
    %v3205 = vadd.f32 %v3059, %v3130
    %v3206 = vadd.f32 %v3060, %v3132
    %v3207 = vadd.f32 %v3061, %v3201
    %v3208 = vadd.f32 %v3062, %v3203
    %v3209 = vxor.u32 %v3205, 2147483648
    %v3210 = vmul.f32 %v3209, 1.442695
    %v3211 = vpow.pop %v3210
    %v3212 = vadd.f32 %v3211, 1.0
    %v3213 = vrcp.pop %v3212
    %v3214 = vmul.f32 1.0, %v3213
    %v3215 = vxor.u32 %v3206, 2147483648
    %v3216 = vmul.f32 %v3215, 1.442695
    %v3217 = vpow.pop %v3216
    %v3218 = vadd.f32 %v3217, 1.0
    %v3219 = vrcp.pop %v3218
    %v3220 = vmul.f32 1.0, %v3219
    %v3221 = vtanh.pop %v3207
    %v3222 = vxor.u32 %v3208, 2147483648
    %v3223 = vmul.f32 %v3222, 1.442695
    %v3224 = vpow.pop %v3223
    %v3225 = vadd.f32 %v3224, 1.0
    %v3226 = vrcp.pop %v3225
    %v3227 = vmul.f32 1.0, %v3226
    %v3228 = vmul.f32 %v3220, %v2889
    %v3229 = vmul.f32 %v3214, %v3221
    %v3230 = vadd.f32 %v3228, %v3229
    %v3231 = vtanh.pop %v3230
    %v3232 = vmul.f32 %v3227, %v3231
    %3233 = vmatprep.subr.mxu0 %v523
    %3234 = vmatpush1.msra.mxu0 %v522
    %3235 = vmatprep.subr.mxu0 %v527
    %3236 = vmatpush1.msra.mxu0 %v526
    %3237 = vmatprep.subr.mxu0 %v531
    %3238 = vmatpush1.msra.mxu0 %v530
    %3239 = vmatprep.subr.mxu0 %v535
    %3240 = vmatpush1.msra.mxu0 %v534
    %3241 = vmatprep.subr.mxu0 %v539
    %3242 = vmatpush1.msra.mxu0 %v538
    %3243 = vmatprep.subr.mxu0 %v543
    %3244 = vmatpush1.msra.mxu0 %v542
    %3245 = vmatprep.subr.mxu0 %v547
    %3246 = vmatpush1.msra.mxu0 %v546
    %3247 = vmatprep.subr.mxu0 %v551
    %3248 = vmatpush1.msra.mxu0 %v550
    %3249 = vmatprep.subr.mxu0 %v555
    %3250 = vmatpush1.msra.mxu0 %v554
    %3251 = vmatprep.subr.mxu0 %v559
    %3252 = vmatpush1.msra.mxu0 %v558
    %3253 = vmatprep.subr.mxu0 %v563
    %3254 = vmatpush1.msra.mxu0 %v562
    %3255 = vmatprep.subr.mxu0 %v567
    %3256 = vmatpush1.msra.mxu0 %v566
    %3257 = vmatprep.subr.mxu0 %v571
    %3258 = vmatpush1.msra.mxu0 %v570
    %3259 = vmatprep.subr.mxu0 %v575
    %3260 = vmatpush1.msra.mxu0 %v574
    %3261 = vmatprep.subr.mxu0 %v579
    %3262 = vmatpush1.msra.mxu0 %v578
    %3263 = vmatprep.subr.mxu0 %v583
    %3264 = vmatpush1.msra.mxu0 %v582
    %3265 = vmatprep.subr.mxu0 %v587
    %3266 = vmatpush1.msra.mxu0 %v586
    %3267 = vmatprep.subr.mxu0 %v591
    %3268 = vmatpush1.msra.mxu0 %v590
    %3269 = vmatprep.subr.mxu0 %v595
    %3270 = vmatpush1.msra.mxu0 %v594
    %3271 = vmatprep.subr.mxu0 %v599
    %3272 = vmatpush1.msra.mxu0 %v598
    %3273 = vmatprep.subr.mxu0 %v603
    %3274 = vmatpush1.msra.mxu0 %v602
    %3275 = vmatprep.subr.mxu0 %v607
    %3276 = vmatpush1.msra.mxu0 %v606
    %3277 = vmatprep.subr.mxu0 %v611
    %3278 = vmatpush1.msra.mxu0 %v610
    %3279 = vmatprep.subr.mxu0 %v615
    %3280 = vmatpush1.msra.mxu0 %v614
    %3281 = vmatprep.subr.mxu0 %v619
    %3282 = vmatpush1.msra.mxu0 %v618
    %3283 = vmatprep.subr.mxu0 %v623
    %3284 = vmatpush1.msra.mxu0 %v622
    %3285 = vmatprep.subr.mxu0 %v627
    %3286 = vmatpush1.msra.mxu0 %v626
    %3287 = vmatprep.subr.mxu0 %v631
    %3288 = vmatpush1.msra.mxu0 %v630
    %3289 = vmatprep.subr.mxu0 %v635
    %3290 = vmatpush1.msra.mxu0 %v634
    %3291 = vmatprep.subr.mxu0 %v639
    %3292 = vmatpush1.msra.mxu0 %v638
    %3293 = vmatprep.subr.mxu0 %v643
    %3294 = vmatpush1.msra.mxu0 %v642
    %3295 = vmatprep.subr.mxu0 %v647
    %3296 = vmatpush1.msra.mxu0 %v646
    %3297 = vmatprep.mubr.f32.mxu0 %v3057
    %3298 = vmatmul.mubr.f32.gmra.mrb[0].mxu0 %v3232
    %v3299 = vpop.f32.mrb[0].mxu0
    %v3300 = vadd.f32 %v829, %v3299
    %v3301 = vpop.f32.mrb[0].mxu0
    %v3302 = vadd.f32 %v833, %v3301
    %3303 = vdwg.mxu0
    %3304 = vmatprep.subr.mxu0 %v525
    %3305 = vmatpush1.msra.mxu0 %v524
    %3306 = vmatprep.subr.mxu0 %v529
    %3307 = vmatpush1.msra.mxu0 %v528
    %3308 = vmatprep.subr.mxu0 %v533
    %3309 = vmatpush1.msra.mxu0 %v532
    %3310 = vmatprep.subr.mxu0 %v537
    %3311 = vmatpush1.msra.mxu0 %v536
    %3312 = vmatprep.subr.mxu0 %v541
    %3313 = vmatpush1.msra.mxu0 %v540
    %3314 = vmatprep.subr.mxu0 %v545
    %3315 = vmatpush1.msra.mxu0 %v544
    %3316 = vmatprep.subr.mxu0 %v549
    %3317 = vmatpush1.msra.mxu0 %v548
    %3318 = vmatprep.subr.mxu0 %v553
    %3319 = vmatpush1.msra.mxu0 %v552
    %3320 = vmatprep.subr.mxu0 %v557
    %3321 = vmatpush1.msra.mxu0 %v556
    %3322 = vmatprep.subr.mxu0 %v561
    %3323 = vmatpush1.msra.mxu0 %v560
    %3324 = vmatprep.subr.mxu0 %v565
    %3325 = vmatpush1.msra.mxu0 %v564
    %3326 = vmatprep.subr.mxu0 %v569
    %3327 = vmatpush1.msra.mxu0 %v568
    %3328 = vmatprep.subr.mxu0 %v573
    %3329 = vmatpush1.msra.mxu0 %v572
    %3330 = vmatprep.subr.mxu0 %v577
    %3331 = vmatpush1.msra.mxu0 %v576
    %3332 = vmatprep.subr.mxu0 %v581
    %3333 = vmatpush1.msra.mxu0 %v580
    %3334 = vmatprep.subr.mxu0 %v585
    %3335 = vmatpush1.msra.mxu0 %v584
    %3336 = vmatprep.subr.mxu0 %v589
    %3337 = vmatpush1.msra.mxu0 %v588
    %3338 = vmatprep.subr.mxu0 %v593
    %3339 = vmatpush1.msra.mxu0 %v592
    %3340 = vmatprep.subr.mxu0 %v597
    %3341 = vmatpush1.msra.mxu0 %v596
    %3342 = vmatprep.subr.mxu0 %v601
    %3343 = vmatpush1.msra.mxu0 %v600
    %3344 = vmatprep.subr.mxu0 %v605
    %3345 = vmatpush1.msra.mxu0 %v604
    %3346 = vmatprep.subr.mxu0 %v609
    %3347 = vmatpush1.msra.mxu0 %v608
    %3348 = vmatprep.subr.mxu0 %v613
    %3349 = vmatpush1.msra.mxu0 %v612
    %3350 = vmatprep.subr.mxu0 %v617
    %3351 = vmatpush1.msra.mxu0 %v616
    %3352 = vmatprep.subr.mxu0 %v621
    %3353 = vmatpush1.msra.mxu0 %v620
    %3354 = vmatprep.subr.mxu0 %v625
    %3355 = vmatpush1.msra.mxu0 %v624
    %3356 = vmatprep.subr.mxu0 %v629
    %3357 = vmatpush1.msra.mxu0 %v628
    %3358 = vmatprep.subr.mxu0 %v633
    %3359 = vmatpush1.msra.mxu0 %v632
    %3360 = vmatprep.subr.mxu0 %v637
    %3361 = vmatpush1.msra.mxu0 %v636
    %3362 = vmatprep.subr.mxu0 %v641
    %3363 = vmatpush1.msra.mxu0 %v640
    %3364 = vmatprep.subr.mxu0 %v645
    %3365 = vmatpush1.msra.mxu0 %v644
    %3366 = vmatprep.subr.mxu0 %v649
    %3367 = vmatpush1.msra.mxu0 %v648
    %3368 = vmatprep.mubr.f32.mxu0 %v3057
    %3369 = vmatmul.mubr.f32.gmra.mrb[0].mxu0 %v3232
    %v3370 = vpop.f32.mrb[0].mxu0
    %v3371 = vadd.f32 %v837, %v3370
    %v3372 = vpop.f32.mrb[0].mxu0
    %v3373 = vadd.f32 %v841, %v3372
    %3374 = vdwg.mxu0
    %v3375 = vxor.u32 %v3300, 2147483648
    %v3376 = vmul.f32 %v3375, 1.442695
    %v3377 = vpow.pop %v3376
    %v3378 = vadd.f32 %v3377, 1.0
    %v3379 = vrcp.pop %v3378
    %v3380 = vmul.f32 1.0, %v3379
    %v3381 = vxor.u32 %v3302, 2147483648
    %v3382 = vmul.f32 %v3381, 1.442695
    %v3383 = vpow.pop %v3382
    %v3384 = vadd.f32 %v3383, 1.0
    %v3385 = vrcp.pop %v3384
    %v3386 = vmul.f32 1.0, %v3385
    %v3387 = vtanh.pop %v3371
    %v3388 = vxor.u32 %v3373, 2147483648
    %v3389 = vmul.f32 %v3388, 1.442695
    %v3390 = vpow.pop %v3389
    %v3391 = vadd.f32 %v3390, 1.0
    %v3392 = vrcp.pop %v3391
    %v3393 = vmul.f32 1.0, %v3392
    %v3394 = vmul.f32 %v3386, %v3055
    %v3395 = vmul.f32 %v3380, %v3387
    %v3396 = vadd.f32 %v3394, %v3395
    %v3397 = vtanh.pop %v3396
    %v3398 = vmul.f32 %v3393, %v3397
    %v3399 = vld [vmem:[#allocation11] sm:$0xff]
    %v3400 = vld [vmem:[#allocation11 + $0x8] sm:$0xff]
    %v3401 = vld [vmem:[#allocation11 + $0x10] sm:$0xff]
    %v3402 = vld [vmem:[#allocation11 + $0x18] sm:$0xff]
    %v3403 = vld [vmem:[#allocation11 + $0x20] sm:$0xff]
    %v3404 = vld [vmem:[#allocation11 + $0x28] sm:$0xff]
    %v3405 = vld [vmem:[#allocation11 + $0x30] sm:$0xff]
    %v3406 = vld [vmem:[#allocation11 + $0x38] sm:$0xff]
    %v3407 = vld [vmem:[#allocation11 + $0x40] sm:$0xff]
    %v3408 = vld [vmem:[#allocation11 + $0x48] sm:$0xff]
    %v3409 = vld [vmem:[#allocation11 + $0x50] sm:$0xff]
    %v3410 = vld [vmem:[#allocation11 + $0x58] sm:$0xff]
    %v3411 = vld [vmem:[#allocation11 + $0x60] sm:$0xff]
    %v3412 = vld [vmem:[#allocation11 + $0x68] sm:$0xff]
    %v3413 = vld [vmem:[#allocation11 + $0x70] sm:$0xff]
    %v3414 = vld [vmem:[#allocation11 + $0x78] sm:$0xff]
    %v3415 = vld [vmem:[%s7] sm:$0x1]
    %v3417 = vlaneseq
    %v3418 = vshrl.u32 %v3417, 7
    %v3419 = vsub.s32 0, %v3418
    %v3420 = vrot.slane %v3415, %v3419
    %3422 = vmatprep.subr.mxu0 0.0
    %3423 = vmatpush1.msra.mxu0 %v3399
    %3424 = vmatprep.subr.mxu0 0.0
    %3425 = vmatpush1.msra.mxu0 %v3400
    %3426 = vmatprep.subr.mxu0 0.0
    %3427 = vmatpush1.msra.mxu0 %v3401
    %3428 = vmatprep.subr.mxu0 0.0
    %3429 = vmatpush1.msra.mxu0 %v3402
    %3430 = vmatprep.subr.mxu0 0.0
    %3431 = vmatpush1.msra.mxu0 %v3403
    %3432 = vmatprep.subr.mxu0 0.0
    %3433 = vmatpush1.msra.mxu0 %v3404
    %3434 = vmatprep.subr.mxu0 0.0
    %3435 = vmatpush1.msra.mxu0 %v3405
    %3436 = vmatprep.subr.mxu0 0.0
    %3437 = vmatpush1.msra.mxu0 %v3406
    %3438 = vmatprep.subr.mxu0 0.0
    %3439 = vmatpush1.msra.mxu0 %v3407
    %3440 = vmatprep.subr.mxu0 0.0
    %3441 = vmatpush1.msra.mxu0 %v3408
    %3442 = vmatprep.subr.mxu0 0.0
    %3443 = vmatpush1.msra.mxu0 %v3409
    %3444 = vmatprep.subr.mxu0 0.0
    %3445 = vmatpush1.msra.mxu0 %v3410
    %3446 = vmatprep.subr.mxu0 0.0
    %3447 = vmatpush1.msra.mxu0 %v3411
    %3448 = vmatprep.subr.mxu0 0.0
    %3449 = vmatpush1.msra.mxu0 %v3412
    %3450 = vmatprep.subr.mxu0 0.0
    %3451 = vmatpush1.msra.mxu0 %v3413
    %3452 = vmatprep.subr.mxu0 0.0
    %3453 = vmatpush1.msra.mxu0 %v3414
    %3454 = vmatprep.subr.mxu0 0.0
    %3455 = vmatpush1.msra.mxu0 0.0
    %3456 = vmatprep.subr.mxu0 0.0
    %3457 = vmatpush1.msra.mxu0 0.0
    %3458 = vmatprep.subr.mxu0 0.0
    %3459 = vmatpush1.msra.mxu0 0.0
    %3460 = vmatprep.subr.mxu0 0.0
    %3461 = vmatpush1.msra.mxu0 0.0
    %3462 = vmatprep.subr.mxu0 0.0
    %3463 = vmatpush1.msra.mxu0 0.0
    %3464 = vmatprep.subr.mxu0 0.0
    %3465 = vmatpush1.msra.mxu0 0.0
    %3466 = vmatprep.subr.mxu0 0.0
    %3467 = vmatpush1.msra.mxu0 0.0
    %3468 = vmatprep.subr.mxu0 0.0
    %3469 = vmatpush1.msra.mxu0 0.0
    %3470 = vmatprep.subr.mxu0 0.0
    %3471 = vmatpush1.msra.mxu0 0.0
    %3472 = vmatprep.subr.mxu0 0.0
    %3473 = vmatpush1.msra.mxu0 0.0
    %3474 = vmatprep.subr.mxu0 0.0
    %3475 = vmatpush1.msra.mxu0 0.0
    %3476 = vmatprep.subr.mxu0 0.0
    %3477 = vmatpush1.msra.mxu0 0.0
    %3478 = vmatprep.subr.mxu0 0.0
    %3479 = vmatpush1.msra.mxu0 0.0
    %3480 = vmatprep.subr.mxu0 0.0
    %3481 = vmatpush1.msra.mxu0 0.0
    %3482 = vmatprep.subr.mxu0 0.0
    %3483 = vmatpush1.msra.mxu0 0.0
    %3484 = vmatprep.subr.mxu0 0.0
    %3485 = vmatpush1.msra.mxu0 0.0
    %3486 = vmatprep.mubr.f32.mxu0 0.0
    %3487 = vmatmul.mubr.f32.gmra.mrb[0].mxu0 %v3398
    %v3488 = vpop.f32.mrb[0].mxu0
    %v3489 = vadd.f32 %v3420, %v3488
    %v3490 = vpop.f32.mrb[0].mxu0
    %3491 = vdwg.mxu0
    %3492 = vst [vmem:[#allocation12] sm:$0xff] %v3489
    // Predicated region
    $region54: #{tpu_custom_call.1} parent=1 // pred_check
      _
    $region55: #{tpu_custom_call.1} parent=1 // pred_check_branch
      %3494 = sbr.rel (0) target = $region57
    $region56: #{tpu_custom_call.1} parent=1 // pred_region
      %s3496 = ssub.s32 128, 128
      %3497 = vsyncadd [#allocation5], %s3496
      %s3499 = sshll.u32 [#allocation12], 4
      %s3500 = int_to_ptr.vmem [resolvable:$true] %s3499
      %3502 = dma.vmem_to_hbm [thread:$0]  %s3500, 128, %s8, [#allocation5]
    $region57: #{tpu_custom_call.1} parent=1 // pred_fallthru
      _
    // Predicated region
    $region58: #{tpu_custom_call.1} parent=1 // pred_check
      _
    $region59: #{tpu_custom_call.1} parent=1 // pred_check_branch
      %3504 = sbr.rel (0) target = $region61
    $region60: #{tpu_custom_call.1} parent=1 // pred_region
      %3505 = dma.done [#allocation5], 128
    $region61: #{tpu_custom_call.1} parent=1 // pred_fallthru
      _
    %3506 = vsyncpa [#allocation4], 1
    %3507 = vsyncpa [#allocation7], 1
    %3508 = vsyncpa [#allocation10], 1
    %3509 = vsyncpa [#allocation5], 1

</llo_original>
